<compile_context>
chip_gen: v5e
topology: v5e:2x2
jax: 0.10.0
libtpu: 0.0.40
codegen_flags: <defaults>
</compile_context>

<pallas_src>
import functools

import jax
import jax.numpy as jnp
import numpy as np
from jax.experimental import pallas as pl
from jax.experimental.pallas import tpu as pltpu

# bf16 MXU inputs (f32 accumulation via preferred_element_type); BN statistics,
# normalization and tanh stay f32.  Set to jnp.float32 for bit-exact f32 semantics.
MXU_DTYPE = jnp.bfloat16
BN_EPS = 1e-5


def _round_up(x, m):
    return ((x + m - 1) // m) * m


# ---------------------------------------------------------------------------
# Pallas kernels (one fused kernel per generator layer)
# ---------------------------------------------------------------------------
def _l1_outer_bn_relu_kernel(x_ref, w_ref, cpool_ref, g_ref, b_ref, o_ref, *,
                             inv_count, eps):
    # ConvTranspose2d(k=4, s=1, p=0) on a 1x1 input is an outer product:
    #   y[n, (co,kh,kw)] = sum_ci x[n, ci] * w[ci, co, kh, kw]
    y = jnp.dot(x_ref[...], w_ref[...], preferred_element_type=jnp.float32)
    # Per-channel sum / sumsq: pool the 16 adjacent (kh,kw) columns of each channel
    # with a constant 0/1 matmul, then reduce over the batch rows.
    s = jnp.sum(jnp.dot(y, cpool_ref[...], preferred_element_type=jnp.float32),
                axis=0, keepdims=True)
    ss = jnp.sum(jnp.dot(y * y, cpool_ref[...], preferred_element_type=jnp.float32),
                 axis=0, keepdims=True)
    mean = s * inv_count
    var = jnp.maximum(ss * inv_count - mean * mean, 0.0)   # biased var (train mode)
    scale = g_ref[...] * jax.lax.rsqrt(var + eps)           # [1, 16*Cout]
    shift = b_ref[...] - mean * scale
    o_ref[...] = jnp.maximum(y * scale + shift, 0.0).astype(o_ref.dtype)


def _deconv_bn_relu_kernel(p_ref, w_ref, mask_ref, pool_ref, g_ref, b_ref, o_ref, *,
                           inv_count, eps):
    # All 4 sub-pixel phases of the stride-2 deconv in one matmul:
    #   y[(p,q,co), (n,s,t)]
    y = jnp.dot(w_ref[...], p_ref[...], preferred_element_type=jnp.float32)
    # Mask out the one row/col per phase that depth-to-space crops, so the BN stats
    # equal PyTorch's stats over the recombined [Cout, N, 2H, 2W] output.
    ym = y * mask_ref[...]
    # pool[(r1,r2)] = 1 iff same channel: channel totals (summed over the 4 phase
    # rows) land replicated on every phase row -> no reshapes/transposes needed.
    s = jnp.sum(jnp.dot(pool_ref[...], ym, preferred_element_type=jnp.float32),
                axis=1, keepdims=True)
    ss = jnp.sum(jnp.dot(pool_ref[...], y * ym, preferred_element_type=jnp.float32),
                 axis=1, keepdims=True)
    mean = s * inv_count
    var = jnp.maximum(ss * inv_count - mean * mean, 0.0)
    scale = g_ref[...] * jax.lax.rsqrt(var + eps)            # [4*Cout, 1]
    shift = b_ref[...] - mean * scale
    # Affine+ReLU applied on the pre-recombine slab (commutes with the layout-only
    # depth-to-space); the cropped columns get discarded by XLA afterwards.
    o_ref[...] = jnp.maximum(y * scale + shift, 0.0).astype(o_ref.dtype)


def _deconv_tanh_kernel(p_ref, w_ref, o_ref):
    y = jnp.dot(w_ref[...], p_ref[...], preferred_element_type=jnp.float32)
    o_ref[...] = jnp.tanh(y)   # EUP epilogue, free under the MXU-bound dot


# ---------------------------------------------------------------------------
# Constant helpers (masks / pooling matrices; baked at trace time)
# ---------------------------------------------------------------------------
def _phase_mask(cout, n, h, w):
    """[4*Cout, N*(H+1)*(W+1)] 0/1 mask of the columns kept by depth-to-space."""
    m = np.zeros((2, 2, h + 1, w + 1), np.float32)
    for p in range(2):
        for q in range(2):
            m[p, q, p:p + h, q:q + w] = 1.0
    m = np.broadcast_to(m[:, :, None, None, :, :], (2, 2, cout, n, h + 1, w + 1))
    return jnp.asarray(m.reshape(4 * cout, n * (h + 1) * (w + 1)))


def _phase_pool(cout):
    """[4*Cout, 4*Cout]: pool[r1,r2] = 1 iff rows r1,r2 belong to the same channel."""
    r = np.arange(4 * cout)
    return jnp.asarray((r[:, None] % cout == r[None, :] % cout).astype(np.float32))


def _col_pool(cout):
    """[16*Cout, 16*Cout]: 1 iff columns belong to the same channel (groups of 16)."""
    c = np.arange(16 * cout) // 16
    return jnp.asarray((c[:, None] == c[None, :]).astype(np.float32))


# ---------------------------------------------------------------------------
# XLA layout glue (pure layout; fuses with neighbouring layers' pads/slices)
# ---------------------------------------------------------------------------
def _make_taps(h):
    """[Cin, N, H, W] -> patches [4*Cin, N*(H+1)*(W+1)] (2x2 taps, no zero-insert)."""
    cin, n, hh, ww = h.shape
    hp = jnp.pad(h, ((0, 0), (0, 0), (1, 1), (1, 1)))
    taps = [hp[:, :, dh:dh + hh + 1, dw:dw + ww + 1]
            for dh in range(2) for dw in range(2)]
    return jnp.stack(taps, axis=0).reshape(4 * cin, n * (hh + 1) * (ww + 1))


def _depth_to_space(y, cout, n, h, w):
    """[4*Cout, N*(H+1)*(W+1)] phase slab -> [Cout, N, 2H, 2W]."""
    y = y.reshape(2, 2, cout, n, h + 1, w + 1)
    rows = [jnp.stack([y[p, q, :, :, p:p + h, q:q + w] for q in range(2)], axis=-1)
            for p in range(2)]
    return jnp.stack(rows, axis=3).reshape(cout, n, 2 * h, 2 * w)


# ---------------------------------------------------------------------------
# Fused layer wrappers (one pallas_call each)
# ---------------------------------------------------------------------------
def l1_outer_bn_relu(x, w1m, cpool, g_cols, b_cols, eps=BN_EPS):
    """x:[N,Cin] bf16, w1m:[Cin,16*Cout] bf16 -> post-BN-ReLU [N, 16*Cout] bf16."""
    n, _ = x.shape
    c16 = w1m.shape[1]
    kern = functools.partial(_l1_outer_bn_relu_kernel,
                             inv_count=1.0 / float(n * 16), eps=eps)
    return pl.pallas_call(
        kern,
        out_shape=jax.ShapeDtypeStruct((n, c16), MXU_DTYPE),
    )(x, w1m, cpool, g_cols, b_cols)


def deconv_bn_relu_fused(h, wmat, g4, b4, eps=BN_EPS):
    """ConvTranspose2d(4,2,1) + BatchNorm2d(train) + ReLU, one pallas_call."""
    cin, n, hh, ww = h.shape
    r = wmat.shape[0]
    cout = r // 4
    p = _make_taps(h)                                   # [4*Cin, M2] bf16
    mask = _phase_mask(cout, n, hh, ww)                 # [R, M2] f32 constant
    pool = _phase_pool(cout)                            # [R, R]  f32 constant
    kern = functools.partial(_deconv_bn_relu_kernel,
                             inv_count=1.0 / float(n * 4 * hh * ww), eps=eps)
    y = pl.pallas_call(
        kern,
        out_shape=jax.ShapeDtypeStruct((r, p.shape[1]), MXU_DTYPE),
    )(p, wmat, mask, pool, g4, b4)
    return _depth_to_space(y, cout, n, hh, ww)          # [Cout, N, 2H, 2W] bf16


def deconv_tanh(h, wmat):
    """Final ConvTranspose2d(4,2,1) + Tanh, tiled over M (lane-dense, >=2 tiles)."""
    cin, n, hh, ww = h.shape
    r = wmat.shape[0]
    cout = r // 4
    p = _make_taps(h)
    k, m2 = p.shape
    if m2 >= 256:
        # 128-aligned lane tile near M/2: >=2 "parallel" steps (v7x second TC gets
        # work), one ragged tail at most (masked stores; no reductions over it).
        tm = min(_round_up(pl.cdiv(m2, 2), 128), _round_up(m2, 128))
    else:
        tm = m2
    grid = (pl.cdiv(m2, tm),)
    y = pl.pallas_call(
        _deconv_tanh_kernel,
        out_shape=jax.ShapeDtypeStruct((r, m2), jnp.float32),
        grid=grid,
        in_specs=[pl.BlockSpec((k, tm), lambda i: (0, i)),
                  pl.BlockSpec((r, k), lambda i: (0, 0))],
        out_specs=pl.BlockSpec((r, tm), lambda i: (0, i)),
        compiler_params=pltpu.CompilerParams(dimension_semantics=("parallel",)),
    )(p, wmat)
    return _depth_to_space(y, cout, n, hh, ww)


# ---------------------------------------------------------------------------
# Parameter preparation (hoisted out of the jitted forward)
# ---------------------------------------------------------------------------
def _phase_weight(w):
    """[Cin, Cout, 4, 4] -> [4*Cout, 4*Cin]; rows (p,q,co), cols (dh,dw,ci)."""
    idx = 3 - 2 * jnp.arange(2)[None, :] - jnp.arange(2)[:, None]
    wg = w[:, :, idx[:, :, None, None], idx[None, None, :, :]]   # [Cin,Cout,p,dh,q,dw]
    cout = w.shape[1]
    return jnp.transpose(wg, (2, 4, 1, 3, 5, 0)).reshape(4 * cout, -1)


def prepare_params(params):
    prep = {}
    w1 = params["w1"]                                    # [Cin, Cout, 4, 4]
    cin1, c1 = w1.shape[0], w1.shape[1]
    # Layer-1 outer product: y[n,(co,kh,kw)] = sum_ci x[n,ci]*w[ci,co,kh,kw]
    prep["w1m"] = w1.reshape(cin1, c1 * 16).astype(MXU_DTYPE)
    prep["cp1"] = _col_pool(c1)
    prep["g1c"] = jnp.repeat(params["g1"], 16).reshape(1, -1).astype(jnp.float32)
    prep["b1c"] = jnp.repeat(params["b1"], 16).reshape(1, -1).astype(jnp.float32)
    for li in (2, 3, 4, 5):
        prep[f"w{li}m"] = _phase_weight(params[f"w{li}"]).astype(MXU_DTYPE)
    for li in (2, 3, 4):
        prep[f"g{li}4"] = jnp.tile(params[f"g{li}"], 4).reshape(-1, 1).astype(jnp.float32)
        prep[f"b{li}4"] = jnp.tile(params[f"b{li}"], 4).reshape(-1, 1).astype(jnp.float32)
    return prep


# ---------------------------------------------------------------------------
# Generator forward (5 pallas_calls total)
# ---------------------------------------------------------------------------
def generator_forward(x_nchw, prep):
    n = x_nchw.shape[0]
    c1 = prep["g1c"].shape[1] // 16
    x = x_nchw.reshape(n, -1).astype(MXU_DTYPE)                   # [N, Cin] (1x1 spatial)
    y1 = l1_outer_bn_relu(x, prep["w1m"], prep["cp1"], prep["g1c"], prep["b1c"])
    h = jnp.transpose(y1.reshape(n, c1, 4, 4), (1, 0, 2, 3))      # [C1, N, 4, 4] bf16
    for li in (2, 3, 4):
        h = deconv_bn_relu_fused(h, prep[f"w{li}m"], prep[f"g{li}4"], prep[f"b{li}4"])
    h = deconv_tanh(h, prep["w5m"])                               # [Cout, N, 64, 64] f32
    return jnp.transpose(h, (1, 0, 2, 3))                         # back to NCHW


# ---------------------------------------------------------------------------
# Plain-XLA reference with exact PyTorch semantics (used only for validation)
# ---------------------------------------------------------------------------
def _conv_transpose_ref(x, w, stride, padding):
    k = w.shape[2]
    w_oihw = jnp.transpose(w[:, :, ::-1, ::-1], (1, 0, 2, 3))
    pad = k - 1 - padding
    return jax.lax.conv_general_dilated(
        x, w_oihw, window_strides=(1, 1), padding=((pad, pad), (pad, pad)),
        lhs_dilation=(stride, stride), dimension_numbers=("NCHW", "OIHW", "NCHW"))


def _bn_relu_ref(x, g, b, eps=BN_EPS):
    mean = jnp.mean(x, axis=(0, 2, 3), keepdims=True)
    var = jnp.mean((x - mean) ** 2, axis=(0, 2, 3), keepdims=True)
    xn = (x - mean) * jax.lax.rsqrt(var + eps)
    return jnp.maximum(xn * g.reshape(1, -1, 1, 1) + b.reshape(1, -1, 1, 1), 0.0)


def reference_forward(x, params):
    h = _conv_transpose_ref(x, params["w1"], 1, 0)
    h = _bn_relu_ref(h, params["g1"], params["b1"])
    for li in (2, 3, 4):
        h = _conv_transpose_ref(h, params[f"w{li}"], 2, 1)
        h = _bn_relu_ref(h, params[f"g{li}"], params[f"b{li}"])
    return jnp.tanh(_conv_transpose_ref(h, params["w5"], 2, 1))


# ---------------------------------------------------------------------------
# Parameter init (PyTorch ConvTranspose2d weight layout [Cin, Cout, kh, kw])
# ---------------------------------------------------------------------------
def init_params(key, input_size, hidden_size, output_size):
    hs = hidden_size
    chans = [input_size, hs * 8, hs * 4, hs * 2, hs, output_size]
    keys = jax.random.split(key, 16)
    params = {}
    ki = 0
    for li in range(5):
        cin, cout = chans[li], chans[li + 1]
        params[f"w{li + 1}"] = 0.02 * jax.random.normal(
            keys[ki], (cin, cout, 4, 4), jnp.float32)
        ki += 1
        if li < 4:
            params[f"g{li + 1}"] = 1.0 + 0.1 * jax.random.normal(
                keys[ki], (cout,), jnp.float32)
            ki += 1
            params[f"b{li + 1}"] = 0.1 * jax.random.normal(
                keys[ki], (cout,), jnp.float32)
            ki += 1
    return params


if __name__ == "__main__":
    batch, input_size, hidden_size, output_size = 2, 8, 4, 3
    key = jax.random.PRNGKey(0)
    k_par, k_x = jax.random.split(key)
    params = init_params(k_par, input_size, hidden_size, output_size)
    prep = prepare_params(params)                        # weight prep hoisted
    x = jax.random.normal(k_x, (batch, input_size, 1, 1), jnp.float32)

    fwd = jax.jit(generator_forward)
    out = jax.block_until_ready(fwd(x, prep))

    assert out.shape == (batch, output_size, 64, 64), out.shape
    assert bool(jnp.all(jnp.isfinite(out)))
    assert bool(jnp.all(jnp.abs(out) <= 1.0 + 1e-6))     # tanh range

    # Numerical validation of the phase-decomposed / fused Pallas path against
    # plain-XLA PyTorch semantics (f32 reference; Pallas uses bf16 MXU inputs).
    ref = jax.jit(reference_forward)(x, params)
    err = float(jnp.max(jnp.abs(out - ref)))
    assert err < 3e-2, f"max abs error vs reference = {err}"

    print("KERNEL_OK")
</pallas_src>

<mosaic_0001>
module attributes {stable_mosaic.version = 11 : i64} {
  func.func @_l1_outer_bn_relu_kernel(%arg0: memref<2x8xbf16, #tpu.memory_space<vmem>>, %arg1: memref<8x512xbf16, #tpu.memory_space<vmem>>, %arg2: memref<512x512xf32, #tpu.memory_space<vmem>>, %arg3: memref<1x512xf32, #tpu.memory_space<vmem>>, %arg4: memref<1x512xf32, #tpu.memory_space<vmem>>, %arg5: memref<2x512xbf16, #tpu.memory_space<vmem>>) attributes {dimension_semantics = [], scalar_prefetch = 0 : i64, scratch_operands = 0 : i64, tpu.core_type = #tpu.core_type<tc>} {
    %c0 = arith.constant 0 : index
    %c0_0 = arith.constant 0 : index
    %0 = vector.load %arg0[%c0, %c0_0] : memref<2x8xbf16, #tpu.memory_space<vmem>>, vector<2x8xbf16>
    %c0_1 = arith.constant 0 : index
    %c0_2 = arith.constant 0 : index
    %1 = vector.load %arg1[%c0_1, %c0_2] : memref<8x512xbf16, #tpu.memory_space<vmem>>, vector<8x512xbf16>
    %cst = arith.constant dense<0.000000e+00> : vector<2x512xf32>
    %2 = tpu.matmul %0, %1, %cst {dimension_numbers = #tpu.dot_dimension_numbers<[1], [0], [0], [1], [0, 0, 1, 1], [], []>} : vector<2x8xbf16>, vector<8x512xbf16>, vector<2x512xf32> -> vector<2x512xf32>
    %c0_3 = arith.constant 0 : index
    %c0_4 = arith.constant 0 : index
    %3 = vector.load %arg2[%c0_3, %c0_4] : memref<512x512xf32, #tpu.memory_space<vmem>>, vector<512x512xf32>
    %cst_5 = arith.constant dense<0.000000e+00> : vector<2x512xf32>
    %4 = tpu.matmul %2, %3, %cst_5 {dimension_numbers = #tpu.dot_dimension_numbers<[1], [0], [0], [1], [0, 0, 1, 1], [], []>} : vector<2x512xf32>, vector<512x512xf32>, vector<2x512xf32> -> vector<2x512xf32>
    %cst_6 = arith.constant dense<0.000000e+00> : vector<512xf32>
    %5 = vector.multi_reduction <add>, %4, %cst_6 [0] : vector<2x512xf32> to vector<512xf32>
    %6 = vector.shape_cast %5 : vector<512xf32> to vector<1x512xf32>
    %7 = arith.mulf %2, %2 : vector<2x512xf32>
    %c0_7 = arith.constant 0 : index
    %c0_8 = arith.constant 0 : index
    %8 = vector.load %arg2[%c0_7, %c0_8] : memref<512x512xf32, #tpu.memory_space<vmem>>, vector<512x512xf32>
    %cst_9 = arith.constant dense<0.000000e+00> : vector<2x512xf32>
    %9 = tpu.matmul %7, %8, %cst_9 {dimension_numbers = #tpu.dot_dimension_numbers<[1], [0], [0], [1], [0, 0, 1, 1], [], []>} : vector<2x512xf32>, vector<512x512xf32>, vector<2x512xf32> -> vector<2x512xf32>
    %cst_10 = arith.constant dense<0.000000e+00> : vector<512xf32>
    %10 = vector.multi_reduction <add>, %9, %cst_10 [0] : vector<2x512xf32> to vector<512xf32>
    %11 = vector.shape_cast %10 : vector<512xf32> to vector<1x512xf32>
    %cst_11 = arith.constant 3.125000e-02 : f32
    %12 = vector.broadcast %cst_11 : f32 to vector<1x512xf32>
    %13 = arith.mulf %6, %12 : vector<1x512xf32>
    %cst_12 = arith.constant 3.125000e-02 : f32
    %14 = vector.broadcast %cst_12 : f32 to vector<1x512xf32>
    %15 = arith.mulf %11, %14 : vector<1x512xf32>
    %16 = arith.mulf %13, %13 : vector<1x512xf32>
    %17 = arith.subf %15, %16 : vector<1x512xf32>
    %cst_13 = arith.constant 0.000000e+00 : f32
    %18 = vector.broadcast %cst_13 : f32 to vector<1x512xf32>
    %19 = arith.maximumf %17, %18 : vector<1x512xf32>
    %c0_14 = arith.constant 0 : index
    %c0_15 = arith.constant 0 : index
    %20 = vector.load %arg3[%c0_14, %c0_15] : memref<1x512xf32, #tpu.memory_space<vmem>>, vector<1x512xf32>
    %cst_16 = arith.constant 9.99999974E-6 : f32
    %21 = vector.broadcast %cst_16 : f32 to vector<1x512xf32>
    %22 = arith.addf %19, %21 : vector<1x512xf32>
    %23 = math.rsqrt %22 : vector<1x512xf32>
    %24 = arith.mulf %20, %23 : vector<1x512xf32>
    %c0_17 = arith.constant 0 : index
    %c0_18 = arith.constant 0 : index
    %25 = vector.load %arg4[%c0_17, %c0_18] : memref<1x512xf32, #tpu.memory_space<vmem>>, vector<1x512xf32>
    %26 = arith.mulf %13, %24 : vector<1x512xf32>
    %27 = arith.subf %25, %26 : vector<1x512xf32>
    %28 = vector.broadcast %24 : vector<1x512xf32> to vector<2x512xf32>
    %29 = arith.mulf %2, %28 : vector<2x512xf32>
    %30 = vector.broadcast %27 : vector<1x512xf32> to vector<2x512xf32>
    %31 = arith.addf %29, %30 : vector<2x512xf32>
    %cst_19 = arith.constant 0.000000e+00 : f32
    %32 = vector.broadcast %cst_19 : f32 to vector<2x512xf32>
    %33 = arith.maximumf %31, %32 : vector<2x512xf32>
    %34 = arith.truncf %33 : vector<2x512xf32> to vector<2x512xbf16>
    %c0_20 = arith.constant 0 : index
    %c0_21 = arith.constant 0 : index
    %35 = vector.load %arg5[%c0_20, %c0_21] : memref<2x512xbf16, #tpu.memory_space<vmem>>, vector<2x512xbf16>
    tpu.vector_store %arg5[%c0_20, %c0_21], %34 {strides = array<i32>} : memref<2x512xbf16, #tpu.memory_space<vmem>>, vector<2x512xbf16>,
    return
  }
}

module attributes {stable_mosaic.version = 11 : i64} {
  func.func @_deconv_bn_relu_kernel(%arg0: memref<128x50xbf16, #tpu.memory_space<vmem>>, %arg1: memref<64x128xbf16, #tpu.memory_space<vmem>>, %arg2: memref<64x50xf32, #tpu.memory_space<vmem>>, %arg3: memref<64x64xf32, #tpu.memory_space<vmem>>, %arg4: memref<64x1xf32, #tpu.memory_space<vmem>>, %arg5: memref<64x1xf32, #tpu.memory_space<vmem>>, %arg6: memref<64x50xbf16, #tpu.memory_space<vmem>>) attributes {dimension_semantics = [], scalar_prefetch = 0 : i64, scratch_operands = 0 : i64, tpu.core_type = #tpu.core_type<tc>} {
    %c0 = arith.constant 0 : index
    %c0_0 = arith.constant 0 : index
    %0 = vector.load %arg1[%c0, %c0_0] : memref<64x128xbf16, #tpu.memory_space<vmem>>, vector<64x128xbf16>
    %c0_1 = arith.constant 0 : index
    %c0_2 = arith.constant 0 : index
    %1 = vector.load %arg0[%c0_1, %c0_2] : memref<128x50xbf16, #tpu.memory_space<vmem>>, vector<128x50xbf16>
    %cst = arith.constant dense<0.000000e+00> : vector<64x50xf32>
    %2 = tpu.matmul %0, %1, %cst {dimension_numbers = #tpu.dot_dimension_numbers<[1], [0], [0], [1], [0, 0, 1, 1], [], []>} : vector<64x128xbf16>, vector<128x50xbf16>, vector<64x50xf32> -> vector<64x50xf32>
    %c0_3 = arith.constant 0 : index
    %c0_4 = arith.constant 0 : index
    %3 = vector.load %arg2[%c0_3, %c0_4] : memref<64x50xf32, #tpu.memory_space<vmem>>, vector<64x50xf32>
    %4 = arith.mulf %2, %3 : vector<64x50xf32>
    %c0_5 = arith.constant 0 : index
    %c0_6 = arith.constant 0 : index
    %5 = vector.load %arg3[%c0_5, %c0_6] : memref<64x64xf32, #tpu.memory_space<vmem>>, vector<64x64xf32>
    %cst_7 = arith.constant dense<0.000000e+00> : vector<64x50xf32>
    %6 = tpu.matmul %5, %4, %cst_7 {dimension_numbers = #tpu.dot_dimension_numbers<[1], [0], [0], [1], [0, 0, 1, 1], [], []>} : vector<64x64xf32>, vector<64x50xf32>, vector<64x50xf32> -> vector<64x50xf32>
    %cst_8 = arith.constant dense<0.000000e+00> : vector<64xf32>
    %7 = vector.multi_reduction <add>, %6, %cst_8 [1] : vector<64x50xf32> to vector<64xf32>
    %8 = vector.shape_cast %7 : vector<64xf32> to vector<64x1xf32>
    %c0_9 = arith.constant 0 : index
    %c0_10 = arith.constant 0 : index
    %9 = vector.load %arg3[%c0_9, %c0_10] : memref<64x64xf32, #tpu.memory_space<vmem>>, vector<64x64xf32>
    %10 = arith.mulf %2, %4 : vector<64x50xf32>
    %cst_11 = arith.constant dense<0.000000e+00> : vector<64x50xf32>
    %11 = tpu.matmul %9, %10, %cst_11 {dimension_numbers = #tpu.dot_dimension_numbers<[1], [0], [0], [1], [0, 0, 1, 1], [], []>} : vector<64x64xf32>, vector<64x50xf32>, vector<64x50xf32> -> vector<64x50xf32>
    %cst_12 = arith.constant dense<0.000000e+00> : vector<64xf32>
    %12 = vector.multi_reduction <add>, %11, %cst_12 [1] : vector<64x50xf32> to vector<64xf32>
    %13 = vector.shape_cast %12 : vector<64xf32> to vector<64x1xf32>
    %cst_13 = arith.constant 7.812500e-03 : f32
    %14 = vector.broadcast %cst_13 : f32 to vector<64x1xf32>
    %15 = arith.mulf %8, %14 : vector<64x1xf32>
    %cst_14 = arith.constant 7.812500e-03 : f32
    %16 = vector.broadcast %cst_14 : f32 to vector<64x1xf32>
    %17 = arith.mulf %13, %16 : vector<64x1xf32>
    %18 = arith.mulf %15, %15 : vector<64x1xf32>
    %19 = arith.subf %17, %18 : vector<64x1xf32>
    %cst_15 = arith.constant 0.000000e+00 : f32
    %20 = vector.broadcast %cst_15 : f32 to vector<64x1xf32>
    %21 = arith.maximumf %19, %20 : vector<64x1xf32>
    %c0_16 = arith.constant 0 : index
    %c0_17 = arith.constant 0 : index
    %22 = vector.load %arg4[%c0_16, %c0_17] : memref<64x1xf32, #tpu.memory_space<vmem>>, vector<64x1xf32>
    %cst_18 = arith.constant 9.99999974E-6 : f32
    %23 = vector.broadcast %cst_18 : f32 to vector<64x1xf32>
    %24 = arith.addf %21, %23 : vector<64x1xf32>
    %25 = math.rsqrt %24 : vector<64x1xf32>
    %26 = arith.mulf %22, %25 : vector<64x1xf32>
    %c0_19 = arith.constant 0 : index
    %c0_20 = arith.constant 0 : index
    %27 = vector.load %arg5[%c0_19, %c0_20] : memref<64x1xf32, #tpu.memory_space<vmem>>, vector<64x1xf32>
    %28 = arith.mulf %15, %26 : vector<64x1xf32>
    %29 = arith.subf %27, %28 : vector<64x1xf32>
    %30 = vector.broadcast %26 : vector<64x1xf32> to vector<64x50xf32>
    %31 = arith.mulf %2, %30 : vector<64x50xf32>
    %32 = vector.broadcast %29 : vector<64x1xf32> to vector<64x50xf32>
    %33 = arith.addf %31, %32 : vector<64x50xf32>
    %cst_21 = arith.constant 0.000000e+00 : f32
    %34 = vector.broadcast %cst_21 : f32 to vector<64x50xf32>
    %35 = arith.maximumf %33, %34 : vector<64x50xf32>
    %36 = arith.truncf %35 : vector<64x50xf32> to vector<64x50xbf16>
    %c0_22 = arith.constant 0 : index
    %c0_23 = arith.constant 0 : index
    %37 = vector.load %arg6[%c0_22, %c0_23] : memref<64x50xbf16, #tpu.memory_space<vmem>>, vector<64x50xbf16>
    tpu.vector_store %arg6[%c0_22, %c0_23], %36 {strides = array<i32>} : memref<64x50xbf16, #tpu.memory_space<vmem>>, vector<64x50xbf16>,
    return
  }
}

module attributes {stable_mosaic.version = 11 : i64} {
  func.func @_deconv_bn_relu_kernel(%arg0: memref<64x162xbf16, #tpu.memory_space<vmem>>, %arg1: memref<32x64xbf16, #tpu.memory_space<vmem>>, %arg2: memref<32x162xf32, #tpu.memory_space<vmem>>, %arg3: memref<32x32xf32, #tpu.memory_space<vmem>>, %arg4: memref<32x1xf32, #tpu.memory_space<vmem>>, %arg5: memref<32x1xf32, #tpu.memory_space<vmem>>, %arg6: memref<32x162xbf16, #tpu.memory_space<vmem>>) attributes {dimension_semantics = [], scalar_prefetch = 0 : i64, scratch_operands = 0 : i64, tpu.core_type = #tpu.core_type<tc>} {
    %c0 = arith.constant 0 : index
    %c0_0 = arith.constant 0 : index
    %0 = vector.load %arg1[%c0, %c0_0] : memref<32x64xbf16, #tpu.memory_space<vmem>>, vector<32x64xbf16>
    %c0_1 = arith.constant 0 : index
    %c0_2 = arith.constant 0 : index
    %1 = vector.load %arg0[%c0_1, %c0_2] : memref<64x162xbf16, #tpu.memory_space<vmem>>, vector<64x162xbf16>
    %cst = arith.constant dense<0.000000e+00> : vector<32x162xf32>
    %2 = tpu.matmul %0, %1, %cst {dimension_numbers = #tpu.dot_dimension_numbers<[1], [0], [0], [1], [0, 0, 1, 1], [], []>} : vector<32x64xbf16>, vector<64x162xbf16>, vector<32x162xf32> -> vector<32x162xf32>
    %c0_3 = arith.constant 0 : index
    %c0_4 = arith.constant 0 : index
    %3 = vector.load %arg2[%c0_3, %c0_4] : memref<32x162xf32, #tpu.memory_space<vmem>>, vector<32x162xf32>
    %4 = arith.mulf %2, %3 : vector<32x162xf32>
    %c0_5 = arith.constant 0 : index
    %c0_6 = arith.constant 0 : index
    %5 = vector.load %arg3[%c0_5, %c0_6] : memref<32x32xf32, #tpu.memory_space<vmem>>, vector<32x32xf32>
    %cst_7 = arith.constant dense<0.000000e+00> : vector<32x162xf32>
    %6 = tpu.matmul %5, %4, %cst_7 {dimension_numbers = #tpu.dot_dimension_numbers<[1], [0], [0], [1], [0, 0, 1, 1], [], []>} : vector<32x32xf32>, vector<32x162xf32>, vector<32x162xf32> -> vector<32x162xf32>
    %cst_8 = arith.constant dense<0.000000e+00> : vector<32xf32>
    %7 = vector.multi_reduction <add>, %6, %cst_8 [1] : vector<32x162xf32> to vector<32xf32>
    %8 = vector.shape_cast %7 : vector<32xf32> to vector<32x1xf32>
    %c0_9 = arith.constant 0 : index
    %c0_10 = arith.constant 0 : index
    %9 = vector.load %arg3[%c0_9, %c0_10] : memref<32x32xf32, #tpu.memory_space<vmem>>, vector<32x32xf32>
    %10 = arith.mulf %2, %4 : vector<32x162xf32>
    %cst_11 = arith.constant dense<0.000000e+00> : vector<32x162xf32>
    %11 = tpu.matmul %9, %10, %cst_11 {dimension_numbers = #tpu.dot_dimension_numbers<[1], [0], [0], [1], [0, 0, 1, 1], [], []>} : vector<32x32xf32>, vector<32x162xf32>, vector<32x162xf32> -> vector<32x162xf32>
    %cst_12 = arith.constant dense<0.000000e+00> : vector<32xf32>
    %12 = vector.multi_reduction <add>, %11, %cst_12 [1] : vector<32x162xf32> to vector<32xf32>
    %13 = vector.shape_cast %12 : vector<32xf32> to vector<32x1xf32>
    %cst_13 = arith.constant 0.001953125 : f32
    %14 = vector.broadcast %cst_13 : f32 to vector<32x1xf32>
    %15 = arith.mulf %8, %14 : vector<32x1xf32>
    %cst_14 = arith.constant 0.001953125 : f32
    %16 = vector.broadcast %cst_14 : f32 to vector<32x1xf32>
    %17 = arith.mulf %13, %16 : vector<32x1xf32>
    %18 = arith.mulf %15, %15 : vector<32x1xf32>
    %19 = arith.subf %17, %18 : vector<32x1xf32>
    %cst_15 = arith.constant 0.000000e+00 : f32
    %20 = vector.broadcast %cst_15 : f32 to vector<32x1xf32>
    %21 = arith.maximumf %19, %20 : vector<32x1xf32>
    %c0_16 = arith.constant 0 : index
    %c0_17 = arith.constant 0 : index
    %22 = vector.load %arg4[%c0_16, %c0_17] : memref<32x1xf32, #tpu.memory_space<vmem>>, vector<32x1xf32>
    %cst_18 = arith.constant 9.99999974E-6 : f32
    %23 = vector.broadcast %cst_18 : f32 to vector<32x1xf32>
    %24 = arith.addf %21, %23 : vector<32x1xf32>
    %25 = math.rsqrt %24 : vector<32x1xf32>
    %26 = arith.mulf %22, %25 : vector<32x1xf32>
    %c0_19 = arith.constant 0 : index
    %c0_20 = arith.constant 0 : index
    %27 = vector.load %arg5[%c0_19, %c0_20] : memref<32x1xf32, #tpu.memory_space<vmem>>, vector<32x1xf32>
    %28 = arith.mulf %15, %26 : vector<32x1xf32>
    %29 = arith.subf %27, %28 : vector<32x1xf32>
    %30 = vector.broadcast %26 : vector<32x1xf32> to vector<32x162xf32>
    %31 = arith.mulf %2, %30 : vector<32x162xf32>
    %32 = vector.broadcast %29 : vector<32x1xf32> to vector<32x162xf32>
    %33 = arith.addf %31, %32 : vector<32x162xf32>
    %cst_21 = arith.constant 0.000000e+00 : f32
    %34 = vector.broadcast %cst_21 : f32 to vector<32x162xf32>
    %35 = arith.maximumf %33, %34 : vector<32x162xf32>
    %36 = arith.truncf %35 : vector<32x162xf32> to vector<32x162xbf16>
    %c0_22 = arith.constant 0 : index
    %c0_23 = arith.constant 0 : index
    %37 = vector.load %arg6[%c0_22, %c0_23] : memref<32x162xbf16, #tpu.memory_space<vmem>>, vector<32x162xbf16>
    tpu.vector_store %arg6[%c0_22, %c0_23], %36 {strides = array<i32>} : memref<32x162xbf16, #tpu.memory_space<vmem>>, vector<32x162xbf16>,
    return
  }
}

module attributes {stable_mosaic.version = 11 : i64} {
  func.func @_deconv_bn_relu_kernel(%arg0: memref<32x578xbf16, #tpu.memory_space<vmem>>, %arg1: memref<16x32xbf16, #tpu.memory_space<vmem>>, %arg2: memref<16x578xf32, #tpu.memory_space<vmem>>, %arg3: memref<16x16xf32, #tpu.memory_space<vmem>>, %arg4: memref<16x1xf32, #tpu.memory_space<vmem>>, %arg5: memref<16x1xf32, #tpu.memory_space<vmem>>, %arg6: memref<16x578xbf16, #tpu.memory_space<vmem>>) attributes {dimension_semantics = [], scalar_prefetch = 0 : i64, scratch_operands = 0 : i64, tpu.core_type = #tpu.core_type<tc>} {
    %c0 = arith.constant 0 : index
    %c0_0 = arith.constant 0 : index
    %0 = vector.load %arg1[%c0, %c0_0] : memref<16x32xbf16, #tpu.memory_space<vmem>>, vector<16x32xbf16>
    %c0_1 = arith.constant 0 : index
    %c0_2 = arith.constant 0 : index
    %1 = vector.load %arg0[%c0_1, %c0_2] : memref<32x578xbf16, #tpu.memory_space<vmem>>, vector<32x578xbf16>
    %cst = arith.constant dense<0.000000e+00> : vector<16x578xf32>
    %2 = tpu.matmul %0, %1, %cst {dimension_numbers = #tpu.dot_dimension_numbers<[1], [0], [0], [1], [0, 0, 1, 1], [], []>} : vector<16x32xbf16>, vector<32x578xbf16>, vector<16x578xf32> -> vector<16x578xf32>
    %c0_3 = arith.constant 0 : index
    %c0_4 = arith.constant 0 : index
    %3 = vector.load %arg2[%c0_3, %c0_4] : memref<16x578xf32, #tpu.memory_space<vmem>>, vector<16x578xf32>
    %4 = arith.mulf %2, %3 : vector<16x578xf32>
    %c0_5 = arith.constant 0 : index
    %c0_6 = arith.constant 0 : index
    %5 = vector.load %arg3[%c0_5, %c0_6] : memref<16x16xf32, #tpu.memory_space<vmem>>, vector<16x16xf32>
    %cst_7 = arith.constant dense<0.000000e+00> : vector<16x578xf32>
    %6 = tpu.matmul %5, %4, %cst_7 {dimension_numbers = #tpu.dot_dimension_numbers<[1], [0], [0], [1], [0, 0, 1, 1], [], []>} : vector<16x16xf32>, vector<16x578xf32>, vector<16x578xf32> -> vector<16x578xf32>
    %cst_8 = arith.constant dense<0.000000e+00> : vector<16xf32>
    %7 = vector.multi_reduction <add>, %6, %cst_8 [1] : vector<16x578xf32> to vector<16xf32>
    %8 = vector.shape_cast %7 : vector<16xf32> to vector<16x1xf32>
    %c0_9 = arith.constant 0 : index
    %c0_10 = arith.constant 0 : index
    %9 = vector.load %arg3[%c0_9, %c0_10] : memref<16x16xf32, #tpu.memory_space<vmem>>, vector<16x16xf32>
    %10 = arith.mulf %2, %4 : vector<16x578xf32>
    %cst_11 = arith.constant dense<0.000000e+00> : vector<16x578xf32>
    %11 = tpu.matmul %9, %10, %cst_11 {dimension_numbers = #tpu.dot_dimension_numbers<[1], [0], [0], [1], [0, 0, 1, 1], [], []>} : vector<16x16xf32>, vector<16x578xf32>, vector<16x578xf32> -> vector<16x578xf32>
    %cst_12 = arith.constant dense<0.000000e+00> : vector<16xf32>
    %12 = vector.multi_reduction <add>, %11, %cst_12 [1] : vector<16x578xf32> to vector<16xf32>
    %13 = vector.shape_cast %12 : vector<16xf32> to vector<16x1xf32>
    %cst_13 = arith.constant 4.8828125E-4 : f32
    %14 = vector.broadcast %cst_13 : f32 to vector<16x1xf32>
    %15 = arith.mulf %8, %14 : vector<16x1xf32>
    %cst_14 = arith.constant 4.8828125E-4 : f32
    %16 = vector.broadcast %cst_14 : f32 to vector<16x1xf32>
    %17 = arith.mulf %13, %16 : vector<16x1xf32>
    %18 = arith.mulf %15, %15 : vector<16x1xf32>
    %19 = arith.subf %17, %18 : vector<16x1xf32>
    %cst_15 = arith.constant 0.000000e+00 : f32
    %20 = vector.broadcast %cst_15 : f32 to vector<16x1xf32>
    %21 = arith.maximumf %19, %20 : vector<16x1xf32>
    %c0_16 = arith.constant 0 : index
    %c0_17 = arith.constant 0 : index
    %22 = vector.load %arg4[%c0_16, %c0_17] : memref<16x1xf32, #tpu.memory_space<vmem>>, vector<16x1xf32>
    %cst_18 = arith.constant 9.99999974E-6 : f32
    %23 = vector.broadcast %cst_18 : f32 to vector<16x1xf32>
    %24 = arith.addf %21, %23 : vector<16x1xf32>
    %25 = math.rsqrt %24 : vector<16x1xf32>
    %26 = arith.mulf %22, %25 : vector<16x1xf32>
    %c0_19 = arith.constant 0 : index
    %c0_20 = arith.constant 0 : index
    %27 = vector.load %arg5[%c0_19, %c0_20] : memref<16x1xf32, #tpu.memory_space<vmem>>, vector<16x1xf32>
    %28 = arith.mulf %15, %26 : vector<16x1xf32>
    %29 = arith.subf %27, %28 : vector<16x1xf32>
    %30 = vector.broadcast %26 : vector<16x1xf32> to vector<16x578xf32>
    %31 = arith.mulf %2, %30 : vector<16x578xf32>
    %32 = vector.broadcast %29 : vector<16x1xf32> to vector<16x578xf32>
    %33 = arith.addf %31, %32 : vector<16x578xf32>
    %cst_21 = arith.constant 0.000000e+00 : f32
    %34 = vector.broadcast %cst_21 : f32 to vector<16x578xf32>
    %35 = arith.maximumf %33, %34 : vector<16x578xf32>
    %36 = arith.truncf %35 : vector<16x578xf32> to vector<16x578xbf16>
    %c0_22 = arith.constant 0 : index
    %c0_23 = arith.constant 0 : index
    %37 = vector.load %arg6[%c0_22, %c0_23] : memref<16x578xbf16, #tpu.memory_space<vmem>>, vector<16x578xbf16>
    tpu.vector_store %arg6[%c0_22, %c0_23], %36 {strides = array<i32>} : memref<16x578xbf16, #tpu.memory_space<vmem>>, vector<16x578xbf16>,
    return
  }
}

module attributes {stable_mosaic.version = 11 : i64} {
  func.func @_deconv_tanh_kernel(%arg0: i32, %arg1: memref<16x1152xbf16, #tpu.memory_space<vmem>>, %arg2: memref<12x16xbf16, #tpu.memory_space<vmem>>, %arg3: memref<12x1152xf32, #tpu.memory_space<vmem>>) attributes {dimension_semantics = [#tpu.dimension_semantics<parallel>], iteration_bounds = array<i64: 2>, scalar_prefetch = 0 : i64, scratch_operands = 0 : i64, tpu.core_type = #tpu.core_type<tc>, window_params = [{transform_indices = @transform_0, window_bounds = array<i64: 16, 1152>}, {pipeline_mode = #tpu.pipeline_mode<synchronous>, transform_indices = @transform_1, window_bounds = array<i64: 12, 16>}, {transform_indices = @transform_2, window_bounds = array<i64: 12, 1152>}]} {
    %c0 = arith.constant 0 : index
    %c0_0 = arith.constant 0 : index
    %0 = vector.load %arg2[%c0, %c0_0] : memref<12x16xbf16, #tpu.memory_space<vmem>>, vector<12x16xbf16>
    %c0_1 = arith.constant 0 : index
    %c0_2 = arith.constant 0 : index
    %1 = vector.load %arg1[%c0_1, %c0_2] : memref<16x1152xbf16, #tpu.memory_space<vmem>>, vector<16x1152xbf16>
    %cst = arith.constant dense<0.000000e+00> : vector<12x1152xf32>
    %2 = tpu.matmul %0, %1, %cst {dimension_numbers = #tpu.dot_dimension_numbers<[1], [0], [0], [1], [0, 0, 1, 1], [], []>} : vector<12x16xbf16>, vector<16x1152xbf16>, vector<12x1152xf32> -> vector<12x1152xf32>
    %3 = math.tanh %2 : vector<12x1152xf32>
    %c0_3 = arith.constant 0 : index
    %c0_4 = arith.constant 0 : index
    %4 = vector.load %arg3[%c0_3, %c0_4] : memref<12x1152xf32, #tpu.memory_space<vmem>>, vector<12x1152xf32>
    tpu.vector_store %arg3[%c0_3, %c0_4], %3 {strides = array<i32>} : memref<12x1152xf32, #tpu.memory_space<vmem>>, vector<12x1152xf32>,
    return
  }
  func.func @transform_0(%arg0: i32) -> (i32, i32) {
    %c0_i32 = arith.constant 0 : i32
    %c0_i32_0 = arith.constant 0 : i32
    return %c0_i32, %arg0 : i32, i32
  }
  func.func @transform_1(%arg0: i32) -> (i32, i32) {
    %c0_i32 = arith.constant 0 : i32
    %c0_i32_0 = arith.constant 0 : i32
    %c0_i32_1 = arith.constant 0 : i32
    return %c0_i32, %c0_i32_0 : i32, i32
  }
  func.func @transform_2(%arg0: i32) -> (i32, i32) {
    %c0_i32 = arith.constant 0 : i32
    %c0_i32_0 = arith.constant 0 : i32
    return %c0_i32, %arg0 : i32, i32
  }
}

</mosaic_0001>

<llo_original>
// kernel: generator_forward.5
$region0: #{generator_forward.5}
  #allocation0 [shape = 'u32[]', space=smem, size = 0x4, offset = 0x4, fixed_abs, tag = 'smem constant byte address 0x4 - core index']
  #allocation1 [shape = 'u32[72,128]{1,0:T(1,128)}', space=vmem, size = 0x9000, scoped, tag = 'internal scratch']
  %s0 = inlined_call_operand.vmem [shape: bf16[2,8], index: 0, kind: input, shape index: {}]
  %s1 = inlined_call_operand.hbm [shape: bf16[8,512], index: 1, kind: input, shape index: {}]
  %s2 = inlined_call_operand.hbm [shape: f32[512,512], index: 2, kind: input, shape index: {}]
  %s3 = inlined_call_operand.hbm [shape: f32[1,512], index: 3, kind: input, shape index: {}]
  %s4 = inlined_call_operand.hbm [shape: f32[1,512], index: 4, kind: input, shape index: {}]
  %s5 = inlined_call_operand.vmem [shape: bf16[2,512], index: 5, kind: output, shape index: {}]
  %s6 = sld [smem:[#allocation0]]
  $region46: #{generator_forward.5} parent=0
    _
  %s8 = ssub.s32 1, %s6
  %s9 = scalar_select 0, %s8, %s6
  $region1: #{generator_forward.5} parent=0
    #allocation2 [shape = 'u8[8192]{0}', space=vmem, size = 0x2000, scoped, tag = 'input window, operand 1, single buffered']
    #allocation3 [shape = 's32[1]{0}', space=sflag, size = 0x4, scoped, tag = 'scoped memory for generator_forward.5']
    #allocation4 [shape = 'u8[1048576]{0}', space=vmem, size = 0x100000, scoped, tag = 'input window, operand 2, single buffered']
    #allocation5 [shape = 's32[1]{0}', space=sflag, size = 0x4, scoped, tag = 'scoped memory for generator_forward.5']
    #allocation6 [shape = 'u8[2048]{0}', space=vmem, size = 0x800, scoped, tag = 'input window, operand 3, single buffered']
    #allocation7 [shape = 'u8[2048]{0}', space=vmem, size = 0x800, scoped, tag = 'input window, operand 4, single buffered']
    #allocation8 [shape = 's32[1]{0}', space=sflag, size = 0x4, scoped, tag = 'scoped memory for generator_forward.5']
    %10 = vsyncpa [#allocation3], 0
    %11 = vsyncpa [#allocation5], 0
    %12 = vsyncpa [#allocation8], 0
    // Predicated region
    $region2: #{generator_forward.5} parent=1 // pred_check
      _
    $region3: #{generator_forward.5} parent=1 // pred_check_branch
      %14 = sbr.rel (0) target = $region5
    $region4: #{generator_forward.5} parent=1 // pred_region
      _
    $region5: #{generator_forward.5} parent=1 // pred_fallthru
      _
    // Predicated region
    $region6: #{generator_forward.5} parent=1 // pred_check
      _
    $region7: #{generator_forward.5} parent=1 // pred_check_branch
      %16 = sbr.rel (0) target = $region9
    $region8: #{generator_forward.5} parent=1 // pred_region
      %18 = vsyncadd [#allocation3], 0
      %s20 = sshll.u32 %s1, 4
      %s21 = int_to_ptr.hbm [resolvable:$true] %s20
      %s22 = sshll.u32 [#allocation2], 4
      %s23 = int_to_ptr.vmem [resolvable:$true] %s22
      %25 = dma.hbm_to_vmem [thread:$0]  %s21, 256, %s23, [#allocation3]
    $region9: #{generator_forward.5} parent=1 // pred_fallthru
      _
    // Predicated region
    $region10: #{generator_forward.5} parent=1 // pred_check
      _
    $region11: #{generator_forward.5} parent=1 // pred_check_branch
      %27 = sbr.rel (0) target = $region13
    $region12: #{generator_forward.5} parent=1 // pred_region
      %29 = vsyncadd [#allocation5], 0
      %s30 = sshll.u32 %s2, 4
      %s31 = int_to_ptr.hbm [resolvable:$true] %s30
      %s32 = sshll.u32 [#allocation4], 4
      %s33 = int_to_ptr.vmem [resolvable:$true] %s32
      %38 = dma.hbm_to_vmem [thread:$0]  %s31, 32768, %s33, [#allocation5], 512, 512, 32
    $region13: #{generator_forward.5} parent=1 // pred_fallthru
      _
    // Predicated region
    $region14: #{generator_forward.5} parent=1 // pred_check
      _
    $region15: #{generator_forward.5} parent=1 // pred_check_branch
      %40 = sbr.rel (0) target = $region17
    $region16: #{generator_forward.5} parent=1 // pred_region
      %42 = vsyncadd [#allocation5], 0
      %s44 = sshll.u32 %s3, 4
      %s45 = int_to_ptr.hbm [resolvable:$true] %s44
      %s46 = sshll.u32 [#allocation6], 4
      %s47 = int_to_ptr.vmem [resolvable:$true] %s46
      %49 = dma.hbm_to_vmem [thread:$0]  %s45, 64, %s47, [#allocation5]
    $region17: #{generator_forward.5} parent=1 // pred_fallthru
      _
    // Predicated region
    $region18: #{generator_forward.5} parent=1 // pred_check
      _
    $region19: #{generator_forward.5} parent=1 // pred_check_branch
      %51 = sbr.rel (0) target = $region21
    $region20: #{generator_forward.5} parent=1 // pred_region
      %53 = vsyncadd [#allocation8], 0
      %s55 = sshll.u32 %s4, 4
      %s56 = int_to_ptr.hbm [resolvable:$true] %s55
      %s57 = sshll.u32 [#allocation7], 4
      %s58 = int_to_ptr.vmem [resolvable:$true] %s57
      %60 = dma.hbm_to_vmem [thread:$0]  %s56, 64, %s58, [#allocation8]
    $region21: #{generator_forward.5} parent=1 // pred_fallthru
      _
    // Predicated region
    $region22: #{generator_forward.5} parent=1 // pred_check
      _
    $region23: #{generator_forward.5} parent=1 // pred_check_branch
      %62 = sbr.rel (0) target = $region25
    $region24: #{generator_forward.5} parent=1 // pred_region
      %64 = dma.done [#allocation3], 256
    $region25: #{generator_forward.5} parent=1 // pred_fallthru
      _
    // Predicated region
    $region26: #{generator_forward.5} parent=1 // pred_check
      _
    $region27: #{generator_forward.5} parent=1 // pred_check_branch
      %66 = sbr.rel (0) target = $region29
    $region28: #{generator_forward.5} parent=1 // pred_region
      %68 = dma.done [#allocation5], 32768
    $region29: #{generator_forward.5} parent=1 // pred_fallthru
      _
    // Predicated region
    $region30: #{generator_forward.5} parent=1 // pred_check
      _
    $region31: #{generator_forward.5} parent=1 // pred_check_branch
      %70 = sbr.rel (0) target = $region33
    $region32: #{generator_forward.5} parent=1 // pred_region
      %72 = dma.done [#allocation5], 64
    $region33: #{generator_forward.5} parent=1 // pred_fallthru
      _
    // Predicated region
    $region34: #{generator_forward.5} parent=1 // pred_check
      _
    $region35: #{generator_forward.5} parent=1 // pred_check_branch
      %74 = sbr.rel (0) target = $region37
    $region36: #{generator_forward.5} parent=1 // pred_region
      %76 = dma.done [#allocation8], 64
    $region37: #{generator_forward.5} parent=1 // pred_fallthru
      _
    %v78 = vld [vmem:[%s0] sm:$0x1]
    %v79 = vld [vmem:[#allocation2] sm:$0xff]
    %v80 = vld [vmem:[#allocation2 + $0x8] sm:$0xff]
    %v83 = vunpack.c.l.b16 %v79
    %v84 = vunpack.c.h.b16 %v79
    %v85 = vunpack.c.l.b16 %v80
    %v86 = vunpack.c.h.b16 %v80
    %v87 = vpack.c.b16 %v83, %v83
    %v88 = vpack.c.b16 %v84, %v84
    %v89 = vpack.c.b16 %v85, %v85
    %v90 = vpack.c.b16 %v86, %v86
    %vm91 = vcmask 64512
    %v93 = vsel %vm91, %v78, 0
    %vm95 = vcmask 1043456
    %v97 = vsel %vm95, %v87, 0
    %v100 = vsel %vm95, %v88, 0
    %v103 = vsel %vm95, %v89, 0
    %v106 = vsel %vm95, %v90, 0
    %108 = vmatpush.bf16.msra.mxu0 0
    %109 = vmatpush.bf16.msra.mxu0 0
    %110 = vmatpush.bf16.msra.mxu0 0
    %111 = vmatpush.bf16.msra.mxu0 0
    %112 = vmatpush.bf16.msra.mxu0 0
    %113 = vmatpush.bf16.msra.mxu0 0
    %114 = vmatpush.bf16.msra.mxu0 0
    %115 = vmatpush.bf16.msra.mxu0 %v97
    %116 = vmatmul.bf16.gmra.mxu0 %v93
    %v117 = vpop.f32.mrf.mxu0
    %v118 = vadd.f32 0.0, %v117
    %v119 = vpop.f32.mrf.mxu0
    %120 = vdwg.mxu0
    %121 = vmatpush.bf16.msra.mxu0 0
    %122 = vmatpush.bf16.msra.mxu0 0
    %123 = vmatpush.bf16.msra.mxu0 0
    %124 = vmatpush.bf16.msra.mxu0 0
    %125 = vmatpush.bf16.msra.mxu0 0
    %126 = vmatpush.bf16.msra.mxu0 0
    %127 = vmatpush.bf16.msra.mxu0 0
    %128 = vmatpush.bf16.msra.mxu0 %v100
    %129 = vmatmul.bf16.gmra.mxu0 %v93
    %v130 = vpop.f32.mrf.mxu0
    %v131 = vadd.f32 0.0, %v130
    %v132 = vpop.f32.mrf.mxu0
    %133 = vdwg.mxu0
    %134 = vmatpush.bf16.msra.mxu0 0
    %135 = vmatpush.bf16.msra.mxu0 0
    %136 = vmatpush.bf16.msra.mxu0 0
    %137 = vmatpush.bf16.msra.mxu0 0
    %138 = vmatpush.bf16.msra.mxu0 0
    %139 = vmatpush.bf16.msra.mxu0 0
    %140 = vmatpush.bf16.msra.mxu0 0
    %141 = vmatpush.bf16.msra.mxu0 %v103
    %142 = vmatmul.bf16.gmra.mxu0 %v93
    %v143 = vpop.f32.mrf.mxu0
    %v144 = vadd.f32 0.0, %v143
    %v145 = vpop.f32.mrf.mxu0
    %146 = vdwg.mxu0
    %147 = vmatpush.bf16.msra.mxu0 0
    %148 = vmatpush.bf16.msra.mxu0 0
    %149 = vmatpush.bf16.msra.mxu0 0
    %150 = vmatpush.bf16.msra.mxu0 0
    %151 = vmatpush.bf16.msra.mxu0 0
    %152 = vmatpush.bf16.msra.mxu0 0
    %153 = vmatpush.bf16.msra.mxu0 0
    %154 = vmatpush.bf16.msra.mxu0 %v106
    %155 = vmatmul.bf16.gmra.mxu0 %v93
    %v156 = vpop.f32.mrf.mxu0
    %v157 = vadd.f32 0.0, %v156
    %v158 = vpop.f32.mrf.mxu0
    %159 = vdwg.mxu0
    %v160 = vld [vmem:[#allocation4] sm:$0xff]
    %v161 = vld [vmem:[#allocation4 + $0x8] sm:$0xff]
    %v162 = vld [vmem:[#allocation4 + $0x10] sm:$0xff]
    %v163 = vld [vmem:[#allocation4 + $0x18] sm:$0xff]
    %v164 = vld [vmem:[#allocation4 + $0x20] sm:$0xff]
    %v165 = vld [vmem:[#allocation4 + $0x28] sm:$0xff]
    %v166 = vld [vmem:[#allocation4 + $0x30] sm:$0xff]
    %v167 = vld [vmem:[#allocation4 + $0x38] sm:$0xff]
    %v168 = vld [vmem:[#allocation4 + $0x40] sm:$0xff]
    %v169 = vld [vmem:[#allocation4 + $0x48] sm:$0xff]
    %v170 = vld [vmem:[#allocation4 + $0x50] sm:$0xff]
    %v171 = vld [vmem:[#allocation4 + $0x58] sm:$0xff]
    %v172 = vld [vmem:[#allocation4 + $0x60] sm:$0xff]
    %v173 = vld [vmem:[#allocation4 + $0x68] sm:$0xff]
    %v174 = vld [vmem:[#allocation4 + $0x70] sm:$0xff]
    %v175 = vld [vmem:[#allocation4 + $0x78] sm:$0xff]
    %v176 = vld [vmem:[#allocation4 + $0x80] sm:$0xff]
    %v177 = vld [vmem:[#allocation4 + $0x88] sm:$0xff]
    %v178 = vld [vmem:[#allocation4 + $0x90] sm:$0xff]
    %v179 = vld [vmem:[#allocation4 + $0x98] sm:$0xff]
    %v180 = vld [vmem:[#allocation4 + $0xa0] sm:$0xff]
    %v181 = vld [vmem:[#allocation4 + $0xa8] sm:$0xff]
    %v182 = vld [vmem:[#allocation4 + $0xb0] sm:$0xff]
    %v183 = vld [vmem:[#allocation4 + $0xb8] sm:$0xff]
    %v184 = vld [vmem:[#allocation4 + $0xc0] sm:$0xff]
    %v185 = vld [vmem:[#allocation4 + $0xc8] sm:$0xff]
    %v186 = vld [vmem:[#allocation4 + $0xd0] sm:$0xff]
    %v187 = vld [vmem:[#allocation4 + $0xd8] sm:$0xff]
    %v188 = vld [vmem:[#allocation4 + $0xe0] sm:$0xff]
    %v189 = vld [vmem:[#allocation4 + $0xe8] sm:$0xff]
    %v190 = vld [vmem:[#allocation4 + $0xf0] sm:$0xff]
    %v191 = vld [vmem:[#allocation4 + $0xf8] sm:$0xff]
    %v192 = vld [vmem:[#allocation4 + $0x100] sm:$0xff]
    %v193 = vld [vmem:[#allocation4 + $0x108] sm:$0xff]
    %v194 = vld [vmem:[#allocation4 + $0x110] sm:$0xff]
    %v195 = vld [vmem:[#allocation4 + $0x118] sm:$0xff]
    %v196 = vld [vmem:[#allocation4 + $0x120] sm:$0xff]
    %v197 = vld [vmem:[#allocation4 + $0x128] sm:$0xff]
    %v198 = vld [vmem:[#allocation4 + $0x130] sm:$0xff]
    %v199 = vld [vmem:[#allocation4 + $0x138] sm:$0xff]
    %v200 = vld [vmem:[#allocation4 + $0x140] sm:$0xff]
    %v201 = vld [vmem:[#allocation4 + $0x148] sm:$0xff]
    %v202 = vld [vmem:[#allocation4 + $0x150] sm:$0xff]
    %v203 = vld [vmem:[#allocation4 + $0x158] sm:$0xff]
    %v204 = vld [vmem:[#allocation4 + $0x160] sm:$0xff]
    %v205 = vld [vmem:[#allocation4 + $0x168] sm:$0xff]
    %v206 = vld [vmem:[#allocation4 + $0x170] sm:$0xff]
    %v207 = vld [vmem:[#allocation4 + $0x178] sm:$0xff]
    %v208 = vld [vmem:[#allocation4 + $0x180] sm:$0xff]
    %v209 = vld [vmem:[#allocation4 + $0x188] sm:$0xff]
    %v210 = vld [vmem:[#allocation4 + $0x190] sm:$0xff]
    %v211 = vld [vmem:[#allocation4 + $0x198] sm:$0xff]
    %v212 = vld [vmem:[#allocation4 + $0x1a0] sm:$0xff]
    %v213 = vld [vmem:[#allocation4 + $0x1a8] sm:$0xff]
    %v214 = vld [vmem:[#allocation4 + $0x1b0] sm:$0xff]
    %v215 = vld [vmem:[#allocation4 + $0x1b8] sm:$0xff]
    %v216 = vld [vmem:[#allocation4 + $0x1c0] sm:$0xff]
    %v217 = vld [vmem:[#allocation4 + $0x1c8] sm:$0xff]
    %v218 = vld [vmem:[#allocation4 + $0x1d0] sm:$0xff]
    %v219 = vld [vmem:[#allocation4 + $0x1d8] sm:$0xff]
    %v220 = vld [vmem:[#allocation4 + $0x1e0] sm:$0xff]
    %v221 = vld [vmem:[#allocation4 + $0x1e8] sm:$0xff]
    %v222 = vld [vmem:[#allocation4 + $0x1f0] sm:$0xff]
    %v223 = vld [vmem:[#allocation4 + $0x1f8] sm:$0xff]
    %v224 = vld [vmem:[#allocation4 + $0x200] sm:$0xff]
    %v225 = vld [vmem:[#allocation4 + $0x208] sm:$0xff]
    %v226 = vld [vmem:[#allocation4 + $0x210] sm:$0xff]
    %v227 = vld [vmem:[#allocation4 + $0x218] sm:$0xff]
    %v228 = vld [vmem:[#allocation4 + $0x220] sm:$0xff]
    %v229 = vld [vmem:[#allocation4 + $0x228] sm:$0xff]
    %v230 = vld [vmem:[#allocation4 + $0x230] sm:$0xff]
    %v231 = vld [vmem:[#allocation4 + $0x238] sm:$0xff]
    %v232 = vld [vmem:[#allocation4 + $0x240] sm:$0xff]
    %v233 = vld [vmem:[#allocation4 + $0x248] sm:$0xff]
    %v234 = vld [vmem:[#allocation4 + $0x250] sm:$0xff]
    %v235 = vld [vmem:[#allocation4 + $0x258] sm:$0xff]
    %v236 = vld [vmem:[#allocation4 + $0x260] sm:$0xff]
    %v237 = vld [vmem:[#allocation4 + $0x268] sm:$0xff]
    %v238 = vld [vmem:[#allocation4 + $0x270] sm:$0xff]
    %v239 = vld [vmem:[#allocation4 + $0x278] sm:$0xff]
    %v240 = vld [vmem:[#allocation4 + $0x280] sm:$0xff]
    %v241 = vld [vmem:[#allocation4 + $0x288] sm:$0xff]
    %v242 = vld [vmem:[#allocation4 + $0x290] sm:$0xff]
    %v243 = vld [vmem:[#allocation4 + $0x298] sm:$0xff]
    %v244 = vld [vmem:[#allocation4 + $0x2a0] sm:$0xff]
    %v245 = vld [vmem:[#allocation4 + $0x2a8] sm:$0xff]
    %v246 = vld [vmem:[#allocation4 + $0x2b0] sm:$0xff]
    %v247 = vld [vmem:[#allocation4 + $0x2b8] sm:$0xff]
    %v248 = vld [vmem:[#allocation4 + $0x2c0] sm:$0xff]
    %v249 = vld [vmem:[#allocation4 + $0x2c8] sm:$0xff]
    %v250 = vld [vmem:[#allocation4 + $0x2d0] sm:$0xff]
    %v251 = vld [vmem:[#allocation4 + $0x2d8] sm:$0xff]
    %v252 = vld [vmem:[#allocation4 + $0x2e0] sm:$0xff]
    %v253 = vld [vmem:[#allocation4 + $0x2e8] sm:$0xff]
    %v254 = vld [vmem:[#allocation4 + $0x2f0] sm:$0xff]
    %v255 = vld [vmem:[#allocation4 + $0x2f8] sm:$0xff]
    %v256 = vld [vmem:[#allocation4 + $0x300] sm:$0xff]
    %v257 = vld [vmem:[#allocation4 + $0x308] sm:$0xff]
    %v258 = vld [vmem:[#allocation4 + $0x310] sm:$0xff]
    %v259 = vld [vmem:[#allocation4 + $0x318] sm:$0xff]
    %v260 = vld [vmem:[#allocation4 + $0x320] sm:$0xff]
    %v261 = vld [vmem:[#allocation4 + $0x328] sm:$0xff]
    %v262 = vld [vmem:[#allocation4 + $0x330] sm:$0xff]
    %v263 = vld [vmem:[#allocation4 + $0x338] sm:$0xff]
    %v264 = vld [vmem:[#allocation4 + $0x340] sm:$0xff]
    %v265 = vld [vmem:[#allocation4 + $0x348] sm:$0xff]
    %v266 = vld [vmem:[#allocation4 + $0x350] sm:$0xff]
    %v267 = vld [vmem:[#allocation4 + $0x358] sm:$0xff]
    %v268 = vld [vmem:[#allocation4 + $0x360] sm:$0xff]
    %v269 = vld [vmem:[#allocation4 + $0x368] sm:$0xff]
    %v270 = vld [vmem:[#allocation4 + $0x370] sm:$0xff]
    %v271 = vld [vmem:[#allocation4 + $0x378] sm:$0xff]
    %v272 = vld [vmem:[#allocation4 + $0x380] sm:$0xff]
    %v273 = vld [vmem:[#allocation4 + $0x388] sm:$0xff]
    %v274 = vld [vmem:[#allocation4 + $0x390] sm:$0xff]
    %v275 = vld [vmem:[#allocation4 + $0x398] sm:$0xff]
    %v276 = vld [vmem:[#allocation4 + $0x3a0] sm:$0xff]
    %v277 = vld [vmem:[#allocation4 + $0x3a8] sm:$0xff]
    %v278 = vld [vmem:[#allocation4 + $0x3b0] sm:$0xff]
    %v279 = vld [vmem:[#allocation4 + $0x3b8] sm:$0xff]
    %v280 = vld [vmem:[#allocation4 + $0x3c0] sm:$0xff]
    %v281 = vld [vmem:[#allocation4 + $0x3c8] sm:$0xff]
    %v282 = vld [vmem:[#allocation4 + $0x3d0] sm:$0xff]
    %v283 = vld [vmem:[#allocation4 + $0x3d8] sm:$0xff]
    %v284 = vld [vmem:[#allocation4 + $0x3e0] sm:$0xff]
    %v285 = vld [vmem:[#allocation4 + $0x3e8] sm:$0xff]
    %v286 = vld [vmem:[#allocation4 + $0x3f0] sm:$0xff]
    %v287 = vld [vmem:[#allocation4 + $0x3f8] sm:$0xff]
    %v288 = vld [vmem:[#allocation4 + $0x400] sm:$0xff]
    %v289 = vld [vmem:[#allocation4 + $0x408] sm:$0xff]
    %v290 = vld [vmem:[#allocation4 + $0x410] sm:$0xff]
    %v291 = vld [vmem:[#allocation4 + $0x418] sm:$0xff]
    %v292 = vld [vmem:[#allocation4 + $0x420] sm:$0xff]
    %v293 = vld [vmem:[#allocation4 + $0x428] sm:$0xff]
    %v294 = vld [vmem:[#allocation4 + $0x430] sm:$0xff]
    %v295 = vld [vmem:[#allocation4 + $0x438] sm:$0xff]
    %v296 = vld [vmem:[#allocation4 + $0x440] sm:$0xff]
    %v297 = vld [vmem:[#allocation4 + $0x448] sm:$0xff]
    %v298 = vld [vmem:[#allocation4 + $0x450] sm:$0xff]
    %v299 = vld [vmem:[#allocation4 + $0x458] sm:$0xff]
    %v300 = vld [vmem:[#allocation4 + $0x460] sm:$0xff]
    %v301 = vld [vmem:[#allocation4 + $0x468] sm:$0xff]
    %v302 = vld [vmem:[#allocation4 + $0x470] sm:$0xff]
    %v303 = vld [vmem:[#allocation4 + $0x478] sm:$0xff]
    %v304 = vld [vmem:[#allocation4 + $0x480] sm:$0xff]
    %v305 = vld [vmem:[#allocation4 + $0x488] sm:$0xff]
    %v306 = vld [vmem:[#allocation4 + $0x490] sm:$0xff]
    %v307 = vld [vmem:[#allocation4 + $0x498] sm:$0xff]
    %v308 = vld [vmem:[#allocation4 + $0x4a0] sm:$0xff]
    %v309 = vld [vmem:[#allocation4 + $0x4a8] sm:$0xff]
    %v310 = vld [vmem:[#allocation4 + $0x4b0] sm:$0xff]
    %v311 = vld [vmem:[#allocation4 + $0x4b8] sm:$0xff]
    %v312 = vld [vmem:[#allocation4 + $0x4c0] sm:$0xff]
    %v313 = vld [vmem:[#allocation4 + $0x4c8] sm:$0xff]
    %v314 = vld [vmem:[#allocation4 + $0x4d0] sm:$0xff]
    %v315 = vld [vmem:[#allocation4 + $0x4d8] sm:$0xff]
    %v316 = vld [vmem:[#allocation4 + $0x4e0] sm:$0xff]
    %v317 = vld [vmem:[#allocation4 + $0x4e8] sm:$0xff]
    %v318 = vld [vmem:[#allocation4 + $0x4f0] sm:$0xff]
    %v319 = vld [vmem:[#allocation4 + $0x4f8] sm:$0xff]
    %v320 = vld [vmem:[#allocation4 + $0x500] sm:$0xff]
    %v321 = vld [vmem:[#allocation4 + $0x508] sm:$0xff]
    %v322 = vld [vmem:[#allocation4 + $0x510] sm:$0xff]
    %v323 = vld [vmem:[#allocation4 + $0x518] sm:$0xff]
    %v324 = vld [vmem:[#allocation4 + $0x520] sm:$0xff]
    %v325 = vld [vmem:[#allocation4 + $0x528] sm:$0xff]
    %v326 = vld [vmem:[#allocation4 + $0x530] sm:$0xff]
    %v327 = vld [vmem:[#allocation4 + $0x538] sm:$0xff]
    %v328 = vld [vmem:[#allocation4 + $0x540] sm:$0xff]
    %v329 = vld [vmem:[#allocation4 + $0x548] sm:$0xff]
    %v330 = vld [vmem:[#allocation4 + $0x550] sm:$0xff]
    %v331 = vld [vmem:[#allocation4 + $0x558] sm:$0xff]
    %v332 = vld [vmem:[#allocation4 + $0x560] sm:$0xff]
    %v333 = vld [vmem:[#allocation4 + $0x568] sm:$0xff]
    %v334 = vld [vmem:[#allocation4 + $0x570] sm:$0xff]
    %v335 = vld [vmem:[#allocation4 + $0x578] sm:$0xff]
    %v336 = vld [vmem:[#allocation4 + $0x580] sm:$0xff]
    %v337 = vld [vmem:[#allocation4 + $0x588] sm:$0xff]
    %v338 = vld [vmem:[#allocation4 + $0x590] sm:$0xff]
    %v339 = vld [vmem:[#allocation4 + $0x598] sm:$0xff]
    %v340 = vld [vmem:[#allocation4 + $0x5a0] sm:$0xff]
    %v341 = vld [vmem:[#allocation4 + $0x5a8] sm:$0xff]
    %v342 = vld [vmem:[#allocation4 + $0x5b0] sm:$0xff]
    %v343 = vld [vmem:[#allocation4 + $0x5b8] sm:$0xff]
    %v344 = vld [vmem:[#allocation4 + $0x5c0] sm:$0xff]
    %v345 = vld [vmem:[#allocation4 + $0x5c8] sm:$0xff]
    %v346 = vld [vmem:[#allocation4 + $0x5d0] sm:$0xff]
    %v347 = vld [vmem:[#allocation4 + $0x5d8] sm:$0xff]
    %v348 = vld [vmem:[#allocation4 + $0x5e0] sm:$0xff]
    %v349 = vld [vmem:[#allocation4 + $0x5e8] sm:$0xff]
    %v350 = vld [vmem:[#allocation4 + $0x5f0] sm:$0xff]
    %v351 = vld [vmem:[#allocation4 + $0x5f8] sm:$0xff]
    %v352 = vld [vmem:[#allocation4 + $0x600] sm:$0xff]
    %v353 = vld [vmem:[#allocation4 + $0x608] sm:$0xff]
    %v354 = vld [vmem:[#allocation4 + $0x610] sm:$0xff]
    %v355 = vld [vmem:[#allocation4 + $0x618] sm:$0xff]
    %v356 = vld [vmem:[#allocation4 + $0x620] sm:$0xff]
    %v357 = vld [vmem:[#allocation4 + $0x628] sm:$0xff]
    %v358 = vld [vmem:[#allocation4 + $0x630] sm:$0xff]
    %v359 = vld [vmem:[#allocation4 + $0x638] sm:$0xff]
    %v360 = vld [vmem:[#allocation4 + $0x640] sm:$0xff]
    %v361 = vld [vmem:[#allocation4 + $0x648] sm:$0xff]
    %v362 = vld [vmem:[#allocation4 + $0x650] sm:$0xff]
    %v363 = vld [vmem:[#allocation4 + $0x658] sm:$0xff]
    %v364 = vld [vmem:[#allocation4 + $0x660] sm:$0xff]
    %v365 = vld [vmem:[#allocation4 + $0x668] sm:$0xff]
    %v366 = vld [vmem:[#allocation4 + $0x670] sm:$0xff]
    %v367 = vld [vmem:[#allocation4 + $0x678] sm:$0xff]
    %v368 = vld [vmem:[#allocation4 + $0x680] sm:$0xff]
    %v369 = vld [vmem:[#allocation4 + $0x688] sm:$0xff]
    %v370 = vld [vmem:[#allocation4 + $0x690] sm:$0xff]
    %v371 = vld [vmem:[#allocation4 + $0x698] sm:$0xff]
    %v372 = vld [vmem:[#allocation4 + $0x6a0] sm:$0xff]
    %v373 = vld [vmem:[#allocation4 + $0x6a8] sm:$0xff]
    %v374 = vld [vmem:[#allocation4 + $0x6b0] sm:$0xff]
    %v375 = vld [vmem:[#allocation4 + $0x6b8] sm:$0xff]
    %v376 = vld [vmem:[#allocation4 + $0x6c0] sm:$0xff]
    %v377 = vld [vmem:[#allocation4 + $0x6c8] sm:$0xff]
    %v378 = vld [vmem:[#allocation4 + $0x6d0] sm:$0xff]
    %v379 = vld [vmem:[#allocation4 + $0x6d8] sm:$0xff]
    %v380 = vld [vmem:[#allocation4 + $0x6e0] sm:$0xff]
    %v381 = vld [vmem:[#allocation4 + $0x6e8] sm:$0xff]
    %v382 = vld [vmem:[#allocation4 + $0x6f0] sm:$0xff]
    %v383 = vld [vmem:[#allocation4 + $0x6f8] sm:$0xff]
    %v384 = vld [vmem:[#allocation4 + $0x700] sm:$0xff]
    %v385 = vld [vmem:[#allocation4 + $0x708] sm:$0xff]
    %v386 = vld [vmem:[#allocation4 + $0x710] sm:$0xff]
    %v387 = vld [vmem:[#allocation4 + $0x718] sm:$0xff]
    %v388 = vld [vmem:[#allocation4 + $0x720] sm:$0xff]
    %v389 = vld [vmem:[#allocation4 + $0x728] sm:$0xff]
    %v390 = vld [vmem:[#allocation4 + $0x730] sm:$0xff]
    %v391 = vld [vmem:[#allocation4 + $0x738] sm:$0xff]
    %v392 = vld [vmem:[#allocation4 + $0x740] sm:$0xff]
    %v393 = vld [vmem:[#allocation4 + $0x748] sm:$0xff]
    %v394 = vld [vmem:[#allocation4 + $0x750] sm:$0xff]
    %v395 = vld [vmem:[#allocation4 + $0x758] sm:$0xff]
    %v396 = vld [vmem:[#allocation4 + $0x760] sm:$0xff]
    %v397 = vld [vmem:[#allocation4 + $0x768] sm:$0xff]
    %v398 = vld [vmem:[#allocation4 + $0x770] sm:$0xff]
    %v399 = vld [vmem:[#allocation4 + $0x778] sm:$0xff]
    %v400 = vld [vmem:[#allocation4 + $0x780] sm:$0xff]
    %v401 = vld [vmem:[#allocation4 + $0x788] sm:$0xff]
    %v402 = vld [vmem:[#allocation4 + $0x790] sm:$0xff]
    %v403 = vld [vmem:[#allocation4 + $0x798] sm:$0xff]
    %v404 = vld [vmem:[#allocation4 + $0x7a0] sm:$0xff]
    %v405 = vld [vmem:[#allocation4 + $0x7a8] sm:$0xff]
    %v406 = vld [vmem:[#allocation4 + $0x7b0] sm:$0xff]
    %v407 = vld [vmem:[#allocation4 + $0x7b8] sm:$0xff]
    %v408 = vld [vmem:[#allocation4 + $0x7c0] sm:$0xff]
    %v409 = vld [vmem:[#allocation4 + $0x7c8] sm:$0xff]
    %v410 = vld [vmem:[#allocation4 + $0x7d0] sm:$0xff]
    %v411 = vld [vmem:[#allocation4 + $0x7d8] sm:$0xff]
    %v412 = vld [vmem:[#allocation4 + $0x7e0] sm:$0xff]
    %v413 = vld [vmem:[#allocation4 + $0x7e8] sm:$0xff]
    %v414 = vld [vmem:[#allocation4 + $0x7f0] sm:$0xff]
    %v415 = vld [vmem:[#allocation4 + $0x7f8] sm:$0xff]
    %416 = vmatpush.msra.mxu0 %v220
    %417 = vmatpush.msra.mxu0 %v216
    %418 = vmatpush.msra.mxu0 %v212
    %419 = vmatpush.msra.mxu0 %v208
    %420 = vmatpush.msra.mxu0 %v204
    %421 = vmatpush.msra.mxu0 %v200
    %422 = vmatpush.msra.mxu0 %v196
    %423 = vmatpush.msra.mxu0 %v192
    %424 = vmatpush.msra.mxu0 %v188
    %425 = vmatpush.msra.mxu0 %v184
    %426 = vmatpush.msra.mxu0 %v180
    %427 = vmatpush.msra.mxu0 %v176
    %428 = vmatpush.msra.mxu0 %v172
    %429 = vmatpush.msra.mxu0 %v168
    %430 = vmatpush.msra.mxu0 %v164
    %431 = vmatpush.msra.mxu0 %v160
    %432 = vmatmul.f32.gmra.mxu0 %v118
    %v433 = vpop.f32.mrf.mxu0
    %v434 = vadd.f32 0.0, %v433
    %435 = vdwg.mxu0
    %436 = vmatpush.msra.mxu0 %v284
    %437 = vmatpush.msra.mxu0 %v280
    %438 = vmatpush.msra.mxu0 %v276
    %439 = vmatpush.msra.mxu0 %v272
    %440 = vmatpush.msra.mxu0 %v268
    %441 = vmatpush.msra.mxu0 %v264
    %442 = vmatpush.msra.mxu0 %v260
    %443 = vmatpush.msra.mxu0 %v256
    %444 = vmatpush.msra.mxu0 %v252
    %445 = vmatpush.msra.mxu0 %v248
    %446 = vmatpush.msra.mxu0 %v244
    %447 = vmatpush.msra.mxu0 %v240
    %448 = vmatpush.msra.mxu0 %v236
    %449 = vmatpush.msra.mxu0 %v232
    %450 = vmatpush.msra.mxu0 %v228
    %451 = vmatpush.msra.mxu0 %v224
    %452 = vmatmul.f32.gmra.mxu0 %v131
    %v453 = vpop.f32.mrf.mxu0
    %v454 = vadd.f32 %v434, %v453
    %455 = vdwg.mxu0
    %456 = vmatpush.msra.mxu0 %v348
    %457 = vmatpush.msra.mxu0 %v344
    %458 = vmatpush.msra.mxu0 %v340
    %459 = vmatpush.msra.mxu0 %v336
    %460 = vmatpush.msra.mxu0 %v332
    %461 = vmatpush.msra.mxu0 %v328
    %462 = vmatpush.msra.mxu0 %v324
    %463 = vmatpush.msra.mxu0 %v320
    %464 = vmatpush.msra.mxu0 %v316
    %465 = vmatpush.msra.mxu0 %v312
    %466 = vmatpush.msra.mxu0 %v308
    %467 = vmatpush.msra.mxu0 %v304
    %468 = vmatpush.msra.mxu0 %v300
    %469 = vmatpush.msra.mxu0 %v296
    %470 = vmatpush.msra.mxu0 %v292
    %471 = vmatpush.msra.mxu0 %v288
    %472 = vmatmul.f32.gmra.mxu0 %v144
    %v473 = vpop.f32.mrf.mxu0
    %v474 = vadd.f32 %v454, %v473
    %475 = vdwg.mxu0
    %476 = vmatpush.msra.mxu0 %v412
    %477 = vmatpush.msra.mxu0 %v408
    %478 = vmatpush.msra.mxu0 %v404
    %479 = vmatpush.msra.mxu0 %v400
    %480 = vmatpush.msra.mxu0 %v396
    %481 = vmatpush.msra.mxu0 %v392
    %482 = vmatpush.msra.mxu0 %v388
    %483 = vmatpush.msra.mxu0 %v384
    %484 = vmatpush.msra.mxu0 %v380
    %485 = vmatpush.msra.mxu0 %v376
    %486 = vmatpush.msra.mxu0 %v372
    %487 = vmatpush.msra.mxu0 %v368
    %488 = vmatpush.msra.mxu0 %v364
    %489 = vmatpush.msra.mxu0 %v360
    %490 = vmatpush.msra.mxu0 %v356
    %491 = vmatpush.msra.mxu0 %v352
    %492 = vmatmul.f32.gmra.mxu0 %v157
    %v493 = vpop.f32.mrf.mxu0
    %v494 = vadd.f32 %v474, %v493
    %495 = vdwg.mxu0
    %496 = vmatpush.msra.mxu0 %v221
    %497 = vmatpush.msra.mxu0 %v217
    %498 = vmatpush.msra.mxu0 %v213
    %499 = vmatpush.msra.mxu0 %v209
    %500 = vmatpush.msra.mxu0 %v205
    %501 = vmatpush.msra.mxu0 %v201
    %502 = vmatpush.msra.mxu0 %v197
    %503 = vmatpush.msra.mxu0 %v193
    %504 = vmatpush.msra.mxu0 %v189
    %505 = vmatpush.msra.mxu0 %v185
    %506 = vmatpush.msra.mxu0 %v181
    %507 = vmatpush.msra.mxu0 %v177
    %508 = vmatpush.msra.mxu0 %v173
    %509 = vmatpush.msra.mxu0 %v169
    %510 = vmatpush.msra.mxu0 %v165
    %511 = vmatpush.msra.mxu0 %v161
    %512 = vmatmul.f32.gmra.mxu0 %v118
    %v513 = vpop.f32.mrf.mxu0
    %v514 = vadd.f32 0.0, %v513
    %515 = vdwg.mxu0
    %516 = vmatpush.msra.mxu0 %v285
    %517 = vmatpush.msra.mxu0 %v281
    %518 = vmatpush.msra.mxu0 %v277
    %519 = vmatpush.msra.mxu0 %v273
    %520 = vmatpush.msra.mxu0 %v269
    %521 = vmatpush.msra.mxu0 %v265
    %522 = vmatpush.msra.mxu0 %v261
    %523 = vmatpush.msra.mxu0 %v257
    %524 = vmatpush.msra.mxu0 %v253
    %525 = vmatpush.msra.mxu0 %v249
    %526 = vmatpush.msra.mxu0 %v245
    %527 = vmatpush.msra.mxu0 %v241
    %528 = vmatpush.msra.mxu0 %v237
    %529 = vmatpush.msra.mxu0 %v233
    %530 = vmatpush.msra.mxu0 %v229
    %531 = vmatpush.msra.mxu0 %v225
    %532 = vmatmul.f32.gmra.mxu0 %v131
    %v533 = vpop.f32.mrf.mxu0
    %v534 = vadd.f32 %v514, %v533
    %535 = vdwg.mxu0
    %536 = vmatpush.msra.mxu0 %v349
    %537 = vmatpush.msra.mxu0 %v345
    %538 = vmatpush.msra.mxu0 %v341
    %539 = vmatpush.msra.mxu0 %v337
    %540 = vmatpush.msra.mxu0 %v333
    %541 = vmatpush.msra.mxu0 %v329
    %542 = vmatpush.msra.mxu0 %v325
    %543 = vmatpush.msra.mxu0 %v321
    %544 = vmatpush.msra.mxu0 %v317
    %545 = vmatpush.msra.mxu0 %v313
    %546 = vmatpush.msra.mxu0 %v309
    %547 = vmatpush.msra.mxu0 %v305
    %548 = vmatpush.msra.mxu0 %v301
    %549 = vmatpush.msra.mxu0 %v297
    %550 = vmatpush.msra.mxu0 %v293
    %551 = vmatpush.msra.mxu0 %v289
    %552 = vmatmul.f32.gmra.mxu0 %v144
    %v553 = vpop.f32.mrf.mxu0
    %v554 = vadd.f32 %v534, %v553
    %555 = vdwg.mxu0
    %556 = vmatpush.msra.mxu0 %v413
    %557 = vmatpush.msra.mxu0 %v409
    %558 = vmatpush.msra.mxu0 %v405
    %559 = vmatpush.msra.mxu0 %v401
    %560 = vmatpush.msra.mxu0 %v397
    %561 = vmatpush.msra.mxu0 %v393
    %562 = vmatpush.msra.mxu0 %v389
    %563 = vmatpush.msra.mxu0 %v385
    %564 = vmatpush.msra.mxu0 %v381
    %565 = vmatpush.msra.mxu0 %v377
    %566 = vmatpush.msra.mxu0 %v373
    %567 = vmatpush.msra.mxu0 %v369
    %568 = vmatpush.msra.mxu0 %v365
    %569 = vmatpush.msra.mxu0 %v361
    %570 = vmatpush.msra.mxu0 %v357
    %571 = vmatpush.msra.mxu0 %v353
    %572 = vmatmul.f32.gmra.mxu0 %v157
    %v573 = vpop.f32.mrf.mxu0
    %v574 = vadd.f32 %v554, %v573
    %575 = vdwg.mxu0
    %576 = vmatpush.msra.mxu0 %v222
    %577 = vmatpush.msra.mxu0 %v218
    %578 = vmatpush.msra.mxu0 %v214
    %579 = vmatpush.msra.mxu0 %v210
    %580 = vmatpush.msra.mxu0 %v206
    %581 = vmatpush.msra.mxu0 %v202
    %582 = vmatpush.msra.mxu0 %v198
    %583 = vmatpush.msra.mxu0 %v194
    %584 = vmatpush.msra.mxu0 %v190
    %585 = vmatpush.msra.mxu0 %v186
    %586 = vmatpush.msra.mxu0 %v182
    %587 = vmatpush.msra.mxu0 %v178
    %588 = vmatpush.msra.mxu0 %v174
    %589 = vmatpush.msra.mxu0 %v170
    %590 = vmatpush.msra.mxu0 %v166
    %591 = vmatpush.msra.mxu0 %v162
    %592 = vmatmul.f32.gmra.mxu0 %v118
    %v593 = vpop.f32.mrf.mxu0
    %v594 = vadd.f32 0.0, %v593
    %595 = vdwg.mxu0
    %596 = vmatpush.msra.mxu0 %v286
    %597 = vmatpush.msra.mxu0 %v282
    %598 = vmatpush.msra.mxu0 %v278
    %599 = vmatpush.msra.mxu0 %v274
    %600 = vmatpush.msra.mxu0 %v270
    %601 = vmatpush.msra.mxu0 %v266
    %602 = vmatpush.msra.mxu0 %v262
    %603 = vmatpush.msra.mxu0 %v258
    %604 = vmatpush.msra.mxu0 %v254
    %605 = vmatpush.msra.mxu0 %v250
    %606 = vmatpush.msra.mxu0 %v246
    %607 = vmatpush.msra.mxu0 %v242
    %608 = vmatpush.msra.mxu0 %v238
    %609 = vmatpush.msra.mxu0 %v234
    %610 = vmatpush.msra.mxu0 %v230
    %611 = vmatpush.msra.mxu0 %v226
    %612 = vmatmul.f32.gmra.mxu0 %v131
    %v613 = vpop.f32.mrf.mxu0
    %v614 = vadd.f32 %v594, %v613
    %615 = vdwg.mxu0
    %616 = vmatpush.msra.mxu0 %v350
    %617 = vmatpush.msra.mxu0 %v346
    %618 = vmatpush.msra.mxu0 %v342
    %619 = vmatpush.msra.mxu0 %v338
    %620 = vmatpush.msra.mxu0 %v334
    %621 = vmatpush.msra.mxu0 %v330
    %622 = vmatpush.msra.mxu0 %v326
    %623 = vmatpush.msra.mxu0 %v322
    %624 = vmatpush.msra.mxu0 %v318
    %625 = vmatpush.msra.mxu0 %v314
    %626 = vmatpush.msra.mxu0 %v310
    %627 = vmatpush.msra.mxu0 %v306
    %628 = vmatpush.msra.mxu0 %v302
    %629 = vmatpush.msra.mxu0 %v298
    %630 = vmatpush.msra.mxu0 %v294
    %631 = vmatpush.msra.mxu0 %v290
    %632 = vmatmul.f32.gmra.mxu0 %v144
    %v633 = vpop.f32.mrf.mxu0
    %v634 = vadd.f32 %v614, %v633
    %635 = vdwg.mxu0
    %636 = vmatpush.msra.mxu0 %v414
    %637 = vmatpush.msra.mxu0 %v410
    %638 = vmatpush.msra.mxu0 %v406
    %639 = vmatpush.msra.mxu0 %v402
    %640 = vmatpush.msra.mxu0 %v398
    %641 = vmatpush.msra.mxu0 %v394
    %642 = vmatpush.msra.mxu0 %v390
    %643 = vmatpush.msra.mxu0 %v386
    %644 = vmatpush.msra.mxu0 %v382
    %645 = vmatpush.msra.mxu0 %v378
    %646 = vmatpush.msra.mxu0 %v374
    %647 = vmatpush.msra.mxu0 %v370
    %648 = vmatpush.msra.mxu0 %v366
    %649 = vmatpush.msra.mxu0 %v362
    %650 = vmatpush.msra.mxu0 %v358
    %651 = vmatpush.msra.mxu0 %v354
    %652 = vmatmul.f32.gmra.mxu0 %v157
    %v653 = vpop.f32.mrf.mxu0
    %v654 = vadd.f32 %v634, %v653
    %655 = vdwg.mxu0
    %656 = vmatpush.msra.mxu0 %v223
    %657 = vmatpush.msra.mxu0 %v219
    %658 = vmatpush.msra.mxu0 %v215
    %659 = vmatpush.msra.mxu0 %v211
    %660 = vmatpush.msra.mxu0 %v207
    %661 = vmatpush.msra.mxu0 %v203
    %662 = vmatpush.msra.mxu0 %v199
    %663 = vmatpush.msra.mxu0 %v195
    %664 = vmatpush.msra.mxu0 %v191
    %665 = vmatpush.msra.mxu0 %v187
    %666 = vmatpush.msra.mxu0 %v183
    %667 = vmatpush.msra.mxu0 %v179
    %668 = vmatpush.msra.mxu0 %v175
    %669 = vmatpush.msra.mxu0 %v171
    %670 = vmatpush.msra.mxu0 %v167
    %671 = vmatpush.msra.mxu0 %v163
    %672 = vmatmul.f32.gmra.mxu0 %v118
    %v673 = vpop.f32.mrf.mxu0
    %v674 = vadd.f32 0.0, %v673
    %675 = vdwg.mxu0
    %676 = vmatpush.msra.mxu0 %v287
    %677 = vmatpush.msra.mxu0 %v283
    %678 = vmatpush.msra.mxu0 %v279
    %679 = vmatpush.msra.mxu0 %v275
    %680 = vmatpush.msra.mxu0 %v271
    %681 = vmatpush.msra.mxu0 %v267
    %682 = vmatpush.msra.mxu0 %v263
    %683 = vmatpush.msra.mxu0 %v259
    %684 = vmatpush.msra.mxu0 %v255
    %685 = vmatpush.msra.mxu0 %v251
    %686 = vmatpush.msra.mxu0 %v247
    %687 = vmatpush.msra.mxu0 %v243
    %688 = vmatpush.msra.mxu0 %v239
    %689 = vmatpush.msra.mxu0 %v235
    %690 = vmatpush.msra.mxu0 %v231
    %691 = vmatpush.msra.mxu0 %v227
    %692 = vmatmul.f32.gmra.mxu0 %v131
    %v693 = vpop.f32.mrf.mxu0
    %v694 = vadd.f32 %v674, %v693
    %695 = vdwg.mxu0
    %696 = vmatpush.msra.mxu0 %v351
    %697 = vmatpush.msra.mxu0 %v347
    %698 = vmatpush.msra.mxu0 %v343
    %699 = vmatpush.msra.mxu0 %v339
    %700 = vmatpush.msra.mxu0 %v335
    %701 = vmatpush.msra.mxu0 %v331
    %702 = vmatpush.msra.mxu0 %v327
    %703 = vmatpush.msra.mxu0 %v323
    %704 = vmatpush.msra.mxu0 %v319
    %705 = vmatpush.msra.mxu0 %v315
    %706 = vmatpush.msra.mxu0 %v311
    %707 = vmatpush.msra.mxu0 %v307
    %708 = vmatpush.msra.mxu0 %v303
    %709 = vmatpush.msra.mxu0 %v299
    %710 = vmatpush.msra.mxu0 %v295
    %711 = vmatpush.msra.mxu0 %v291
    %712 = vmatmul.f32.gmra.mxu0 %v144
    %v713 = vpop.f32.mrf.mxu0
    %v714 = vadd.f32 %v694, %v713
    %715 = vdwg.mxu0
    %716 = vmatpush.msra.mxu0 %v415
    %717 = vmatpush.msra.mxu0 %v411
    %718 = vmatpush.msra.mxu0 %v407
    %719 = vmatpush.msra.mxu0 %v403
    %720 = vmatpush.msra.mxu0 %v399
    %721 = vmatpush.msra.mxu0 %v395
    %722 = vmatpush.msra.mxu0 %v391
    %723 = vmatpush.msra.mxu0 %v387
    %724 = vmatpush.msra.mxu0 %v383
    %725 = vmatpush.msra.mxu0 %v379
    %726 = vmatpush.msra.mxu0 %v375
    %727 = vmatpush.msra.mxu0 %v371
    %728 = vmatpush.msra.mxu0 %v367
    %729 = vmatpush.msra.mxu0 %v363
    %730 = vmatpush.msra.mxu0 %v359
    %731 = vmatpush.msra.mxu0 %v355
    %732 = vmatmul.f32.gmra.mxu0 %v157
    %v733 = vpop.f32.mrf.mxu0
    %v734 = vadd.f32 %v714, %v733
    %735 = vdwg.mxu0
    %vm736 = vcmask 1041408
    %v737 = vsel %vm736, %v494, 0.0
    %v738 = vrot.slane %v737, 4
    %v739 = vadd.f32 %v737, %v738
    %v740 = vrot.slane %v739, 2
    %v741 = vadd.f32 %v739, %v740
    %v742 = vrot.slane %v741, 1
    %v743 = vadd.f32 %v741, %v742
    %v744 = vsel %vm736, %v574, 0.0
    %v745 = vrot.slane %v744, 4
    %v746 = vadd.f32 %v744, %v745
    %v747 = vrot.slane %v746, 2
    %v748 = vadd.f32 %v746, %v747
    %v749 = vrot.slane %v748, 1
    %v750 = vadd.f32 %v748, %v749
    %v751 = vsel %vm736, %v654, 0.0
    %v752 = vrot.slane %v751, 4
    %v753 = vadd.f32 %v751, %v752
    %v754 = vrot.slane %v753, 2
    %v755 = vadd.f32 %v753, %v754
    %v756 = vrot.slane %v755, 1
    %v757 = vadd.f32 %v755, %v756
    %v758 = vsel %vm736, %v734, 0.0
    %v759 = vrot.slane %v758, 4
    %v760 = vadd.f32 %v758, %v759
    %v761 = vrot.slane %v760, 2
    %v762 = vadd.f32 %v760, %v761
    %v763 = vrot.slane %v762, 1
    %v764 = vadd.f32 %v762, %v763
    %v765 = vmul.f32 %v118, %v118
    %v766 = vmul.f32 %v131, %v131
    %v767 = vmul.f32 %v144, %v144
    %v768 = vmul.f32 %v157, %v157
    %769 = vmatpush.msra.mxu0 %v220
    %770 = vmatpush.msra.mxu0 %v216
    %771 = vmatpush.msra.mxu0 %v212
    %772 = vmatpush.msra.mxu0 %v208
    %773 = vmatpush.msra.mxu0 %v204
    %774 = vmatpush.msra.mxu0 %v200
    %775 = vmatpush.msra.mxu0 %v196
    %776 = vmatpush.msra.mxu0 %v192
    %777 = vmatpush.msra.mxu0 %v188
    %778 = vmatpush.msra.mxu0 %v184
    %779 = vmatpush.msra.mxu0 %v180
    %780 = vmatpush.msra.mxu0 %v176
    %781 = vmatpush.msra.mxu0 %v172
    %782 = vmatpush.msra.mxu0 %v168
    %783 = vmatpush.msra.mxu0 %v164
    %784 = vmatpush.msra.mxu0 %v160
    %785 = vmatmul.f32.gmra.mxu0 %v765
    %v786 = vpop.f32.mrf.mxu0
    %v787 = vadd.f32 0.0, %v786
    %788 = vdwg.mxu0
    %789 = vmatpush.msra.mxu0 %v284
    %790 = vmatpush.msra.mxu0 %v280
    %791 = vmatpush.msra.mxu0 %v276
    %792 = vmatpush.msra.mxu0 %v272
    %793 = vmatpush.msra.mxu0 %v268
    %794 = vmatpush.msra.mxu0 %v264
    %795 = vmatpush.msra.mxu0 %v260
    %796 = vmatpush.msra.mxu0 %v256
    %797 = vmatpush.msra.mxu0 %v252
    %798 = vmatpush.msra.mxu0 %v248
    %799 = vmatpush.msra.mxu0 %v244
    %800 = vmatpush.msra.mxu0 %v240
    %801 = vmatpush.msra.mxu0 %v236
    %802 = vmatpush.msra.mxu0 %v232
    %803 = vmatpush.msra.mxu0 %v228
    %804 = vmatpush.msra.mxu0 %v224
    %805 = vmatmul.f32.gmra.mxu0 %v766
    %v806 = vpop.f32.mrf.mxu0
    %v807 = vadd.f32 %v787, %v806
    %808 = vdwg.mxu0
    %809 = vmatpush.msra.mxu0 %v348
    %810 = vmatpush.msra.mxu0 %v344
    %811 = vmatpush.msra.mxu0 %v340
    %812 = vmatpush.msra.mxu0 %v336
    %813 = vmatpush.msra.mxu0 %v332
    %814 = vmatpush.msra.mxu0 %v328
    %815 = vmatpush.msra.mxu0 %v324
    %816 = vmatpush.msra.mxu0 %v320
    %817 = vmatpush.msra.mxu0 %v316
    %818 = vmatpush.msra.mxu0 %v312
    %819 = vmatpush.msra.mxu0 %v308
    %820 = vmatpush.msra.mxu0 %v304
    %821 = vmatpush.msra.mxu0 %v300
    %822 = vmatpush.msra.mxu0 %v296
    %823 = vmatpush.msra.mxu0 %v292
    %824 = vmatpush.msra.mxu0 %v288
    %825 = vmatmul.f32.gmra.mxu0 %v767
    %v826 = vpop.f32.mrf.mxu0
    %v827 = vadd.f32 %v807, %v826
    %828 = vdwg.mxu0
    %829 = vmatpush.msra.mxu0 %v412
    %830 = vmatpush.msra.mxu0 %v408
    %831 = vmatpush.msra.mxu0 %v404
    %832 = vmatpush.msra.mxu0 %v400
    %833 = vmatpush.msra.mxu0 %v396
    %834 = vmatpush.msra.mxu0 %v392
    %835 = vmatpush.msra.mxu0 %v388
    %836 = vmatpush.msra.mxu0 %v384
    %837 = vmatpush.msra.mxu0 %v380
    %838 = vmatpush.msra.mxu0 %v376
    %839 = vmatpush.msra.mxu0 %v372
    %840 = vmatpush.msra.mxu0 %v368
    %841 = vmatpush.msra.mxu0 %v364
    %842 = vmatpush.msra.mxu0 %v360
    %843 = vmatpush.msra.mxu0 %v356
    %844 = vmatpush.msra.mxu0 %v352
    %845 = vmatmul.f32.gmra.mxu0 %v768
    %v846 = vpop.f32.mrf.mxu0
    %v847 = vadd.f32 %v827, %v846
    %848 = vdwg.mxu0
    %849 = vmatpush.msra.mxu0 %v221
    %850 = vmatpush.msra.mxu0 %v217
    %851 = vmatpush.msra.mxu0 %v213
    %852 = vmatpush.msra.mxu0 %v209
    %853 = vmatpush.msra.mxu0 %v205
    %854 = vmatpush.msra.mxu0 %v201
    %855 = vmatpush.msra.mxu0 %v197
    %856 = vmatpush.msra.mxu0 %v193
    %857 = vmatpush.msra.mxu0 %v189
    %858 = vmatpush.msra.mxu0 %v185
    %859 = vmatpush.msra.mxu0 %v181
    %860 = vmatpush.msra.mxu0 %v177
    %861 = vmatpush.msra.mxu0 %v173
    %862 = vmatpush.msra.mxu0 %v169
    %863 = vmatpush.msra.mxu0 %v165
    %864 = vmatpush.msra.mxu0 %v161
    %865 = vmatmul.f32.gmra.mxu0 %v765
    %v866 = vpop.f32.mrf.mxu0
    %v867 = vadd.f32 0.0, %v866
    %868 = vdwg.mxu0
    %869 = vmatpush.msra.mxu0 %v285
    %870 = vmatpush.msra.mxu0 %v281
    %871 = vmatpush.msra.mxu0 %v277
    %872 = vmatpush.msra.mxu0 %v273
    %873 = vmatpush.msra.mxu0 %v269
    %874 = vmatpush.msra.mxu0 %v265
    %875 = vmatpush.msra.mxu0 %v261
    %876 = vmatpush.msra.mxu0 %v257
    %877 = vmatpush.msra.mxu0 %v253
    %878 = vmatpush.msra.mxu0 %v249
    %879 = vmatpush.msra.mxu0 %v245
    %880 = vmatpush.msra.mxu0 %v241
    %881 = vmatpush.msra.mxu0 %v237
    %882 = vmatpush.msra.mxu0 %v233
    %883 = vmatpush.msra.mxu0 %v229
    %884 = vmatpush.msra.mxu0 %v225
    %885 = vmatmul.f32.gmra.mxu0 %v766
    %v886 = vpop.f32.mrf.mxu0
    %v887 = vadd.f32 %v867, %v886
    %888 = vdwg.mxu0
    %889 = vmatpush.msra.mxu0 %v349
    %890 = vmatpush.msra.mxu0 %v345
    %891 = vmatpush.msra.mxu0 %v341
    %892 = vmatpush.msra.mxu0 %v337
    %893 = vmatpush.msra.mxu0 %v333
    %894 = vmatpush.msra.mxu0 %v329
    %895 = vmatpush.msra.mxu0 %v325
    %896 = vmatpush.msra.mxu0 %v321
    %897 = vmatpush.msra.mxu0 %v317
    %898 = vmatpush.msra.mxu0 %v313
    %899 = vmatpush.msra.mxu0 %v309
    %900 = vmatpush.msra.mxu0 %v305
    %901 = vmatpush.msra.mxu0 %v301
    %902 = vmatpush.msra.mxu0 %v297
    %903 = vmatpush.msra.mxu0 %v293
    %904 = vmatpush.msra.mxu0 %v289
    %905 = vmatmul.f32.gmra.mxu0 %v767
    %v906 = vpop.f32.mrf.mxu0
    %v907 = vadd.f32 %v887, %v906
    %908 = vdwg.mxu0
    %909 = vmatpush.msra.mxu0 %v413
    %910 = vmatpush.msra.mxu0 %v409
    %911 = vmatpush.msra.mxu0 %v405
    %912 = vmatpush.msra.mxu0 %v401
    %913 = vmatpush.msra.mxu0 %v397
    %914 = vmatpush.msra.mxu0 %v393
    %915 = vmatpush.msra.mxu0 %v389
    %916 = vmatpush.msra.mxu0 %v385
    %917 = vmatpush.msra.mxu0 %v381
    %918 = vmatpush.msra.mxu0 %v377
    %919 = vmatpush.msra.mxu0 %v373
    %920 = vmatpush.msra.mxu0 %v369
    %921 = vmatpush.msra.mxu0 %v365
    %922 = vmatpush.msra.mxu0 %v361
    %923 = vmatpush.msra.mxu0 %v357
    %924 = vmatpush.msra.mxu0 %v353
    %925 = vmatmul.f32.gmra.mxu0 %v768
    %v926 = vpop.f32.mrf.mxu0
    %v927 = vadd.f32 %v907, %v926
    %928 = vdwg.mxu0
    %929 = vmatpush.msra.mxu0 %v222
    %930 = vmatpush.msra.mxu0 %v218
    %931 = vmatpush.msra.mxu0 %v214
    %932 = vmatpush.msra.mxu0 %v210
    %933 = vmatpush.msra.mxu0 %v206
    %934 = vmatpush.msra.mxu0 %v202
    %935 = vmatpush.msra.mxu0 %v198
    %936 = vmatpush.msra.mxu0 %v194
    %937 = vmatpush.msra.mxu0 %v190
    %938 = vmatpush.msra.mxu0 %v186
    %939 = vmatpush.msra.mxu0 %v182
    %940 = vmatpush.msra.mxu0 %v178
    %941 = vmatpush.msra.mxu0 %v174
    %942 = vmatpush.msra.mxu0 %v170
    %943 = vmatpush.msra.mxu0 %v166
    %944 = vmatpush.msra.mxu0 %v162
    %945 = vmatmul.f32.gmra.mxu0 %v765
    %v946 = vpop.f32.mrf.mxu0
    %v947 = vadd.f32 0.0, %v946
    %948 = vdwg.mxu0
    %949 = vmatpush.msra.mxu0 %v286
    %950 = vmatpush.msra.mxu0 %v282
    %951 = vmatpush.msra.mxu0 %v278
    %952 = vmatpush.msra.mxu0 %v274
    %953 = vmatpush.msra.mxu0 %v270
    %954 = vmatpush.msra.mxu0 %v266
    %955 = vmatpush.msra.mxu0 %v262
    %956 = vmatpush.msra.mxu0 %v258
    %957 = vmatpush.msra.mxu0 %v254
    %958 = vmatpush.msra.mxu0 %v250
    %959 = vmatpush.msra.mxu0 %v246
    %960 = vmatpush.msra.mxu0 %v242
    %961 = vmatpush.msra.mxu0 %v238
    %962 = vmatpush.msra.mxu0 %v234
    %963 = vmatpush.msra.mxu0 %v230
    %964 = vmatpush.msra.mxu0 %v226
    %965 = vmatmul.f32.gmra.mxu0 %v766
    %v966 = vpop.f32.mrf.mxu0
    %v967 = vadd.f32 %v947, %v966
    %968 = vdwg.mxu0
    %969 = vmatpush.msra.mxu0 %v350
    %970 = vmatpush.msra.mxu0 %v346
    %971 = vmatpush.msra.mxu0 %v342
    %972 = vmatpush.msra.mxu0 %v338
    %973 = vmatpush.msra.mxu0 %v334
    %974 = vmatpush.msra.mxu0 %v330
    %975 = vmatpush.msra.mxu0 %v326
    %976 = vmatpush.msra.mxu0 %v322
    %977 = vmatpush.msra.mxu0 %v318
    %978 = vmatpush.msra.mxu0 %v314
    %979 = vmatpush.msra.mxu0 %v310
    %980 = vmatpush.msra.mxu0 %v306
    %981 = vmatpush.msra.mxu0 %v302
    %982 = vmatpush.msra.mxu0 %v298
    %983 = vmatpush.msra.mxu0 %v294
    %984 = vmatpush.msra.mxu0 %v290
    %985 = vmatmul.f32.gmra.mxu0 %v767
    %v986 = vpop.f32.mrf.mxu0
    %v987 = vadd.f32 %v967, %v986
    %988 = vdwg.mxu0
    %989 = vmatpush.msra.mxu0 %v414
    %990 = vmatpush.msra.mxu0 %v410
    %991 = vmatpush.msra.mxu0 %v406
    %992 = vmatpush.msra.mxu0 %v402
    %993 = vmatpush.msra.mxu0 %v398
    %994 = vmatpush.msra.mxu0 %v394
    %995 = vmatpush.msra.mxu0 %v390
    %996 = vmatpush.msra.mxu0 %v386
    %997 = vmatpush.msra.mxu0 %v382
    %998 = vmatpush.msra.mxu0 %v378
    %999 = vmatpush.msra.mxu0 %v374
    %1000 = vmatpush.msra.mxu0 %v370
    %1001 = vmatpush.msra.mxu0 %v366
    %1002 = vmatpush.msra.mxu0 %v362
    %1003 = vmatpush.msra.mxu0 %v358
    %1004 = vmatpush.msra.mxu0 %v354
    %1005 = vmatmul.f32.gmra.mxu0 %v768
    %v1006 = vpop.f32.mrf.mxu0
    %v1007 = vadd.f32 %v987, %v1006
    %1008 = vdwg.mxu0
    %1009 = vmatpush.msra.mxu0 %v223
    %1010 = vmatpush.msra.mxu0 %v219
    %1011 = vmatpush.msra.mxu0 %v215
    %1012 = vmatpush.msra.mxu0 %v211
    %1013 = vmatpush.msra.mxu0 %v207
    %1014 = vmatpush.msra.mxu0 %v203
    %1015 = vmatpush.msra.mxu0 %v199
    %1016 = vmatpush.msra.mxu0 %v195
    %1017 = vmatpush.msra.mxu0 %v191
    %1018 = vmatpush.msra.mxu0 %v187
    %1019 = vmatpush.msra.mxu0 %v183
    %1020 = vmatpush.msra.mxu0 %v179
    %1021 = vmatpush.msra.mxu0 %v175
    %1022 = vmatpush.msra.mxu0 %v171
    %1023 = vmatpush.msra.mxu0 %v167
    %1024 = vmatpush.msra.mxu0 %v163
    %1025 = vmatmul.f32.gmra.mxu0 %v765
    %v1026 = vpop.f32.mrf.mxu0
    %v1027 = vadd.f32 0.0, %v1026
    %1028 = vdwg.mxu0
    %1029 = vmatpush.msra.mxu0 %v287
    %1030 = vmatpush.msra.mxu0 %v283
    %1031 = vmatpush.msra.mxu0 %v279
    %1032 = vmatpush.msra.mxu0 %v275
    %1033 = vmatpush.msra.mxu0 %v271
    %1034 = vmatpush.msra.mxu0 %v267
    %1035 = vmatpush.msra.mxu0 %v263
    %1036 = vmatpush.msra.mxu0 %v259
    %1037 = vmatpush.msra.mxu0 %v255
    %1038 = vmatpush.msra.mxu0 %v251
    %1039 = vmatpush.msra.mxu0 %v247
    %1040 = vmatpush.msra.mxu0 %v243
    %1041 = vmatpush.msra.mxu0 %v239
    %1042 = vmatpush.msra.mxu0 %v235
    %1043 = vmatpush.msra.mxu0 %v231
    %1044 = vmatpush.msra.mxu0 %v227
    %1045 = vmatmul.f32.gmra.mxu0 %v766
    %v1046 = vpop.f32.mrf.mxu0
    %v1047 = vadd.f32 %v1027, %v1046
    %1048 = vdwg.mxu0
    %1049 = vmatpush.msra.mxu0 %v351
    %1050 = vmatpush.msra.mxu0 %v347
    %1051 = vmatpush.msra.mxu0 %v343
    %1052 = vmatpush.msra.mxu0 %v339
    %1053 = vmatpush.msra.mxu0 %v335
    %1054 = vmatpush.msra.mxu0 %v331
    %1055 = vmatpush.msra.mxu0 %v327
    %1056 = vmatpush.msra.mxu0 %v323
    %1057 = vmatpush.msra.mxu0 %v319
    %1058 = vmatpush.msra.mxu0 %v315
    %1059 = vmatpush.msra.mxu0 %v311
    %1060 = vmatpush.msra.mxu0 %v307
    %1061 = vmatpush.msra.mxu0 %v303
    %1062 = vmatpush.msra.mxu0 %v299
    %1063 = vmatpush.msra.mxu0 %v295
    %1064 = vmatpush.msra.mxu0 %v291
    %1065 = vmatmul.f32.gmra.mxu0 %v767
    %v1066 = vpop.f32.mrf.mxu0
    %v1067 = vadd.f32 %v1047, %v1066
    %1068 = vdwg.mxu0
    %1069 = vmatpush.msra.mxu0 %v415
    %1070 = vmatpush.msra.mxu0 %v411
    %1071 = vmatpush.msra.mxu0 %v407
    %1072 = vmatpush.msra.mxu0 %v403
    %1073 = vmatpush.msra.mxu0 %v399
    %1074 = vmatpush.msra.mxu0 %v395
    %1075 = vmatpush.msra.mxu0 %v391
    %1076 = vmatpush.msra.mxu0 %v387
    %1077 = vmatpush.msra.mxu0 %v383
    %1078 = vmatpush.msra.mxu0 %v379
    %1079 = vmatpush.msra.mxu0 %v375
    %1080 = vmatpush.msra.mxu0 %v371
    %1081 = vmatpush.msra.mxu0 %v367
    %1082 = vmatpush.msra.mxu0 %v363
    %1083 = vmatpush.msra.mxu0 %v359
    %1084 = vmatpush.msra.mxu0 %v355
    %1085 = vmatmul.f32.gmra.mxu0 %v768
    %v1086 = vpop.f32.mrf.mxu0
    %v1087 = vadd.f32 %v1067, %v1086
    %1088 = vdwg.mxu0
    %v1089 = vsel %vm736, %v847, 0.0
    %v1090 = vrot.slane %v1089, 4
    %v1091 = vadd.f32 %v1089, %v1090
    %v1092 = vrot.slane %v1091, 2
    %v1093 = vadd.f32 %v1091, %v1092
    %v1094 = vrot.slane %v1093, 1
    %v1095 = vadd.f32 %v1093, %v1094
    %v1096 = vsel %vm736, %v927, 0.0
    %v1097 = vrot.slane %v1096, 4
    %v1098 = vadd.f32 %v1096, %v1097
    %v1099 = vrot.slane %v1098, 2
    %v1100 = vadd.f32 %v1098, %v1099
    %v1101 = vrot.slane %v1100, 1
    %v1102 = vadd.f32 %v1100, %v1101
    %v1103 = vsel %vm736, %v1007, 0.0
    %v1104 = vrot.slane %v1103, 4
    %v1105 = vadd.f32 %v1103, %v1104
    %v1106 = vrot.slane %v1105, 2
    %v1107 = vadd.f32 %v1105, %v1106
    %v1108 = vrot.slane %v1107, 1
    %v1109 = vadd.f32 %v1107, %v1108
    %v1110 = vsel %vm736, %v1087, 0.0
    %v1111 = vrot.slane %v1110, 4
    %v1112 = vadd.f32 %v1110, %v1111
    %v1113 = vrot.slane %v1112, 2
    %v1114 = vadd.f32 %v1112, %v1113
    %v1115 = vrot.slane %v1114, 1
    %v1116 = vadd.f32 %v1114, %v1115
    %v1117 = vmul.f32 %v743, 0.03125
    %v1118 = vmul.f32 %v750, 0.03125
    %v1119 = vmul.f32 %v757, 0.03125
    %v1120 = vmul.f32 %v764, 0.03125
    %v1121 = vmul.f32 %v1095, 0.03125
    %v1122 = vmul.f32 %v1102, 0.03125
    %v1123 = vmul.f32 %v1109, 0.03125
    %v1124 = vmul.f32 %v1116, 0.03125
    %v1125 = vmul.f32 %v1117, %v1117
    %v1126 = vmul.f32 %v1118, %v1118
    %v1127 = vmul.f32 %v1119, %v1119
    %v1128 = vmul.f32 %v1120, %v1120
    %v1129 = vsub.f32 %v1121, %v1125
    %v1130 = vsub.f32 %v1122, %v1126
    %v1131 = vsub.f32 %v1123, %v1127
    %v1132 = vsub.f32 %v1124, %v1128
    %v1133 = vmax.f32 %v1129, 0.0
    %v1134 = vmax.f32 %v1130, 0.0
    %v1135 = vmax.f32 %v1131, 0.0
    %v1136 = vmax.f32 %v1132, 0.0
    %v1137 = vld [vmem:[#allocation6] sm:$0xf]
    %v1138 = vadd.f32 %v1133, 1e-05
    %v1139 = vadd.f32 %v1134, 1e-05
    %v1140 = vadd.f32 %v1135, 1e-05
    %v1141 = vadd.f32 %v1136, 1e-05
    %v1142 = vrsqrt.pop %v1138
    %v1143 = vmul.f32 %v1142, %v1138
    %v1144 = vmul.f32 %v1143, %v1142
    %v1145 = vmul.f32 0.5, %v1144
    %v1146 = vsub.f32 1.5, %v1145
    %v1147 = vmul.f32 %v1142, %v1146
    %vm1148 = vweird.f32 %v1138
    %vm1149 = vweird.f32 %v1142
    %vm1150 = vmor %vm1148, %vm1149
    %v1151 = vsel %vm1150, %v1142, %v1147
    %v1152 = vrsqrt.pop %v1139
    %v1153 = vmul.f32 %v1152, %v1139
    %v1154 = vmul.f32 %v1153, %v1152
    %v1155 = vmul.f32 0.5, %v1154
    %v1156 = vsub.f32 1.5, %v1155
    %v1157 = vmul.f32 %v1152, %v1156
    %vm1158 = vweird.f32 %v1139
    %vm1159 = vweird.f32 %v1152
    %vm1160 = vmor %vm1158, %vm1159
    %v1161 = vsel %vm1160, %v1152, %v1157
    %v1162 = vrsqrt.pop %v1140
    %v1163 = vmul.f32 %v1162, %v1140
    %v1164 = vmul.f32 %v1163, %v1162
    %v1165 = vmul.f32 0.5, %v1164
    %v1166 = vsub.f32 1.5, %v1165
    %v1167 = vmul.f32 %v1162, %v1166
    %vm1168 = vweird.f32 %v1140
    %vm1169 = vweird.f32 %v1162
    %vm1170 = vmor %vm1168, %vm1169
    %v1171 = vsel %vm1170, %v1162, %v1167
    %v1172 = vrsqrt.pop %v1141
    %v1173 = vmul.f32 %v1172, %v1141
    %v1174 = vmul.f32 %v1173, %v1172
    %v1175 = vmul.f32 0.5, %v1174
    %v1176 = vsub.f32 1.5, %v1175
    %v1177 = vmul.f32 %v1172, %v1176
    %vm1178 = vweird.f32 %v1141
    %vm1179 = vweird.f32 %v1172
    %vm1180 = vmor %vm1178, %vm1179
    %v1181 = vsel %vm1180, %v1172, %v1177
    %v1186 = vrot.slane %v1161, 7
    %v1187 = vrot.slane %v1171, 6
    %v1188 = vrot.slane %v1181, 5
    %vm1189 = vcmask 1040384
    %v1190 = vsel %vm1189, %v1151, %v1186
    %vm1191 = vcmask 1042434
    %v1192 = vsel %vm1191, %v1187, %v1188
    %v1193 = vsel %vm736, %v1190, %v1192
    %v1195 = vmul.f32 %v1137, %v1193
    %v1196 = vld [vmem:[#allocation7] sm:$0xf]
    %v1198 = vperm.slane %v1195, 0
    %v1199 = vperm.slane %v1195, 1
    %v1200 = vperm.slane %v1195, 2
    %v1201 = vperm.slane %v1195, 3
    %v1206 = vmul.f32 %v1117, %v1198
    %v1207 = vmul.f32 %v1118, %v1199
    %v1208 = vmul.f32 %v1119, %v1200
    %v1209 = vmul.f32 %v1120, %v1201
    %v1214 = vrot.slane %v1207, 7
    %v1215 = vrot.slane %v1208, 6
    %v1216 = vrot.slane %v1209, 5
    %v1217 = vsel %vm1189, %v1206, %v1214
    %v1218 = vsel %vm1191, %v1215, %v1216
    %v1219 = vsel %vm736, %v1217, %v1218
    %v1221 = vsub.f32 %v1196, %v1219
    %v1222 = vmul.f32 %v118, %v1198
    %v1223 = vmul.f32 %v131, %v1199
    %v1224 = vmul.f32 %v144, %v1200
    %v1225 = vmul.f32 %v157, %v1201
    %v1227 = vperm.slane %v1221, 0
    %v1228 = vperm.slane %v1221, 1
    %v1229 = vperm.slane %v1221, 2
    %v1230 = vperm.slane %v1221, 3
    %v1235 = vadd.f32 %v1222, %v1227
    %v1236 = vadd.f32 %v1223, %v1228
    %v1237 = vadd.f32 %v1224, %v1229
    %v1238 = vadd.f32 %v1225, %v1230
    %v1239 = vmax.f32 %v1235, 0.0
    %v1240 = vmax.f32 %v1236, 0.0
    %v1241 = vmax.f32 %v1237, 0.0
    %v1242 = vmax.f32 %v1238, 0.0
    %v1243 = vpack.c.bf16 %v1240, %v1239
    %v1244 = vpack.c.bf16 %v1242, %v1241
    %v1247 = vrot.slane %v1243, 3
    %v1248 = vrot.slane %v1244, 6
    %v1249 = vrot.slane %v1244, 1
    %v1252 = vsel %vm1189, %v1243, %v1247
    %v1255 = vsel %vm1191, %v1248, %v1249
    %v1256 = vsel %vm736, %v1252, %v1255
    %1258 = vst [vmem:[%s5] sm:$0xf] %v1256
    // Predicated region
    $region38: #{generator_forward.5} parent=1 // pred_check
      _
    $region39: #{generator_forward.5} parent=1 // pred_check_branch
      %1260 = sbr.rel (0) target = $region41
    $region40: #{generator_forward.5} parent=1 // pred_region
      _
    $region41: #{generator_forward.5} parent=1 // pred_fallthru
      _
    // Predicated region
    $region42: #{generator_forward.5} parent=1 // pred_check
      _
    $region43: #{generator_forward.5} parent=1 // pred_check_branch
      %1262 = sbr.rel (0) target = $region45
    $region44: #{generator_forward.5} parent=1 // pred_region
      _
    $region45: #{generator_forward.5} parent=1 // pred_fallthru
      _
    %1263 = vsyncpa [#allocation3], 1
    %1264 = vsyncpa [#allocation5], 1
    %1265 = vsyncpa [#allocation8], 1

// kernel: generator_forward.6
$region0: #{generator_forward.6}
  #allocation0 [shape = 'u32[]', space=smem, size = 0x4, offset = 0x4, fixed_abs, tag = 'smem constant byte address 0x4 - core index']
  #allocation1 [shape = 'u32[72,128]{1,0:T(1,128)}', space=vmem, size = 0x9000, scoped, tag = 'internal scratch']
  %s0 = inlined_call_operand.vmem [shape: bf16[128,50], index: 0, kind: input, shape index: {}]
  %s1 = inlined_call_operand.hbm [shape: bf16[64,128], index: 1, kind: input, shape index: {}]
  %s2 = inlined_call_operand.hbm [shape: f32[64,50], index: 2, kind: input, shape index: {}]
  %s3 = inlined_call_operand.hbm [shape: f32[64,64], index: 3, kind: input, shape index: {}]
  %s4 = inlined_call_operand.vmem [shape: f32[64,1], index: 4, kind: input, shape index: {}]
  %s5 = inlined_call_operand.vmem [shape: f32[64,1], index: 5, kind: input, shape index: {}]
  %s6 = inlined_call_operand.vmem [shape: bf16[64,50], index: 6, kind: output, shape index: {}]
  %s7 = sld [smem:[#allocation0]]
  $region46: #{generator_forward.6} parent=0
    _
  %s9 = ssub.s32 1, %s7
  %s10 = scalar_select 0, %s9, %s7
  $region1: #{generator_forward.6} parent=0
    #allocation2 [shape = 'u8[16384]{0}', space=vmem, size = 0x4000, scoped, tag = 'input window, operand 1, single buffered']
    #allocation3 [shape = 's32[1]{0}', space=sflag, size = 0x4, scoped, tag = 'scoped memory for generator_forward.6']
    #allocation4 [shape = 'u8[32768]{0}', space=vmem, size = 0x8000, scoped, tag = 'input window, operand 2, single buffered']
    #allocation5 [shape = 's32[1]{0}', space=sflag, size = 0x4, scoped, tag = 'scoped memory for generator_forward.6']
    #allocation6 [shape = 'u8[32768]{0}', space=vmem, size = 0x8000, scoped, tag = 'input window, operand 3, single buffered']
    %11 = vsyncpa [#allocation3], 0
    %12 = vsyncpa [#allocation5], 0
    // Predicated region
    $region2: #{generator_forward.6} parent=1 // pred_check
      _
    $region3: #{generator_forward.6} parent=1 // pred_check_branch
      %14 = sbr.rel (0) target = $region5
    $region4: #{generator_forward.6} parent=1 // pred_region
      _
    $region5: #{generator_forward.6} parent=1 // pred_fallthru
      _
    // Predicated region
    $region6: #{generator_forward.6} parent=1 // pred_check
      _
    $region7: #{generator_forward.6} parent=1 // pred_check_branch
      %16 = sbr.rel (0) target = $region9
    $region8: #{generator_forward.6} parent=1 // pred_region
      %18 = vsyncadd [#allocation3], 0
      %s19 = sshll.u32 %s1, 4
      %s20 = int_to_ptr.hbm [resolvable:$true] %s19
      %s21 = sshll.u32 [#allocation2], 4
      %s22 = int_to_ptr.vmem [resolvable:$true] %s21
      %27 = dma.hbm_to_vmem [thread:$0]  %s20, 512, %s22, [#allocation3], 64, 64, 4
    $region9: #{generator_forward.6} parent=1 // pred_fallthru
      _
    // Predicated region
    $region10: #{generator_forward.6} parent=1 // pred_check
      _
    $region11: #{generator_forward.6} parent=1 // pred_check_branch
      %29 = sbr.rel (0) target = $region13
    $region12: #{generator_forward.6} parent=1 // pred_region
      %31 = vsyncadd [#allocation5], 0
      %s32 = sshll.u32 %s2, 4
      %s33 = int_to_ptr.hbm [resolvable:$true] %s32
      %s34 = sshll.u32 [#allocation4], 4
      %s35 = int_to_ptr.vmem [resolvable:$true] %s34
      %40 = dma.hbm_to_vmem [thread:$0]  %s33, 1024, %s35, [#allocation5], 128, 128, 8
    $region13: #{generator_forward.6} parent=1 // pred_fallthru
      _
    // Predicated region
    $region14: #{generator_forward.6} parent=1 // pred_check
      _
    $region15: #{generator_forward.6} parent=1 // pred_check_branch
      %42 = sbr.rel (0) target = $region17
    $region16: #{generator_forward.6} parent=1 // pred_region
      %44 = vsyncadd [#allocation5], 0
      %s45 = sshll.u32 %s3, 4
      %s46 = int_to_ptr.hbm [resolvable:$true] %s45
      %s47 = sshll.u32 [#allocation6], 4
      %s48 = int_to_ptr.vmem [resolvable:$true] %s47
      %53 = dma.hbm_to_vmem [thread:$0]  %s46, 1024, %s48, [#allocation5], 128, 128, 8
    $region17: #{generator_forward.6} parent=1 // pred_fallthru
      _
    // Predicated region
    $region18: #{generator_forward.6} parent=1 // pred_check
      _
    $region19: #{generator_forward.6} parent=1 // pred_check_branch
      %55 = sbr.rel (0) target = $region21
    $region20: #{generator_forward.6} parent=1 // pred_region
      _
    $region21: #{generator_forward.6} parent=1 // pred_fallthru
      _
    // Predicated region
    $region22: #{generator_forward.6} parent=1 // pred_check
      _
    $region23: #{generator_forward.6} parent=1 // pred_check_branch
      %57 = sbr.rel (0) target = $region25
    $region24: #{generator_forward.6} parent=1 // pred_region
      _
    $region25: #{generator_forward.6} parent=1 // pred_fallthru
      _
    // Predicated region
    $region26: #{generator_forward.6} parent=1 // pred_check
      _
    $region27: #{generator_forward.6} parent=1 // pred_check_branch
      %59 = sbr.rel (0) target = $region29
    $region28: #{generator_forward.6} parent=1 // pred_region
      %61 = dma.done [#allocation3], 512
    $region29: #{generator_forward.6} parent=1 // pred_fallthru
      _
    // Predicated region
    $region30: #{generator_forward.6} parent=1 // pred_check
      _
    $region31: #{generator_forward.6} parent=1 // pred_check_branch
      %63 = sbr.rel (0) target = $region33
    $region32: #{generator_forward.6} parent=1 // pred_region
      %65 = dma.done [#allocation5], 1024
    $region33: #{generator_forward.6} parent=1 // pred_fallthru
      _
    // Predicated region
    $region34: #{generator_forward.6} parent=1 // pred_check
      _
    $region35: #{generator_forward.6} parent=1 // pred_check_branch
      %67 = sbr.rel (0) target = $region37
    $region36: #{generator_forward.6} parent=1 // pred_region
      %69 = dma.done [#allocation5], 1024
    $region37: #{generator_forward.6} parent=1 // pred_fallthru
      _
    %v70 = vld [vmem:[#allocation2] sm:$0xf]
    %v71 = vld [vmem:[#allocation2 + $0x4] sm:$0xf]
    %v72 = vld [vmem:[#allocation2 + $0x8] sm:$0xf]
    %v73 = vld [vmem:[#allocation2 + $0xc] sm:$0xf]
    %v74 = vld [vmem:[#allocation2 + $0x10] sm:$0xf]
    %v75 = vld [vmem:[#allocation2 + $0x14] sm:$0xf]
    %v76 = vld [vmem:[#allocation2 + $0x18] sm:$0xf]
    %v77 = vld [vmem:[#allocation2 + $0x1c] sm:$0xf]
    %v78 = vld [vmem:[%s0] sm:$0xf]
    %v79 = vld [vmem:[%s0 + $0x4] sm:$0xf]
    %v80 = vld [vmem:[%s0 + $0x8] sm:$0xf]
    %v81 = vld [vmem:[%s0 + $0xc] sm:$0xf]
    %v82 = vld [vmem:[%s0 + $0x10] sm:$0xf]
    %v83 = vld [vmem:[%s0 + $0x14] sm:$0xf]
    %v84 = vld [vmem:[%s0 + $0x18] sm:$0xf]
    %v85 = vld [vmem:[%s0 + $0x1c] sm:$0xf]
    %v86 = vld [vmem:[%s0 + $0x20] sm:$0xf]
    %v87 = vld [vmem:[%s0 + $0x24] sm:$0xf]
    %v88 = vld [vmem:[%s0 + $0x28] sm:$0xf]
    %v89 = vld [vmem:[%s0 + $0x2c] sm:$0xf]
    %v90 = vld [vmem:[%s0 + $0x30] sm:$0xf]
    %v91 = vld [vmem:[%s0 + $0x34] sm:$0xf]
    %v92 = vld [vmem:[%s0 + $0x38] sm:$0xf]
    %v93 = vld [vmem:[%s0 + $0x3c] sm:$0xf]
    %v102 = vunpack.c.l.b16 %v70
    %v103 = vunpack.c.l.b16 %v71
    %v104 = vunpack.c.l.b16 %v72
    %v105 = vunpack.c.l.b16 %v73
    %v106 = vunpack.c.l.b16 %v74
    %v107 = vunpack.c.l.b16 %v75
    %v108 = vunpack.c.l.b16 %v76
    %v109 = vunpack.c.l.b16 %v77
    %v110 = vpack.c.b16 %v103, %v102
    %v111 = vpack.c.b16 %v105, %v104
    %v112 = vpack.c.b16 %v107, %v106
    %v113 = vpack.c.b16 %v109, %v108
    %v134 = vunpack.c.l.b16 %v78
    %v135 = vunpack.c.l.b16 %v79
    %v136 = vunpack.c.l.b16 %v80
    %v137 = vunpack.c.l.b16 %v81
    %v138 = vunpack.c.l.b16 %v82
    %v139 = vunpack.c.l.b16 %v83
    %v140 = vunpack.c.l.b16 %v84
    %v141 = vunpack.c.l.b16 %v85
    %v142 = vunpack.c.l.b16 %v86
    %v143 = vunpack.c.l.b16 %v87
    %v144 = vunpack.c.l.b16 %v88
    %v145 = vunpack.c.l.b16 %v89
    %v146 = vunpack.c.l.b16 %v90
    %v147 = vunpack.c.l.b16 %v91
    %v148 = vunpack.c.l.b16 %v92
    %v149 = vunpack.c.l.b16 %v93
    %v150 = vpack.c.b16 %v135, %v134
    %v151 = vpack.c.b16 %v137, %v136
    %v152 = vpack.c.b16 %v139, %v138
    %v153 = vpack.c.b16 %v141, %v140
    %v154 = vpack.c.b16 %v143, %v142
    %v155 = vpack.c.b16 %v145, %v144
    %v156 = vpack.c.b16 %v147, %v146
    %v157 = vpack.c.b16 %v149, %v148
    %166 = vmatpush.bf16.msra.mxu0 %v157
    %167 = vmatpush.bf16.msra.mxu0 %v156
    %168 = vmatpush.bf16.msra.mxu0 %v155
    %169 = vmatpush.bf16.msra.mxu0 %v154
    %170 = vmatpush.bf16.msra.mxu0 %v153
    %171 = vmatpush.bf16.msra.mxu0 %v152
    %172 = vmatpush.bf16.msra.mxu0 %v151
    %173 = vmatpush.bf16.msra.mxu0 %v150
    %174 = vmatmul.bf16.gmra.mxu0 %v110
    %v175 = vpop.f32.mrf.mxu0
    %v176 = vadd.f32 0.0, %v175
    %v177 = vpop.f32.mrf.mxu0
    %v178 = vadd.f32 0.0, %v177
    %179 = vmatmul.bf16.gmra.mxu0 %v111
    %v180 = vpop.f32.mrf.mxu0
    %v181 = vadd.f32 0.0, %v180
    %v182 = vpop.f32.mrf.mxu0
    %v183 = vadd.f32 0.0, %v182
    %184 = vmatmul.bf16.gmra.mxu0 %v112
    %v185 = vpop.f32.mrf.mxu0
    %v186 = vadd.f32 0.0, %v185
    %v187 = vpop.f32.mrf.mxu0
    %v188 = vadd.f32 0.0, %v187
    %189 = vmatmul.bf16.gmra.mxu0 %v113
    %v190 = vpop.f32.mrf.mxu0
    %v191 = vadd.f32 0.0, %v190
    %v192 = vpop.f32.mrf.mxu0
    %v193 = vadd.f32 0.0, %v192
    %194 = vdwg.mxu0
    %v195 = vld [vmem:[#allocation4] sm:$0xff]
    %v196 = vld [vmem:[#allocation4 + $0x8] sm:$0xff]
    %v197 = vld [vmem:[#allocation4 + $0x10] sm:$0xff]
    %v198 = vld [vmem:[#allocation4 + $0x18] sm:$0xff]
    %v199 = vld [vmem:[#allocation4 + $0x20] sm:$0xff]
    %v200 = vld [vmem:[#allocation4 + $0x28] sm:$0xff]
    %v201 = vld [vmem:[#allocation4 + $0x30] sm:$0xff]
    %v202 = vld [vmem:[#allocation4 + $0x38] sm:$0xff]
    %v203 = vmul.f32 %v176, %v195
    %v204 = vmul.f32 %v178, %v196
    %v205 = vmul.f32 %v181, %v197
    %v206 = vmul.f32 %v183, %v198
    %v207 = vmul.f32 %v186, %v199
    %v208 = vmul.f32 %v188, %v200
    %v209 = vmul.f32 %v191, %v201
    %v210 = vmul.f32 %v193, %v202
    %v211 = vld [vmem:[#allocation6] sm:$0xff]
    %v212 = vld [vmem:[#allocation6 + $0x8] sm:$0xff]
    %v213 = vld [vmem:[#allocation6 + $0x10] sm:$0xff]
    %v214 = vld [vmem:[#allocation6 + $0x18] sm:$0xff]
    %v215 = vld [vmem:[#allocation6 + $0x20] sm:$0xff]
    %v216 = vld [vmem:[#allocation6 + $0x28] sm:$0xff]
    %v217 = vld [vmem:[#allocation6 + $0x30] sm:$0xff]
    %v218 = vld [vmem:[#allocation6 + $0x38] sm:$0xff]
    %vm219 = vcmask 523264
    %v221 = vsel %vm219, %v211, 0
    %v224 = vsel %vm219, %v212, 0
    %v227 = vsel %vm219, %v213, 0
    %v230 = vsel %vm219, %v214, 0
    %v233 = vsel %vm219, %v215, 0
    %v236 = vsel %vm219, %v216, 0
    %v239 = vsel %vm219, %v217, 0
    %v242 = vsel %vm219, %v218, 0
    %244 = vmatpush.msra.mxu0 0.0
    %245 = vmatpush.msra.mxu0 0.0
    %246 = vmatpush.msra.mxu0 0.0
    %247 = vmatpush.msra.mxu0 0.0
    %248 = vmatpush.msra.mxu0 0.0
    %249 = vmatpush.msra.mxu0 0.0
    %250 = vmatpush.msra.mxu0 0.0
    %251 = vmatpush.msra.mxu0 0.0
    %252 = vmatpush.msra.mxu0 %v210
    %253 = vmatpush.msra.mxu0 %v209
    %254 = vmatpush.msra.mxu0 %v208
    %255 = vmatpush.msra.mxu0 %v207
    %256 = vmatpush.msra.mxu0 %v206
    %257 = vmatpush.msra.mxu0 %v205
    %258 = vmatpush.msra.mxu0 %v204
    %259 = vmatpush.msra.mxu0 %v203
    %260 = vmatmul.f32.gmra.mxu0 %v221
    %v261 = vpop.f32.mrf.mxu0
    %v262 = vadd.f32 0.0, %v261
    %263 = vmatmul.f32.gmra.mxu0 %v224
    %v264 = vpop.f32.mrf.mxu0
    %v265 = vadd.f32 0.0, %v264
    %266 = vmatmul.f32.gmra.mxu0 %v227
    %v267 = vpop.f32.mrf.mxu0
    %v268 = vadd.f32 0.0, %v267
    %269 = vmatmul.f32.gmra.mxu0 %v230
    %v270 = vpop.f32.mrf.mxu0
    %v271 = vadd.f32 0.0, %v270
    %272 = vmatmul.f32.gmra.mxu0 %v233
    %v273 = vpop.f32.mrf.mxu0
    %v274 = vadd.f32 0.0, %v273
    %275 = vmatmul.f32.gmra.mxu0 %v236
    %v276 = vpop.f32.mrf.mxu0
    %v277 = vadd.f32 0.0, %v276
    %278 = vmatmul.f32.gmra.mxu0 %v239
    %v279 = vpop.f32.mrf.mxu0
    %v280 = vadd.f32 0.0, %v279
    %281 = vmatmul.f32.gmra.mxu0 %v242
    %v282 = vpop.f32.mrf.mxu0
    %v283 = vadd.f32 0.0, %v282
    %284 = vdwg.mxu0
    %vm285 = vcmask 408576
    %v286 = vsel %vm285, %v262, 0.0
    %287 = vadd.xlane.f32.xlu0 %v286
    %v288 = vpop.xlane.xlu0 %287
    %v289 = vsel %vm285, %v265, 0.0
    %290 = vadd.xlane.f32.xlu0 %v289
    %v291 = vpop.xlane.xlu0 %290
    %v292 = vsel %vm285, %v268, 0.0
    %293 = vadd.xlane.f32.xlu0 %v292
    %v294 = vpop.xlane.xlu0 %293
    %v295 = vsel %vm285, %v271, 0.0
    %296 = vadd.xlane.f32.xlu0 %v295
    %v297 = vpop.xlane.xlu0 %296
    %v298 = vsel %vm285, %v274, 0.0
    %299 = vadd.xlane.f32.xlu0 %v298
    %v300 = vpop.xlane.xlu0 %299
    %v301 = vsel %vm285, %v277, 0.0
    %302 = vadd.xlane.f32.xlu0 %v301
    %v303 = vpop.xlane.xlu0 %302
    %v304 = vsel %vm285, %v280, 0.0
    %305 = vadd.xlane.f32.xlu0 %v304
    %v306 = vpop.xlane.xlu0 %305
    %v307 = vsel %vm285, %v283, 0.0
    %308 = vadd.xlane.f32.xlu0 %v307
    %v309 = vpop.xlane.xlu0 %308
    %v310 = vmul.f32 %v176, %v203
    %v311 = vmul.f32 %v178, %v204
    %v312 = vmul.f32 %v181, %v205
    %v313 = vmul.f32 %v183, %v206
    %v314 = vmul.f32 %v186, %v207
    %v315 = vmul.f32 %v188, %v208
    %v316 = vmul.f32 %v191, %v209
    %v317 = vmul.f32 %v193, %v210
    %318 = vmatpush.msra.mxu0 0.0
    %319 = vmatpush.msra.mxu0 0.0
    %320 = vmatpush.msra.mxu0 0.0
    %321 = vmatpush.msra.mxu0 0.0
    %322 = vmatpush.msra.mxu0 0.0
    %323 = vmatpush.msra.mxu0 0.0
    %324 = vmatpush.msra.mxu0 0.0
    %325 = vmatpush.msra.mxu0 0.0
    %326 = vmatpush.msra.mxu0 %v317
    %327 = vmatpush.msra.mxu0 %v316
    %328 = vmatpush.msra.mxu0 %v315
    %329 = vmatpush.msra.mxu0 %v314
    %330 = vmatpush.msra.mxu0 %v313
    %331 = vmatpush.msra.mxu0 %v312
    %332 = vmatpush.msra.mxu0 %v311
    %333 = vmatpush.msra.mxu0 %v310
    %334 = vmatmul.f32.gmra.mxu0 %v221
    %v335 = vpop.f32.mrf.mxu0
    %v336 = vadd.f32 0.0, %v335
    %337 = vmatmul.f32.gmra.mxu0 %v224
    %v338 = vpop.f32.mrf.mxu0
    %v339 = vadd.f32 0.0, %v338
    %340 = vmatmul.f32.gmra.mxu0 %v227
    %v341 = vpop.f32.mrf.mxu0
    %v342 = vadd.f32 0.0, %v341
    %343 = vmatmul.f32.gmra.mxu0 %v230
    %v344 = vpop.f32.mrf.mxu0
    %v345 = vadd.f32 0.0, %v344
    %346 = vmatmul.f32.gmra.mxu0 %v233
    %v347 = vpop.f32.mrf.mxu0
    %v348 = vadd.f32 0.0, %v347
    %349 = vmatmul.f32.gmra.mxu0 %v236
    %v350 = vpop.f32.mrf.mxu0
    %v351 = vadd.f32 0.0, %v350
    %352 = vmatmul.f32.gmra.mxu0 %v239
    %v353 = vpop.f32.mrf.mxu0
    %v354 = vadd.f32 0.0, %v353
    %355 = vmatmul.f32.gmra.mxu0 %v242
    %v356 = vpop.f32.mrf.mxu0
    %v357 = vadd.f32 0.0, %v356
    %358 = vdwg.mxu0
    %v359 = vsel %vm285, %v336, 0.0
    %360 = vadd.xlane.f32.xlu0 %v359
    %v361 = vpop.xlane.xlu0 %360
    %v362 = vsel %vm285, %v339, 0.0
    %363 = vadd.xlane.f32.xlu0 %v362
    %v364 = vpop.xlane.xlu0 %363
    %v365 = vsel %vm285, %v342, 0.0
    %366 = vadd.xlane.f32.xlu0 %v365
    %v367 = vpop.xlane.xlu0 %366
    %v368 = vsel %vm285, %v345, 0.0
    %369 = vadd.xlane.f32.xlu0 %v368
    %v370 = vpop.xlane.xlu0 %369
    %v371 = vsel %vm285, %v348, 0.0
    %372 = vadd.xlane.f32.xlu0 %v371
    %v373 = vpop.xlane.xlu0 %372
    %v374 = vsel %vm285, %v351, 0.0
    %375 = vadd.xlane.f32.xlu0 %v374
    %v376 = vpop.xlane.xlu0 %375
    %v377 = vsel %vm285, %v354, 0.0
    %378 = vadd.xlane.f32.xlu0 %v377
    %v379 = vpop.xlane.xlu0 %378
    %v380 = vsel %vm285, %v357, 0.0
    %381 = vadd.xlane.f32.xlu0 %v380
    %v382 = vpop.xlane.xlu0 %381
    %v383 = vmul.f32 %v288, 0.0078125
    %v384 = vmul.f32 %v291, 0.0078125
    %v385 = vmul.f32 %v294, 0.0078125
    %v386 = vmul.f32 %v297, 0.0078125
    %v387 = vmul.f32 %v300, 0.0078125
    %v388 = vmul.f32 %v303, 0.0078125
    %v389 = vmul.f32 %v306, 0.0078125
    %v390 = vmul.f32 %v309, 0.0078125
    %v391 = vmul.f32 %v361, 0.0078125
    %v392 = vmul.f32 %v364, 0.0078125
    %v393 = vmul.f32 %v367, 0.0078125
    %v394 = vmul.f32 %v370, 0.0078125
    %v395 = vmul.f32 %v373, 0.0078125
    %v396 = vmul.f32 %v376, 0.0078125
    %v397 = vmul.f32 %v379, 0.0078125
    %v398 = vmul.f32 %v382, 0.0078125
    %v399 = vmul.f32 %v383, %v383
    %v400 = vmul.f32 %v384, %v384
    %v401 = vmul.f32 %v385, %v385
    %v402 = vmul.f32 %v386, %v386
    %v403 = vmul.f32 %v387, %v387
    %v404 = vmul.f32 %v388, %v388
    %v405 = vmul.f32 %v389, %v389
    %v406 = vmul.f32 %v390, %v390
    %v407 = vsub.f32 %v391, %v399
    %v408 = vsub.f32 %v392, %v400
    %v409 = vsub.f32 %v393, %v401
    %v410 = vsub.f32 %v394, %v402
    %v411 = vsub.f32 %v395, %v403
    %v412 = vsub.f32 %v396, %v404
    %v413 = vsub.f32 %v397, %v405
    %v414 = vsub.f32 %v398, %v406
    %v415 = vmax.f32 %v407, 0.0
    %v416 = vmax.f32 %v408, 0.0
    %v417 = vmax.f32 %v409, 0.0
    %v418 = vmax.f32 %v410, 0.0
    %v419 = vmax.f32 %v411, 0.0
    %v420 = vmax.f32 %v412, 0.0
    %v421 = vmax.f32 %v413, 0.0
    %v422 = vmax.f32 %v414, 0.0
    %v423 = vld [vmem:[%s4] sm:$0xff]
    %v424 = vld [vmem:[%s4 + $0x8] sm:$0xff]
    %v425 = vld [vmem:[%s4 + $0x10] sm:$0xff]
    %v426 = vld [vmem:[%s4 + $0x18] sm:$0xff]
    %v427 = vld [vmem:[%s4 + $0x20] sm:$0xff]
    %v428 = vld [vmem:[%s4 + $0x28] sm:$0xff]
    %v429 = vld [vmem:[%s4 + $0x30] sm:$0xff]
    %v430 = vld [vmem:[%s4 + $0x38] sm:$0xff]
    %v431 = vadd.f32 %v415, 1e-05
    %v432 = vadd.f32 %v416, 1e-05
    %v433 = vadd.f32 %v417, 1e-05
    %v434 = vadd.f32 %v418, 1e-05
    %v435 = vadd.f32 %v419, 1e-05
    %v436 = vadd.f32 %v420, 1e-05
    %v437 = vadd.f32 %v421, 1e-05
    %v438 = vadd.f32 %v422, 1e-05
    %v439 = vrsqrt.pop %v431
    %v440 = vmul.f32 %v439, %v431
    %v441 = vmul.f32 %v440, %v439
    %v442 = vmul.f32 0.5, %v441
    %v443 = vsub.f32 1.5, %v442
    %v444 = vmul.f32 %v439, %v443
    %vm445 = vweird.f32 %v431
    %vm446 = vweird.f32 %v439
    %vm447 = vmor %vm445, %vm446
    %v448 = vsel %vm447, %v439, %v444
    %v449 = vrsqrt.pop %v432
    %v450 = vmul.f32 %v449, %v432
    %v451 = vmul.f32 %v450, %v449
    %v452 = vmul.f32 0.5, %v451
    %v453 = vsub.f32 1.5, %v452
    %v454 = vmul.f32 %v449, %v453
    %vm455 = vweird.f32 %v432
    %vm456 = vweird.f32 %v449
    %vm457 = vmor %vm455, %vm456
    %v458 = vsel %vm457, %v449, %v454
    %v459 = vrsqrt.pop %v433
    %v460 = vmul.f32 %v459, %v433
    %v461 = vmul.f32 %v460, %v459
    %v462 = vmul.f32 0.5, %v461
    %v463 = vsub.f32 1.5, %v462
    %v464 = vmul.f32 %v459, %v463
    %vm465 = vweird.f32 %v433
    %vm466 = vweird.f32 %v459
    %vm467 = vmor %vm465, %vm466
    %v468 = vsel %vm467, %v459, %v464
    %v469 = vrsqrt.pop %v434
    %v470 = vmul.f32 %v469, %v434
    %v471 = vmul.f32 %v470, %v469
    %v472 = vmul.f32 0.5, %v471
    %v473 = vsub.f32 1.5, %v472
    %v474 = vmul.f32 %v469, %v473
    %vm475 = vweird.f32 %v434
    %vm476 = vweird.f32 %v469
    %vm477 = vmor %vm475, %vm476
    %v478 = vsel %vm477, %v469, %v474
    %v479 = vrsqrt.pop %v435
    %v480 = vmul.f32 %v479, %v435
    %v481 = vmul.f32 %v480, %v479
    %v482 = vmul.f32 0.5, %v481
    %v483 = vsub.f32 1.5, %v482
    %v484 = vmul.f32 %v479, %v483
    %vm485 = vweird.f32 %v435
    %vm486 = vweird.f32 %v479
    %vm487 = vmor %vm485, %vm486
    %v488 = vsel %vm487, %v479, %v484
    %v489 = vrsqrt.pop %v436
    %v490 = vmul.f32 %v489, %v436
    %v491 = vmul.f32 %v490, %v489
    %v492 = vmul.f32 0.5, %v491
    %v493 = vsub.f32 1.5, %v492
    %v494 = vmul.f32 %v489, %v493
    %vm495 = vweird.f32 %v436
    %vm496 = vweird.f32 %v489
    %vm497 = vmor %vm495, %vm496
    %v498 = vsel %vm497, %v489, %v494
    %v499 = vrsqrt.pop %v437
    %v500 = vmul.f32 %v499, %v437
    %v501 = vmul.f32 %v500, %v499
    %v502 = vmul.f32 0.5, %v501
    %v503 = vsub.f32 1.5, %v502
    %v504 = vmul.f32 %v499, %v503
    %vm505 = vweird.f32 %v437
    %vm506 = vweird.f32 %v499
    %vm507 = vmor %vm505, %vm506
    %v508 = vsel %vm507, %v499, %v504
    %v509 = vrsqrt.pop %v438
    %v510 = vmul.f32 %v509, %v438
    %v511 = vmul.f32 %v510, %v509
    %v512 = vmul.f32 0.5, %v511
    %v513 = vsub.f32 1.5, %v512
    %v514 = vmul.f32 %v509, %v513
    %vm515 = vweird.f32 %v438
    %vm516 = vweird.f32 %v509
    %vm517 = vmor %vm515, %vm516
    %v518 = vsel %vm517, %v509, %v514
    %v519 = vmul.f32 %v423, %v448
    %v520 = vmul.f32 %v424, %v458
    %v521 = vmul.f32 %v425, %v468
    %v522 = vmul.f32 %v426, %v478
    %v523 = vmul.f32 %v427, %v488
    %v524 = vmul.f32 %v428, %v498
    %v525 = vmul.f32 %v429, %v508
    %v526 = vmul.f32 %v430, %v518
    %v527 = vld [vmem:[%s5] sm:$0xff]
    %v528 = vld [vmem:[%s5 + $0x8] sm:$0xff]
    %v529 = vld [vmem:[%s5 + $0x10] sm:$0xff]
    %v530 = vld [vmem:[%s5 + $0x18] sm:$0xff]
    %v531 = vld [vmem:[%s5 + $0x20] sm:$0xff]
    %v532 = vld [vmem:[%s5 + $0x28] sm:$0xff]
    %v533 = vld [vmem:[%s5 + $0x30] sm:$0xff]
    %v534 = vld [vmem:[%s5 + $0x38] sm:$0xff]
    %v535 = vmul.f32 %v383, %v519
    %v536 = vmul.f32 %v384, %v520
    %v537 = vmul.f32 %v385, %v521
    %v538 = vmul.f32 %v386, %v522
    %v539 = vmul.f32 %v387, %v523
    %v540 = vmul.f32 %v388, %v524
    %v541 = vmul.f32 %v389, %v525
    %v542 = vmul.f32 %v390, %v526
    %v543 = vsub.f32 %v527, %v535
    %v544 = vsub.f32 %v528, %v536
    %v545 = vsub.f32 %v529, %v537
    %v546 = vsub.f32 %v530, %v538
    %v547 = vsub.f32 %v531, %v539
    %v548 = vsub.f32 %v532, %v540
    %v549 = vsub.f32 %v533, %v541
    %v550 = vsub.f32 %v534, %v542
    %552 = vset.pattern.permute.xlu0 0
    %553 = vperm.xlu0 %552, %v519
    %v554 = vpop.permute.xlu0 %553
    %557 = vset.pattern.permute.xlu0 0
    %558 = vperm.xlu0 %557, %v520
    %v559 = vpop.permute.xlu0 %558
    %562 = vset.pattern.permute.xlu0 0
    %563 = vperm.xlu0 %562, %v521
    %v564 = vpop.permute.xlu0 %563
    %567 = vset.pattern.permute.xlu0 0
    %568 = vperm.xlu0 %567, %v522
    %v569 = vpop.permute.xlu0 %568
    %572 = vset.pattern.permute.xlu0 0
    %573 = vperm.xlu0 %572, %v523
    %v574 = vpop.permute.xlu0 %573
    %577 = vset.pattern.permute.xlu0 0
    %578 = vperm.xlu0 %577, %v524
    %v579 = vpop.permute.xlu0 %578
    %582 = vset.pattern.permute.xlu0 0
    %583 = vperm.xlu0 %582, %v525
    %v584 = vpop.permute.xlu0 %583
    %587 = vset.pattern.permute.xlu0 0
    %588 = vperm.xlu0 %587, %v526
    %v589 = vpop.permute.xlu0 %588
    %v591 = vmul.f32 %v176, %v554
    %v592 = vmul.f32 %v178, %v559
    %v593 = vmul.f32 %v181, %v564
    %v594 = vmul.f32 %v183, %v569
    %v595 = vmul.f32 %v186, %v574
    %v596 = vmul.f32 %v188, %v579
    %v597 = vmul.f32 %v191, %v584
    %v598 = vmul.f32 %v193, %v589
    %600 = vset.pattern.permute.xlu0 0
    %601 = vperm.xlu0 %600, %v543
    %v602 = vpop.permute.xlu0 %601
    %605 = vset.pattern.permute.xlu0 0
    %606 = vperm.xlu0 %605, %v544
    %v607 = vpop.permute.xlu0 %606
    %610 = vset.pattern.permute.xlu0 0
    %611 = vperm.xlu0 %610, %v545
    %v612 = vpop.permute.xlu0 %611
    %615 = vset.pattern.permute.xlu0 0
    %616 = vperm.xlu0 %615, %v546
    %v617 = vpop.permute.xlu0 %616
    %620 = vset.pattern.permute.xlu0 0
    %621 = vperm.xlu0 %620, %v547
    %v622 = vpop.permute.xlu0 %621
    %625 = vset.pattern.permute.xlu0 0
    %626 = vperm.xlu0 %625, %v548
    %v627 = vpop.permute.xlu0 %626
    %630 = vset.pattern.permute.xlu0 0
    %631 = vperm.xlu0 %630, %v549
    %v632 = vpop.permute.xlu0 %631
    %635 = vset.pattern.permute.xlu0 0
    %636 = vperm.xlu0 %635, %v550
    %v637 = vpop.permute.xlu0 %636
    %v639 = vadd.f32 %v591, %v602
    %v640 = vadd.f32 %v592, %v607
    %v641 = vadd.f32 %v593, %v612
    %v642 = vadd.f32 %v594, %v617
    %v643 = vadd.f32 %v595, %v622
    %v644 = vadd.f32 %v596, %v627
    %v645 = vadd.f32 %v597, %v632
    %v646 = vadd.f32 %v598, %v637
    %v647 = vmax.f32 %v639, 0.0
    %v648 = vmax.f32 %v640, 0.0
    %v649 = vmax.f32 %v641, 0.0
    %v650 = vmax.f32 %v642, 0.0
    %v651 = vmax.f32 %v643, 0.0
    %v652 = vmax.f32 %v644, 0.0
    %v653 = vmax.f32 %v645, 0.0
    %v654 = vmax.f32 %v646, 0.0
    %v655 = vpack.c.bf16 %v647, %v647
    %v656 = vpack.c.bf16 %v648, %v648
    %v657 = vpack.c.bf16 %v649, %v649
    %v658 = vpack.c.bf16 %v650, %v650
    %v659 = vpack.c.bf16 %v651, %v651
    %v660 = vpack.c.bf16 %v652, %v652
    %v661 = vpack.c.bf16 %v653, %v653
    %v662 = vpack.c.bf16 %v654, %v654
    %vm663 = vcmask 404480
    %664 = vst.msk [vmem:[%s6] sm:$0xf] %vm663, %v655
    %665 = vst.msk [vmem:[%s6 + $0x4] sm:$0xf] %vm663, %v656
    %666 = vst.msk [vmem:[%s6 + $0x8] sm:$0xf] %vm663, %v657
    %667 = vst.msk [vmem:[%s6 + $0xc] sm:$0xf] %vm663, %v658
    %668 = vst.msk [vmem:[%s6 + $0x10] sm:$0xf] %vm663, %v659
    %669 = vst.msk [vmem:[%s6 + $0x14] sm:$0xf] %vm663, %v660
    %670 = vst.msk [vmem:[%s6 + $0x18] sm:$0xf] %vm663, %v661
    %671 = vst.msk [vmem:[%s6 + $0x1c] sm:$0xf] %vm663, %v662
    // Predicated region
    $region38: #{generator_forward.6} parent=1 // pred_check
      _
    $region39: #{generator_forward.6} parent=1 // pred_check_branch
      %673 = sbr.rel (0) target = $region41
    $region40: #{generator_forward.6} parent=1 // pred_region
      _
    $region41: #{generator_forward.6} parent=1 // pred_fallthru
      _
    // Predicated region
    $region42: #{generator_forward.6} parent=1 // pred_check
      _
    $region43: #{generator_forward.6} parent=1 // pred_check_branch
      %675 = sbr.rel (0) target = $region45
    $region44: #{generator_forward.6} parent=1 // pred_region
      _
    $region45: #{generator_forward.6} parent=1 // pred_fallthru
      _
    %676 = vsyncpa [#allocation3], 1
    %677 = vsyncpa [#allocation5], 1

// kernel: generator_forward.7
$region0: #{generator_forward.7}
  #allocation0 [shape = 'u32[]', space=smem, size = 0x4, offset = 0x4, fixed_abs, tag = 'smem constant byte address 0x4 - core index']
  #allocation1 [shape = 'u32[72,128]{1,0:T(1,128)}', space=vmem, size = 0x9000, scoped, tag = 'internal scratch']
  %s0 = inlined_call_operand.vmem [shape: bf16[64,162], index: 0, kind: input, shape index: {}]
  %s1 = inlined_call_operand.vmem [shape: bf16[32,64], index: 1, kind: input, shape index: {}]
  %s2 = inlined_call_operand.vmem [shape: f32[32,162], index: 2, kind: input, shape index: {}]
  %s3 = inlined_call_operand.vmem [shape: f32[32,32], index: 3, kind: input, shape index: {}]
  %s4 = inlined_call_operand.vmem [shape: f32[32,1], index: 4, kind: input, shape index: {}]
  %s5 = inlined_call_operand.vmem [shape: f32[32,1], index: 5, kind: input, shape index: {}]
  %s6 = inlined_call_operand.vmem [shape: bf16[32,162], index: 6, kind: output, shape index: {}]
  %s7 = sld [smem:[#allocation0]]
  $region34: #{generator_forward.7} parent=0
    _
  %s9 = ssub.s32 1, %s7
  %s10 = scalar_select 0, %s9, %s7
  // Predicated region
  $region2: #{generator_forward.7} parent=0 // pred_check
    _
  $region3: #{generator_forward.7} parent=0 // pred_check_branch
    %12 = sbr.rel (0) target = $region5
  $region4: #{generator_forward.7} parent=0 // pred_region
    _
  $region5: #{generator_forward.7} parent=0 // pred_fallthru
    _
  // Predicated region
  $region6: #{generator_forward.7} parent=0 // pred_check
    _
  $region7: #{generator_forward.7} parent=0 // pred_check_branch
    %14 = sbr.rel (0) target = $region9
  $region8: #{generator_forward.7} parent=0 // pred_region
    _
  $region9: #{generator_forward.7} parent=0 // pred_fallthru
    _
  // Predicated region
  $region10: #{generator_forward.7} parent=0 // pred_check
    _
  $region11: #{generator_forward.7} parent=0 // pred_check_branch
    %16 = sbr.rel (0) target = $region13
  $region12: #{generator_forward.7} parent=0 // pred_region
    _
  $region13: #{generator_forward.7} parent=0 // pred_fallthru
    _
  // Predicated region
  $region14: #{generator_forward.7} parent=0 // pred_check
    _
  $region15: #{generator_forward.7} parent=0 // pred_check_branch
    %18 = sbr.rel (0) target = $region17
  $region16: #{generator_forward.7} parent=0 // pred_region
    _
  $region17: #{generator_forward.7} parent=0 // pred_fallthru
    _
  // Predicated region
  $region18: #{generator_forward.7} parent=0 // pred_check
    _
  $region19: #{generator_forward.7} parent=0 // pred_check_branch
    %20 = sbr.rel (0) target = $region21
  $region20: #{generator_forward.7} parent=0 // pred_region
    _
  $region21: #{generator_forward.7} parent=0 // pred_fallthru
    _
  // Predicated region
  $region22: #{generator_forward.7} parent=0 // pred_check
    _
  $region23: #{generator_forward.7} parent=0 // pred_check_branch
    %22 = sbr.rel (0) target = $region25
  $region24: #{generator_forward.7} parent=0 // pred_region
    _
  $region25: #{generator_forward.7} parent=0 // pred_fallthru
    _
  %v24 = vld [vmem:[%s1] sm:$0xf]
  %v25 = vld [vmem:[%s1 + $0x4] sm:$0xf]
  %v26 = vld [vmem:[%s1 + $0x8] sm:$0xf]
  %v27 = vld [vmem:[%s1 + $0xc] sm:$0xf]
  %v28 = vld [vmem:[%s0] sm:$0xff]
  %v29 = vld [vmem:[%s0 + $0x8] sm:$0xff]
  %v30 = vld [vmem:[%s0 + $0x10] sm:$0xff]
  %v31 = vld [vmem:[%s0 + $0x18] sm:$0xff]
  %v32 = vld [vmem:[%s0 + $0x20] sm:$0xff]
  %v33 = vld [vmem:[%s0 + $0x28] sm:$0xff]
  %v34 = vld [vmem:[%s0 + $0x30] sm:$0xff]
  %v35 = vld [vmem:[%s0 + $0x38] sm:$0xff]
  %v40 = vunpack.c.l.b16 %v24
  %v41 = vunpack.c.l.b16 %v25
  %v42 = vunpack.c.l.b16 %v26
  %v43 = vunpack.c.l.b16 %v27
  %v44 = vpack.c.b16 %v41, %v40
  %v45 = vpack.c.b16 %v43, %v42
  %v54 = vunpack.c.l.b16 %v28
  %v55 = vunpack.c.h.b16 %v28
  %v56 = vunpack.c.l.b16 %v29
  %v57 = vunpack.c.h.b16 %v29
  %v58 = vunpack.c.l.b16 %v30
  %v59 = vunpack.c.h.b16 %v30
  %v60 = vunpack.c.l.b16 %v31
  %v61 = vunpack.c.h.b16 %v31
  %v62 = vunpack.c.l.b16 %v32
  %v63 = vunpack.c.h.b16 %v32
  %v64 = vunpack.c.l.b16 %v33
  %v65 = vunpack.c.h.b16 %v33
  %v66 = vunpack.c.l.b16 %v34
  %v67 = vunpack.c.h.b16 %v34
  %v68 = vunpack.c.l.b16 %v35
  %v69 = vunpack.c.h.b16 %v35
  %v70 = vpack.c.b16 %v56, %v54
  %v71 = vpack.c.b16 %v57, %v55
  %v72 = vpack.c.b16 %v60, %v58
  %v73 = vpack.c.b16 %v61, %v59
  %v74 = vpack.c.b16 %v64, %v62
  %v75 = vpack.c.b16 %v65, %v63
  %v76 = vpack.c.b16 %v68, %v66
  %v77 = vpack.c.b16 %v69, %v67
  %vm86 = vcmask 523264
  %v88 = vsel %vm86, %v44, 0
  %v91 = vsel %vm86, %v45, 0
  %93 = vmatpush.bf16.msra.mxu0 0
  %94 = vmatpush.bf16.msra.mxu0 0
  %95 = vmatpush.bf16.msra.mxu0 0
  %96 = vmatpush.bf16.msra.mxu0 0
  %97 = vmatpush.bf16.msra.mxu0 %v76
  %98 = vmatpush.bf16.msra.mxu0 %v74
  %99 = vmatpush.bf16.msra.mxu0 %v72
  %100 = vmatpush.bf16.msra.mxu0 %v70
  %101 = vmatmul.bf16.gmra.mxu0 %v88
  %v102 = vpop.f32.mrf.mxu0
  %v103 = vadd.f32 0.0, %v102
  %v104 = vpop.f32.mrf.mxu0
  %v105 = vadd.f32 0.0, %v104
  %106 = vmatmul.bf16.gmra.mxu0 %v91
  %v107 = vpop.f32.mrf.mxu0
  %v108 = vadd.f32 0.0, %v107
  %v109 = vpop.f32.mrf.mxu0
  %v110 = vadd.f32 0.0, %v109
  %111 = vdwg.mxu0
  %112 = vmatpush.bf16.msra.mxu0 0
  %113 = vmatpush.bf16.msra.mxu0 0
  %114 = vmatpush.bf16.msra.mxu0 0
  %115 = vmatpush.bf16.msra.mxu0 0
  %116 = vmatpush.bf16.msra.mxu0 %v77
  %117 = vmatpush.bf16.msra.mxu0 %v75
  %118 = vmatpush.bf16.msra.mxu0 %v73
  %119 = vmatpush.bf16.msra.mxu0 %v71
  %120 = vmatmul.bf16.gmra.mxu0 %v88
  %v121 = vpop.f32.mrf.mxu0
  %v122 = vadd.f32 0.0, %v121
  %v123 = vpop.f32.mrf.mxu0
  %v124 = vadd.f32 0.0, %v123
  %125 = vmatmul.bf16.gmra.mxu0 %v91
  %v126 = vpop.f32.mrf.mxu0
  %v127 = vadd.f32 0.0, %v126
  %v128 = vpop.f32.mrf.mxu0
  %v129 = vadd.f32 0.0, %v128
  %130 = vdwg.mxu0
  %v131 = vld [vmem:[%s2] sm:$0xff]
  %v132 = vld [vmem:[%s2 + $0x8] sm:$0xff]
  %v133 = vld [vmem:[%s2 + $0x10] sm:$0xff]
  %v134 = vld [vmem:[%s2 + $0x18] sm:$0xff]
  %v135 = vld [vmem:[%s2 + $0x20] sm:$0xff]
  %v136 = vld [vmem:[%s2 + $0x28] sm:$0xff]
  %v137 = vld [vmem:[%s2 + $0x30] sm:$0xff]
  %v138 = vld [vmem:[%s2 + $0x38] sm:$0xff]
  %v139 = vmul.f32 %v103, %v131
  %v140 = vmul.f32 %v122, %v132
  %v141 = vmul.f32 %v105, %v133
  %v142 = vmul.f32 %v124, %v134
  %v143 = vmul.f32 %v108, %v135
  %v144 = vmul.f32 %v127, %v136
  %v145 = vmul.f32 %v110, %v137
  %v146 = vmul.f32 %v129, %v138
  %v147 = vld [vmem:[%s3] sm:$0xff]
  %v148 = vld [vmem:[%s3 + $0x8] sm:$0xff]
  %v149 = vld [vmem:[%s3 + $0x10] sm:$0xff]
  %v150 = vld [vmem:[%s3 + $0x18] sm:$0xff]
  %vm151 = vcmask 261120
  %v153 = vsel %vm151, %v147, 0
  %v156 = vsel %vm151, %v148, 0
  %v159 = vsel %vm151, %v149, 0
  %v162 = vsel %vm151, %v150, 0
  %164 = vmatpush.msra.mxu0 0.0
  %165 = vmatpush.msra.mxu0 0.0
  %166 = vmatpush.msra.mxu0 0.0
  %167 = vmatpush.msra.mxu0 0.0
  %168 = vmatpush.msra.mxu0 0.0
  %169 = vmatpush.msra.mxu0 0.0
  %170 = vmatpush.msra.mxu0 0.0
  %171 = vmatpush.msra.mxu0 0.0
  %172 = vmatpush.msra.mxu0 0.0
  %173 = vmatpush.msra.mxu0 0.0
  %174 = vmatpush.msra.mxu0 0.0
  %175 = vmatpush.msra.mxu0 0.0
  %176 = vmatpush.msra.mxu0 %v145
  %177 = vmatpush.msra.mxu0 %v143
  %178 = vmatpush.msra.mxu0 %v141
  %179 = vmatpush.msra.mxu0 %v139
  %180 = vmatmul.f32.gmra.mxu0 %v153
  %v181 = vpop.f32.mrf.mxu0
  %v182 = vadd.f32 0.0, %v181
  %183 = vmatmul.f32.gmra.mxu0 %v156
  %v184 = vpop.f32.mrf.mxu0
  %v185 = vadd.f32 0.0, %v184
  %186 = vmatmul.f32.gmra.mxu0 %v159
  %v187 = vpop.f32.mrf.mxu0
  %v188 = vadd.f32 0.0, %v187
  %189 = vmatmul.f32.gmra.mxu0 %v162
  %v190 = vpop.f32.mrf.mxu0
  %v191 = vadd.f32 0.0, %v190
  %192 = vdwg.mxu0
  %193 = vmatpush.msra.mxu0 0.0
  %194 = vmatpush.msra.mxu0 0.0
  %195 = vmatpush.msra.mxu0 0.0
  %196 = vmatpush.msra.mxu0 0.0
  %197 = vmatpush.msra.mxu0 0.0
  %198 = vmatpush.msra.mxu0 0.0
  %199 = vmatpush.msra.mxu0 0.0
  %200 = vmatpush.msra.mxu0 0.0
  %201 = vmatpush.msra.mxu0 0.0
  %202 = vmatpush.msra.mxu0 0.0
  %203 = vmatpush.msra.mxu0 0.0
  %204 = vmatpush.msra.mxu0 0.0
  %205 = vmatpush.msra.mxu0 %v146
  %206 = vmatpush.msra.mxu0 %v144
  %207 = vmatpush.msra.mxu0 %v142
  %208 = vmatpush.msra.mxu0 %v140
  %209 = vmatmul.f32.gmra.mxu0 %v153
  %v210 = vpop.f32.mrf.mxu0
  %v211 = vadd.f32 0.0, %v210
  %212 = vmatmul.f32.gmra.mxu0 %v156
  %v213 = vpop.f32.mrf.mxu0
  %v214 = vadd.f32 0.0, %v213
  %215 = vmatmul.f32.gmra.mxu0 %v159
  %v216 = vpop.f32.mrf.mxu0
  %v217 = vadd.f32 0.0, %v216
  %218 = vmatmul.f32.gmra.mxu0 %v162
  %v219 = vpop.f32.mrf.mxu0
  %v220 = vadd.f32 0.0, %v219
  %221 = vdwg.mxu0
  %vm222 = vcmask 277504
  %v223 = vsel %vm222, %v211, 0.0
  %v224 = vadd.f32 %v182, %v223
  %225 = vadd.xlane.f32.xlu0 %v224
  %v226 = vpop.xlane.xlu0 %225
  %v227 = vsel %vm222, %v214, 0.0
  %v228 = vadd.f32 %v185, %v227
  %229 = vadd.xlane.f32.xlu0 %v228
  %v230 = vpop.xlane.xlu0 %229
  %v231 = vsel %vm222, %v217, 0.0
  %v232 = vadd.f32 %v188, %v231
  %233 = vadd.xlane.f32.xlu0 %v232
  %v234 = vpop.xlane.xlu0 %233
  %v235 = vsel %vm222, %v220, 0.0
  %v236 = vadd.f32 %v191, %v235
  %237 = vadd.xlane.f32.xlu0 %v236
  %v238 = vpop.xlane.xlu0 %237
  %v239 = vmul.f32 %v103, %v139
  %v240 = vmul.f32 %v122, %v140
  %v241 = vmul.f32 %v105, %v141
  %v242 = vmul.f32 %v124, %v142
  %v243 = vmul.f32 %v108, %v143
  %v244 = vmul.f32 %v127, %v144
  %v245 = vmul.f32 %v110, %v145
  %v246 = vmul.f32 %v129, %v146
  %247 = vmatpush.msra.mxu0 0.0
  %248 = vmatpush.msra.mxu0 0.0
  %249 = vmatpush.msra.mxu0 0.0
  %250 = vmatpush.msra.mxu0 0.0
  %251 = vmatpush.msra.mxu0 0.0
  %252 = vmatpush.msra.mxu0 0.0
  %253 = vmatpush.msra.mxu0 0.0
  %254 = vmatpush.msra.mxu0 0.0
  %255 = vmatpush.msra.mxu0 0.0
  %256 = vmatpush.msra.mxu0 0.0
  %257 = vmatpush.msra.mxu0 0.0
  %258 = vmatpush.msra.mxu0 0.0
  %259 = vmatpush.msra.mxu0 %v245
  %260 = vmatpush.msra.mxu0 %v243
  %261 = vmatpush.msra.mxu0 %v241
  %262 = vmatpush.msra.mxu0 %v239
  %263 = vmatmul.f32.gmra.mxu0 %v153
  %v264 = vpop.f32.mrf.mxu0
  %v265 = vadd.f32 0.0, %v264
  %266 = vmatmul.f32.gmra.mxu0 %v156
  %v267 = vpop.f32.mrf.mxu0
  %v268 = vadd.f32 0.0, %v267
  %269 = vmatmul.f32.gmra.mxu0 %v159
  %v270 = vpop.f32.mrf.mxu0
  %v271 = vadd.f32 0.0, %v270
  %272 = vmatmul.f32.gmra.mxu0 %v162
  %v273 = vpop.f32.mrf.mxu0
  %v274 = vadd.f32 0.0, %v273
  %275 = vdwg.mxu0
  %276 = vmatpush.msra.mxu0 0.0
  %277 = vmatpush.msra.mxu0 0.0
  %278 = vmatpush.msra.mxu0 0.0
  %279 = vmatpush.msra.mxu0 0.0
  %280 = vmatpush.msra.mxu0 0.0
  %281 = vmatpush.msra.mxu0 0.0
  %282 = vmatpush.msra.mxu0 0.0
  %283 = vmatpush.msra.mxu0 0.0
  %284 = vmatpush.msra.mxu0 0.0
  %285 = vmatpush.msra.mxu0 0.0
  %286 = vmatpush.msra.mxu0 0.0
  %287 = vmatpush.msra.mxu0 0.0
  %288 = vmatpush.msra.mxu0 %v246
  %289 = vmatpush.msra.mxu0 %v244
  %290 = vmatpush.msra.mxu0 %v242
  %291 = vmatpush.msra.mxu0 %v240
  %292 = vmatmul.f32.gmra.mxu0 %v153
  %v293 = vpop.f32.mrf.mxu0
  %v294 = vadd.f32 0.0, %v293
  %295 = vmatmul.f32.gmra.mxu0 %v156
  %v296 = vpop.f32.mrf.mxu0
  %v297 = vadd.f32 0.0, %v296
  %298 = vmatmul.f32.gmra.mxu0 %v159
  %v299 = vpop.f32.mrf.mxu0
  %v300 = vadd.f32 0.0, %v299
  %301 = vmatmul.f32.gmra.mxu0 %v162
  %v302 = vpop.f32.mrf.mxu0
  %v303 = vadd.f32 0.0, %v302
  %304 = vdwg.mxu0
  %v305 = vsel %vm222, %v294, 0.0
  %v306 = vadd.f32 %v265, %v305
  %307 = vadd.xlane.f32.xlu0 %v306
  %v308 = vpop.xlane.xlu0 %307
  %v309 = vsel %vm222, %v297, 0.0
  %v310 = vadd.f32 %v268, %v309
  %311 = vadd.xlane.f32.xlu0 %v310
  %v312 = vpop.xlane.xlu0 %311
  %v313 = vsel %vm222, %v300, 0.0
  %v314 = vadd.f32 %v271, %v313
  %315 = vadd.xlane.f32.xlu0 %v314
  %v316 = vpop.xlane.xlu0 %315
  %v317 = vsel %vm222, %v303, 0.0
  %v318 = vadd.f32 %v274, %v317
  %319 = vadd.xlane.f32.xlu0 %v318
  %v320 = vpop.xlane.xlu0 %319
  %v321 = vmul.f32 %v226, 0.001953125
  %v322 = vmul.f32 %v230, 0.001953125
  %v323 = vmul.f32 %v234, 0.001953125
  %v324 = vmul.f32 %v238, 0.001953125
  %v325 = vmul.f32 %v308, 0.001953125
  %v326 = vmul.f32 %v312, 0.001953125
  %v327 = vmul.f32 %v316, 0.001953125
  %v328 = vmul.f32 %v320, 0.001953125
  %v329 = vmul.f32 %v321, %v321
  %v330 = vmul.f32 %v322, %v322
  %v331 = vmul.f32 %v323, %v323
  %v332 = vmul.f32 %v324, %v324
  %v333 = vsub.f32 %v325, %v329
  %v334 = vsub.f32 %v326, %v330
  %v335 = vsub.f32 %v327, %v331
  %v336 = vsub.f32 %v328, %v332
  %v337 = vmax.f32 %v333, 0.0
  %v338 = vmax.f32 %v334, 0.0
  %v339 = vmax.f32 %v335, 0.0
  %v340 = vmax.f32 %v336, 0.0
  %v341 = vld [vmem:[%s4] sm:$0xff]
  %v342 = vld [vmem:[%s4 + $0x8] sm:$0xff]
  %v343 = vld [vmem:[%s4 + $0x10] sm:$0xff]
  %v344 = vld [vmem:[%s4 + $0x18] sm:$0xff]
  %v345 = vadd.f32 %v337, 1e-05
  %v346 = vadd.f32 %v338, 1e-05
  %v347 = vadd.f32 %v339, 1e-05
  %v348 = vadd.f32 %v340, 1e-05
  %v349 = vrsqrt.pop %v345
  %v350 = vmul.f32 %v349, %v345
  %v351 = vmul.f32 %v350, %v349
  %v352 = vmul.f32 0.5, %v351
  %v353 = vsub.f32 1.5, %v352
  %v354 = vmul.f32 %v349, %v353
  %vm355 = vweird.f32 %v345
  %vm356 = vweird.f32 %v349
  %vm357 = vmor %vm355, %vm356
  %v358 = vsel %vm357, %v349, %v354
  %v359 = vrsqrt.pop %v346
  %v360 = vmul.f32 %v359, %v346
  %v361 = vmul.f32 %v360, %v359
  %v362 = vmul.f32 0.5, %v361
  %v363 = vsub.f32 1.5, %v362
  %v364 = vmul.f32 %v359, %v363
  %vm365 = vweird.f32 %v346
  %vm366 = vweird.f32 %v359
  %vm367 = vmor %vm365, %vm366
  %v368 = vsel %vm367, %v359, %v364
  %v369 = vrsqrt.pop %v347
  %v370 = vmul.f32 %v369, %v347
  %v371 = vmul.f32 %v370, %v369
  %v372 = vmul.f32 0.5, %v371
  %v373 = vsub.f32 1.5, %v372
  %v374 = vmul.f32 %v369, %v373
  %vm375 = vweird.f32 %v347
  %vm376 = vweird.f32 %v369
  %vm377 = vmor %vm375, %vm376
  %v378 = vsel %vm377, %v369, %v374
  %v379 = vrsqrt.pop %v348
  %v380 = vmul.f32 %v379, %v348
  %v381 = vmul.f32 %v380, %v379
  %v382 = vmul.f32 0.5, %v381
  %v383 = vsub.f32 1.5, %v382
  %v384 = vmul.f32 %v379, %v383
  %vm385 = vweird.f32 %v348
  %vm386 = vweird.f32 %v379
  %vm387 = vmor %vm385, %vm386
  %v388 = vsel %vm387, %v379, %v384
  %v389 = vmul.f32 %v341, %v358
  %v390 = vmul.f32 %v342, %v368
  %v391 = vmul.f32 %v343, %v378
  %v392 = vmul.f32 %v344, %v388
  %v393 = vld [vmem:[%s5] sm:$0xff]
  %v394 = vld [vmem:[%s5 + $0x8] sm:$0xff]
  %v395 = vld [vmem:[%s5 + $0x10] sm:$0xff]
  %v396 = vld [vmem:[%s5 + $0x18] sm:$0xff]
  %v397 = vmul.f32 %v321, %v389
  %v398 = vmul.f32 %v322, %v390
  %v399 = vmul.f32 %v323, %v391
  %v400 = vmul.f32 %v324, %v392
  %v401 = vsub.f32 %v393, %v397
  %v402 = vsub.f32 %v394, %v398
  %v403 = vsub.f32 %v395, %v399
  %v404 = vsub.f32 %v396, %v400
  %406 = vset.pattern.permute.xlu0 0
  %407 = vperm.xlu0 %406, %v389
  %v408 = vpop.permute.xlu0 %407
  %411 = vset.pattern.permute.xlu0 0
  %412 = vperm.xlu0 %411, %v390
  %v413 = vpop.permute.xlu0 %412
  %416 = vset.pattern.permute.xlu0 0
  %417 = vperm.xlu0 %416, %v391
  %v418 = vpop.permute.xlu0 %417
  %421 = vset.pattern.permute.xlu0 0
  %422 = vperm.xlu0 %421, %v392
  %v423 = vpop.permute.xlu0 %422
  %v425 = vmul.f32 %v103, %v408
  %v426 = vmul.f32 %v122, %v408
  %v427 = vmul.f32 %v105, %v413
  %v428 = vmul.f32 %v124, %v413
  %v429 = vmul.f32 %v108, %v418
  %v430 = vmul.f32 %v127, %v418
  %v431 = vmul.f32 %v110, %v423
  %v432 = vmul.f32 %v129, %v423
  %434 = vset.pattern.permute.xlu0 0
  %435 = vperm.xlu0 %434, %v401
  %v436 = vpop.permute.xlu0 %435
  %439 = vset.pattern.permute.xlu0 0
  %440 = vperm.xlu0 %439, %v402
  %v441 = vpop.permute.xlu0 %440
  %444 = vset.pattern.permute.xlu0 0
  %445 = vperm.xlu0 %444, %v403
  %v446 = vpop.permute.xlu0 %445
  %449 = vset.pattern.permute.xlu0 0
  %450 = vperm.xlu0 %449, %v404
  %v451 = vpop.permute.xlu0 %450
  %v453 = vadd.f32 %v425, %v436
  %v454 = vadd.f32 %v426, %v436
  %v455 = vadd.f32 %v427, %v441
  %v456 = vadd.f32 %v428, %v441
  %v457 = vadd.f32 %v429, %v446
  %v458 = vadd.f32 %v430, %v446
  %v459 = vadd.f32 %v431, %v451
  %v460 = vadd.f32 %v432, %v451
  %v461 = vmax.f32 %v453, 0.0
  %v462 = vmax.f32 %v454, 0.0
  %v463 = vmax.f32 %v455, 0.0
  %v464 = vmax.f32 %v456, 0.0
  %v465 = vmax.f32 %v457, 0.0
  %v466 = vmax.f32 %v458, 0.0
  %v467 = vmax.f32 %v459, 0.0
  %v468 = vmax.f32 %v460, 0.0
  %v469 = vpack.c.bf16 %v462, %v461
  %v470 = vpack.c.bf16 %v464, %v463
  %v471 = vpack.c.bf16 %v466, %v465
  %v472 = vpack.c.bf16 %v468, %v467
  %vm473 = vcmask 1043456
  %vm474 = vcmask 277508
  %vm475 = vmor %vm474, %vm473
  %476 = vst.msk [vmem:[%s6] sm:$0xff] %vm475, %v469
  %477 = vst.msk [vmem:[%s6 + $0x8] sm:$0xff] %vm475, %v470
  %478 = vst.msk [vmem:[%s6 + $0x10] sm:$0xff] %vm475, %v471
  %479 = vst.msk [vmem:[%s6 + $0x18] sm:$0xff] %vm475, %v472
  // Predicated region
  $region26: #{generator_forward.7} parent=0 // pred_check
    _
  $region27: #{generator_forward.7} parent=0 // pred_check_branch
    %481 = sbr.rel (0) target = $region29
  $region28: #{generator_forward.7} parent=0 // pred_region
    _
  $region29: #{generator_forward.7} parent=0 // pred_fallthru
    _
  // Predicated region
  $region30: #{generator_forward.7} parent=0 // pred_check
    _
  $region31: #{generator_forward.7} parent=0 // pred_check_branch
    %483 = sbr.rel (0) target = $region33
  $region32: #{generator_forward.7} parent=0 // pred_region
    _
  $region33: #{generator_forward.7} parent=0 // pred_fallthru
    _

// kernel: generator_forward.8
$region0: #{generator_forward.8}
  #allocation0 [shape = 'u32[]', space=smem, size = 0x4, offset = 0x4, fixed_abs, tag = 'smem constant byte address 0x4 - core index']
  #allocation1 [shape = 'u32[72,128]{1,0:T(1,128)}', space=vmem, size = 0x9000, scoped, tag = 'internal scratch']
  %s0 = inlined_call_operand.vmem [shape: bf16[32,578], index: 0, kind: input, shape index: {}]
  %s1 = inlined_call_operand.vmem [shape: bf16[16,32], index: 1, kind: input, shape index: {}]
  %s2 = inlined_call_operand.vmem [shape: f32[16,578], index: 2, kind: input, shape index: {}]
  %s3 = inlined_call_operand.vmem [shape: f32[16,16], index: 3, kind: input, shape index: {}]
  %s4 = inlined_call_operand.vmem [shape: f32[16,1], index: 4, kind: input, shape index: {}]
  %s5 = inlined_call_operand.vmem [shape: f32[16,1], index: 5, kind: input, shape index: {}]
  %s6 = inlined_call_operand.vmem [shape: bf16[16,578], index: 6, kind: output, shape index: {}]
  %s7 = sld [smem:[#allocation0]]
  $region34: #{generator_forward.8} parent=0
    _
  %s9 = ssub.s32 1, %s7
  %s10 = scalar_select 0, %s9, %s7
  // Predicated region
  $region2: #{generator_forward.8} parent=0 // pred_check
    _
  $region3: #{generator_forward.8} parent=0 // pred_check_branch
    %12 = sbr.rel (0) target = $region5
  $region4: #{generator_forward.8} parent=0 // pred_region
    _
  $region5: #{generator_forward.8} parent=0 // pred_fallthru
    _
  // Predicated region
  $region6: #{generator_forward.8} parent=0 // pred_check
    _
  $region7: #{generator_forward.8} parent=0 // pred_check_branch
    %14 = sbr.rel (0) target = $region9
  $region8: #{generator_forward.8} parent=0 // pred_region
    _
  $region9: #{generator_forward.8} parent=0 // pred_fallthru
    _
  // Predicated region
  $region10: #{generator_forward.8} parent=0 // pred_check
    _
  $region11: #{generator_forward.8} parent=0 // pred_check_branch
    %16 = sbr.rel (0) target = $region13
  $region12: #{generator_forward.8} parent=0 // pred_region
    _
  $region13: #{generator_forward.8} parent=0 // pred_fallthru
    _
  // Predicated region
  $region14: #{generator_forward.8} parent=0 // pred_check
    _
  $region15: #{generator_forward.8} parent=0 // pred_check_branch
    %18 = sbr.rel (0) target = $region17
  $region16: #{generator_forward.8} parent=0 // pred_region
    _
  $region17: #{generator_forward.8} parent=0 // pred_fallthru
    _
  // Predicated region
  $region18: #{generator_forward.8} parent=0 // pred_check
    _
  $region19: #{generator_forward.8} parent=0 // pred_check_branch
    %20 = sbr.rel (0) target = $region21
  $region20: #{generator_forward.8} parent=0 // pred_region
    _
  $region21: #{generator_forward.8} parent=0 // pred_fallthru
    _
  // Predicated region
  $region22: #{generator_forward.8} parent=0 // pred_check
    _
  $region23: #{generator_forward.8} parent=0 // pred_check_branch
    %22 = sbr.rel (0) target = $region25
  $region24: #{generator_forward.8} parent=0 // pred_region
    _
  $region25: #{generator_forward.8} parent=0 // pred_fallthru
    _
  %v24 = vld [vmem:[%s1] sm:$0xf]
  %v25 = vld [vmem:[%s1 + $0x4] sm:$0xf]
  %v26 = vld [vmem:[%s0] sm:$0xff]
  %v27 = vld [vmem:[%s0 + $0x8] sm:$0xff]
  %v28 = vld [vmem:[%s0 + $0x10] sm:$0xf]
  %v29 = vld [vmem:[%s0 + $0x14] sm:$0xff]
  %v30 = vld [vmem:[%s0 + $0x1c] sm:$0xff]
  %v31 = vld [vmem:[%s0 + $0x24] sm:$0xf]
  %v32 = vld [vmem:[%s0 + $0x28] sm:$0xff]
  %v33 = vld [vmem:[%s0 + $0x30] sm:$0xff]
  %v34 = vld [vmem:[%s0 + $0x38] sm:$0xf]
  %v35 = vld [vmem:[%s0 + $0x3c] sm:$0xff]
  %v36 = vld [vmem:[%s0 + $0x44] sm:$0xff]
  %v37 = vld [vmem:[%s0 + $0x4c] sm:$0xf]
  %v40 = vunpack.c.l.b16 %v24
  %v41 = vunpack.c.l.b16 %v25
  %v42 = vpack.c.b16 %v41, %v40
  %v55 = vunpack.c.l.b16 %v26
  %v56 = vunpack.c.h.b16 %v26
  %v57 = vunpack.c.l.b16 %v27
  %v58 = vunpack.c.h.b16 %v27
  %v59 = vunpack.c.l.b16 %v28
  %v60 = vunpack.c.l.b16 %v29
  %v61 = vunpack.c.h.b16 %v29
  %v62 = vunpack.c.l.b16 %v30
  %v63 = vunpack.c.h.b16 %v30
  %v64 = vunpack.c.l.b16 %v31
  %v65 = vunpack.c.l.b16 %v32
  %v66 = vunpack.c.h.b16 %v32
  %v67 = vunpack.c.l.b16 %v33
  %v68 = vunpack.c.h.b16 %v33
  %v69 = vunpack.c.l.b16 %v34
  %v70 = vunpack.c.l.b16 %v35
  %v71 = vunpack.c.h.b16 %v35
  %v72 = vunpack.c.l.b16 %v36
  %v73 = vunpack.c.h.b16 %v36
  %v74 = vunpack.c.l.b16 %v37
  %v75 = vpack.c.b16 %v60, %v55
  %v76 = vpack.c.b16 %v61, %v56
  %v77 = vpack.c.b16 %v62, %v57
  %v78 = vpack.c.b16 %v63, %v58
  %v79 = vpack.c.b16 %v64, %v59
  %v80 = vpack.c.b16 %v70, %v65
  %v81 = vpack.c.b16 %v71, %v66
  %v82 = vpack.c.b16 %v72, %v67
  %v83 = vpack.c.b16 %v73, %v68
  %v84 = vpack.c.b16 %v74, %v69
  %vm95 = vcmask 261120
  %v97 = vsel %vm95, %v42, 0
  %99 = vmatpush.bf16.msra.mxu0 0
  %100 = vmatpush.bf16.msra.mxu0 0
  %101 = vmatpush.bf16.msra.mxu0 0
  %102 = vmatpush.bf16.msra.mxu0 0
  %103 = vmatpush.bf16.msra.mxu0 0
  %104 = vmatpush.bf16.msra.mxu0 0
  %105 = vmatpush.bf16.msra.mxu0 %v80
  %106 = vmatpush.bf16.msra.mxu0 %v75
  %107 = vmatmul.bf16.gmra.mxu0 %v97
  %v108 = vpop.f32.mrf.mxu0
  %v109 = vadd.f32 0.0, %v108
  %v110 = vpop.f32.mrf.mxu0
  %v111 = vadd.f32 0.0, %v110
  %112 = vdwg.mxu0
  %113 = vmatpush.bf16.msra.mxu0 0
  %114 = vmatpush.bf16.msra.mxu0 0
  %115 = vmatpush.bf16.msra.mxu0 0
  %116 = vmatpush.bf16.msra.mxu0 0
  %117 = vmatpush.bf16.msra.mxu0 0
  %118 = vmatpush.bf16.msra.mxu0 0
  %119 = vmatpush.bf16.msra.mxu0 %v81
  %120 = vmatpush.bf16.msra.mxu0 %v76
  %121 = vmatmul.bf16.gmra.mxu0 %v97
  %v122 = vpop.f32.mrf.mxu0
  %v123 = vadd.f32 0.0, %v122
  %v124 = vpop.f32.mrf.mxu0
  %v125 = vadd.f32 0.0, %v124
  %126 = vdwg.mxu0
  %127 = vmatpush.bf16.msra.mxu0 0
  %128 = vmatpush.bf16.msra.mxu0 0
  %129 = vmatpush.bf16.msra.mxu0 0
  %130 = vmatpush.bf16.msra.mxu0 0
  %131 = vmatpush.bf16.msra.mxu0 0
  %132 = vmatpush.bf16.msra.mxu0 0
  %133 = vmatpush.bf16.msra.mxu0 %v82
  %134 = vmatpush.bf16.msra.mxu0 %v77
  %135 = vmatmul.bf16.gmra.mxu0 %v97
  %v136 = vpop.f32.mrf.mxu0
  %v137 = vadd.f32 0.0, %v136
  %v138 = vpop.f32.mrf.mxu0
  %v139 = vadd.f32 0.0, %v138
  %140 = vdwg.mxu0
  %141 = vmatpush.bf16.msra.mxu0 0
  %142 = vmatpush.bf16.msra.mxu0 0
  %143 = vmatpush.bf16.msra.mxu0 0
  %144 = vmatpush.bf16.msra.mxu0 0
  %145 = vmatpush.bf16.msra.mxu0 0
  %146 = vmatpush.bf16.msra.mxu0 0
  %147 = vmatpush.bf16.msra.mxu0 %v83
  %148 = vmatpush.bf16.msra.mxu0 %v78
  %149 = vmatmul.bf16.gmra.mxu0 %v97
  %v150 = vpop.f32.mrf.mxu0
  %v151 = vadd.f32 0.0, %v150
  %v152 = vpop.f32.mrf.mxu0
  %v153 = vadd.f32 0.0, %v152
  %154 = vdwg.mxu0
  %155 = vmatpush.bf16.msra.mxu0 0
  %156 = vmatpush.bf16.msra.mxu0 0
  %157 = vmatpush.bf16.msra.mxu0 0
  %158 = vmatpush.bf16.msra.mxu0 0
  %159 = vmatpush.bf16.msra.mxu0 0
  %160 = vmatpush.bf16.msra.mxu0 0
  %161 = vmatpush.bf16.msra.mxu0 %v84
  %162 = vmatpush.bf16.msra.mxu0 %v79
  %163 = vmatmul.bf16.gmra.mxu0 %v97
  %v164 = vpop.f32.mrf.mxu0
  %v165 = vadd.f32 0.0, %v164
  %v166 = vpop.f32.mrf.mxu0
  %v167 = vadd.f32 0.0, %v166
  %168 = vdwg.mxu0
  %v169 = vld [vmem:[%s2] sm:$0xff]
  %v170 = vld [vmem:[%s2 + $0x8] sm:$0xff]
  %v171 = vld [vmem:[%s2 + $0x10] sm:$0xff]
  %v172 = vld [vmem:[%s2 + $0x18] sm:$0xff]
  %v173 = vld [vmem:[%s2 + $0x20] sm:$0xff]
  %v174 = vld [vmem:[%s2 + $0x28] sm:$0xff]
  %v175 = vld [vmem:[%s2 + $0x30] sm:$0xff]
  %v176 = vld [vmem:[%s2 + $0x38] sm:$0xff]
  %v177 = vld [vmem:[%s2 + $0x40] sm:$0xff]
  %v178 = vld [vmem:[%s2 + $0x48] sm:$0xff]
  %v179 = vmul.f32 %v109, %v169
  %v180 = vmul.f32 %v123, %v170
  %v181 = vmul.f32 %v137, %v171
  %v182 = vmul.f32 %v151, %v172
  %v183 = vmul.f32 %v165, %v173
  %v184 = vmul.f32 %v111, %v174
  %v185 = vmul.f32 %v125, %v175
  %v186 = vmul.f32 %v139, %v176
  %v187 = vmul.f32 %v153, %v177
  %v188 = vmul.f32 %v167, %v178
  %v189 = vld [vmem:[%s3] sm:$0xff]
  %v190 = vld [vmem:[%s3 + $0x8] sm:$0xff]
  %vm191 = vcmask 130048
  %v193 = vsel %vm191, %v189, 0
  %v196 = vsel %vm191, %v190, 0
  %198 = vmatpush.msra.mxu0 0.0
  %199 = vmatpush.msra.mxu0 0.0
  %200 = vmatpush.msra.mxu0 0.0
  %201 = vmatpush.msra.mxu0 0.0
  %202 = vmatpush.msra.mxu0 0.0
  %203 = vmatpush.msra.mxu0 0.0
  %204 = vmatpush.msra.mxu0 0.0
  %205 = vmatpush.msra.mxu0 0.0
  %206 = vmatpush.msra.mxu0 0.0
  %207 = vmatpush.msra.mxu0 0.0
  %208 = vmatpush.msra.mxu0 0.0
  %209 = vmatpush.msra.mxu0 0.0
  %210 = vmatpush.msra.mxu0 0.0
  %211 = vmatpush.msra.mxu0 0.0
  %212 = vmatpush.msra.mxu0 %v184
  %213 = vmatpush.msra.mxu0 %v179
  %214 = vmatmul.f32.gmra.mxu0 %v193
  %v215 = vpop.f32.mrf.mxu0
  %v216 = vadd.f32 0.0, %v215
  %217 = vmatmul.f32.gmra.mxu0 %v196
  %v218 = vpop.f32.mrf.mxu0
  %v219 = vadd.f32 0.0, %v218
  %220 = vdwg.mxu0
  %221 = vmatpush.msra.mxu0 0.0
  %222 = vmatpush.msra.mxu0 0.0
  %223 = vmatpush.msra.mxu0 0.0
  %224 = vmatpush.msra.mxu0 0.0
  %225 = vmatpush.msra.mxu0 0.0
  %226 = vmatpush.msra.mxu0 0.0
  %227 = vmatpush.msra.mxu0 0.0
  %228 = vmatpush.msra.mxu0 0.0
  %229 = vmatpush.msra.mxu0 0.0
  %230 = vmatpush.msra.mxu0 0.0
  %231 = vmatpush.msra.mxu0 0.0
  %232 = vmatpush.msra.mxu0 0.0
  %233 = vmatpush.msra.mxu0 0.0
  %234 = vmatpush.msra.mxu0 0.0
  %235 = vmatpush.msra.mxu0 %v185
  %236 = vmatpush.msra.mxu0 %v180
  %237 = vmatmul.f32.gmra.mxu0 %v193
  %v238 = vpop.f32.mrf.mxu0
  %v239 = vadd.f32 0.0, %v238
  %240 = vmatmul.f32.gmra.mxu0 %v196
  %v241 = vpop.f32.mrf.mxu0
  %v242 = vadd.f32 0.0, %v241
  %243 = vdwg.mxu0
  %244 = vmatpush.msra.mxu0 0.0
  %245 = vmatpush.msra.mxu0 0.0
  %246 = vmatpush.msra.mxu0 0.0
  %247 = vmatpush.msra.mxu0 0.0
  %248 = vmatpush.msra.mxu0 0.0
  %249 = vmatpush.msra.mxu0 0.0
  %250 = vmatpush.msra.mxu0 0.0
  %251 = vmatpush.msra.mxu0 0.0
  %252 = vmatpush.msra.mxu0 0.0
  %253 = vmatpush.msra.mxu0 0.0
  %254 = vmatpush.msra.mxu0 0.0
  %255 = vmatpush.msra.mxu0 0.0
  %256 = vmatpush.msra.mxu0 0.0
  %257 = vmatpush.msra.mxu0 0.0
  %258 = vmatpush.msra.mxu0 %v186
  %259 = vmatpush.msra.mxu0 %v181
  %260 = vmatmul.f32.gmra.mxu0 %v193
  %v261 = vpop.f32.mrf.mxu0
  %v262 = vadd.f32 0.0, %v261
  %263 = vmatmul.f32.gmra.mxu0 %v196
  %v264 = vpop.f32.mrf.mxu0
  %v265 = vadd.f32 0.0, %v264
  %266 = vdwg.mxu0
  %267 = vmatpush.msra.mxu0 0.0
  %268 = vmatpush.msra.mxu0 0.0
  %269 = vmatpush.msra.mxu0 0.0
  %270 = vmatpush.msra.mxu0 0.0
  %271 = vmatpush.msra.mxu0 0.0
  %272 = vmatpush.msra.mxu0 0.0
  %273 = vmatpush.msra.mxu0 0.0
  %274 = vmatpush.msra.mxu0 0.0
  %275 = vmatpush.msra.mxu0 0.0
  %276 = vmatpush.msra.mxu0 0.0
  %277 = vmatpush.msra.mxu0 0.0
  %278 = vmatpush.msra.mxu0 0.0
  %279 = vmatpush.msra.mxu0 0.0
  %280 = vmatpush.msra.mxu0 0.0
  %281 = vmatpush.msra.mxu0 %v187
  %282 = vmatpush.msra.mxu0 %v182
  %283 = vmatmul.f32.gmra.mxu0 %v193
  %v284 = vpop.f32.mrf.mxu0
  %v285 = vadd.f32 0.0, %v284
  %286 = vmatmul.f32.gmra.mxu0 %v196
  %v287 = vpop.f32.mrf.mxu0
  %v288 = vadd.f32 0.0, %v287
  %289 = vdwg.mxu0
  %290 = vmatpush.msra.mxu0 0.0
  %291 = vmatpush.msra.mxu0 0.0
  %292 = vmatpush.msra.mxu0 0.0
  %293 = vmatpush.msra.mxu0 0.0
  %294 = vmatpush.msra.mxu0 0.0
  %295 = vmatpush.msra.mxu0 0.0
  %296 = vmatpush.msra.mxu0 0.0
  %297 = vmatpush.msra.mxu0 0.0
  %298 = vmatpush.msra.mxu0 0.0
  %299 = vmatpush.msra.mxu0 0.0
  %300 = vmatpush.msra.mxu0 0.0
  %301 = vmatpush.msra.mxu0 0.0
  %302 = vmatpush.msra.mxu0 0.0
  %303 = vmatpush.msra.mxu0 0.0
  %304 = vmatpush.msra.mxu0 %v188
  %305 = vmatpush.msra.mxu0 %v183
  %306 = vmatmul.f32.gmra.mxu0 %v193
  %v307 = vpop.f32.mrf.mxu0
  %v308 = vadd.f32 0.0, %v307
  %309 = vmatmul.f32.gmra.mxu0 %v196
  %v310 = vpop.f32.mrf.mxu0
  %v311 = vadd.f32 0.0, %v310
  %312 = vdwg.mxu0
  %v313 = vadd.f32 %v216, %v239
  %v314 = vadd.f32 %v313, %v262
  %v315 = vadd.f32 %v314, %v285
  %vm316 = vcmask 539648
  %v317 = vsel %vm316, %v308, 0.0
  %v318 = vadd.f32 %v315, %v317
  %319 = vadd.xlane.f32.xlu0 %v318
  %v320 = vpop.xlane.xlu0 %319
  %v321 = vadd.f32 %v219, %v242
  %v322 = vadd.f32 %v321, %v265
  %v323 = vadd.f32 %v322, %v288
  %v324 = vsel %vm316, %v311, 0.0
  %v325 = vadd.f32 %v323, %v324
  %326 = vadd.xlane.f32.xlu0 %v325
  %v327 = vpop.xlane.xlu0 %326
  %v328 = vmul.f32 %v109, %v179
  %v329 = vmul.f32 %v123, %v180
  %v330 = vmul.f32 %v137, %v181
  %v331 = vmul.f32 %v151, %v182
  %v332 = vmul.f32 %v165, %v183
  %v333 = vmul.f32 %v111, %v184
  %v334 = vmul.f32 %v125, %v185
  %v335 = vmul.f32 %v139, %v186
  %v336 = vmul.f32 %v153, %v187
  %v337 = vmul.f32 %v167, %v188
  %338 = vmatpush.msra.mxu0 0.0
  %339 = vmatpush.msra.mxu0 0.0
  %340 = vmatpush.msra.mxu0 0.0
  %341 = vmatpush.msra.mxu0 0.0
  %342 = vmatpush.msra.mxu0 0.0
  %343 = vmatpush.msra.mxu0 0.0
  %344 = vmatpush.msra.mxu0 0.0
  %345 = vmatpush.msra.mxu0 0.0
  %346 = vmatpush.msra.mxu0 0.0
  %347 = vmatpush.msra.mxu0 0.0
  %348 = vmatpush.msra.mxu0 0.0
  %349 = vmatpush.msra.mxu0 0.0
  %350 = vmatpush.msra.mxu0 0.0
  %351 = vmatpush.msra.mxu0 0.0
  %352 = vmatpush.msra.mxu0 %v333
  %353 = vmatpush.msra.mxu0 %v328
  %354 = vmatmul.f32.gmra.mxu0 %v193
  %v355 = vpop.f32.mrf.mxu0
  %v356 = vadd.f32 0.0, %v355
  %357 = vmatmul.f32.gmra.mxu0 %v196
  %v358 = vpop.f32.mrf.mxu0
  %v359 = vadd.f32 0.0, %v358
  %360 = vdwg.mxu0
  %361 = vmatpush.msra.mxu0 0.0
  %362 = vmatpush.msra.mxu0 0.0
  %363 = vmatpush.msra.mxu0 0.0
  %364 = vmatpush.msra.mxu0 0.0
  %365 = vmatpush.msra.mxu0 0.0
  %366 = vmatpush.msra.mxu0 0.0
  %367 = vmatpush.msra.mxu0 0.0
  %368 = vmatpush.msra.mxu0 0.0
  %369 = vmatpush.msra.mxu0 0.0
  %370 = vmatpush.msra.mxu0 0.0
  %371 = vmatpush.msra.mxu0 0.0
  %372 = vmatpush.msra.mxu0 0.0
  %373 = vmatpush.msra.mxu0 0.0
  %374 = vmatpush.msra.mxu0 0.0
  %375 = vmatpush.msra.mxu0 %v334
  %376 = vmatpush.msra.mxu0 %v329
  %377 = vmatmul.f32.gmra.mxu0 %v193
  %v378 = vpop.f32.mrf.mxu0
  %v379 = vadd.f32 0.0, %v378
  %380 = vmatmul.f32.gmra.mxu0 %v196
  %v381 = vpop.f32.mrf.mxu0
  %v382 = vadd.f32 0.0, %v381
  %383 = vdwg.mxu0
  %384 = vmatpush.msra.mxu0 0.0
  %385 = vmatpush.msra.mxu0 0.0
  %386 = vmatpush.msra.mxu0 0.0
  %387 = vmatpush.msra.mxu0 0.0
  %388 = vmatpush.msra.mxu0 0.0
  %389 = vmatpush.msra.mxu0 0.0
  %390 = vmatpush.msra.mxu0 0.0
  %391 = vmatpush.msra.mxu0 0.0
  %392 = vmatpush.msra.mxu0 0.0
  %393 = vmatpush.msra.mxu0 0.0
  %394 = vmatpush.msra.mxu0 0.0
  %395 = vmatpush.msra.mxu0 0.0
  %396 = vmatpush.msra.mxu0 0.0
  %397 = vmatpush.msra.mxu0 0.0
  %398 = vmatpush.msra.mxu0 %v335
  %399 = vmatpush.msra.mxu0 %v330
  %400 = vmatmul.f32.gmra.mxu0 %v193
  %v401 = vpop.f32.mrf.mxu0
  %v402 = vadd.f32 0.0, %v401
  %403 = vmatmul.f32.gmra.mxu0 %v196
  %v404 = vpop.f32.mrf.mxu0
  %v405 = vadd.f32 0.0, %v404
  %406 = vdwg.mxu0
  %407 = vmatpush.msra.mxu0 0.0
  %408 = vmatpush.msra.mxu0 0.0
  %409 = vmatpush.msra.mxu0 0.0
  %410 = vmatpush.msra.mxu0 0.0
  %411 = vmatpush.msra.mxu0 0.0
  %412 = vmatpush.msra.mxu0 0.0
  %413 = vmatpush.msra.mxu0 0.0
  %414 = vmatpush.msra.mxu0 0.0
  %415 = vmatpush.msra.mxu0 0.0
  %416 = vmatpush.msra.mxu0 0.0
  %417 = vmatpush.msra.mxu0 0.0
  %418 = vmatpush.msra.mxu0 0.0
  %419 = vmatpush.msra.mxu0 0.0
  %420 = vmatpush.msra.mxu0 0.0
  %421 = vmatpush.msra.mxu0 %v336
  %422 = vmatpush.msra.mxu0 %v331
  %423 = vmatmul.f32.gmra.mxu0 %v193
  %v424 = vpop.f32.mrf.mxu0
  %v425 = vadd.f32 0.0, %v424
  %426 = vmatmul.f32.gmra.mxu0 %v196
  %v427 = vpop.f32.mrf.mxu0
  %v428 = vadd.f32 0.0, %v427
  %429 = vdwg.mxu0
  %430 = vmatpush.msra.mxu0 0.0
  %431 = vmatpush.msra.mxu0 0.0
  %432 = vmatpush.msra.mxu0 0.0
  %433 = vmatpush.msra.mxu0 0.0
  %434 = vmatpush.msra.mxu0 0.0
  %435 = vmatpush.msra.mxu0 0.0
  %436 = vmatpush.msra.mxu0 0.0
  %437 = vmatpush.msra.mxu0 0.0
  %438 = vmatpush.msra.mxu0 0.0
  %439 = vmatpush.msra.mxu0 0.0
  %440 = vmatpush.msra.mxu0 0.0
  %441 = vmatpush.msra.mxu0 0.0
  %442 = vmatpush.msra.mxu0 0.0
  %443 = vmatpush.msra.mxu0 0.0
  %444 = vmatpush.msra.mxu0 %v337
  %445 = vmatpush.msra.mxu0 %v332
  %446 = vmatmul.f32.gmra.mxu0 %v193
  %v447 = vpop.f32.mrf.mxu0
  %v448 = vadd.f32 0.0, %v447
  %449 = vmatmul.f32.gmra.mxu0 %v196
  %v450 = vpop.f32.mrf.mxu0
  %v451 = vadd.f32 0.0, %v450
  %452 = vdwg.mxu0
  %v453 = vadd.f32 %v356, %v379
  %v454 = vadd.f32 %v453, %v402
  %v455 = vadd.f32 %v454, %v425
  %v456 = vsel %vm316, %v448, 0.0
  %v457 = vadd.f32 %v455, %v456
  %458 = vadd.xlane.f32.xlu0 %v457
  %v459 = vpop.xlane.xlu0 %458
  %v460 = vadd.f32 %v359, %v382
  %v461 = vadd.f32 %v460, %v405
  %v462 = vadd.f32 %v461, %v428
  %v463 = vsel %vm316, %v451, 0.0
  %v464 = vadd.f32 %v462, %v463
  %465 = vadd.xlane.f32.xlu0 %v464
  %v466 = vpop.xlane.xlu0 %465
  %v467 = vmul.f32 %v320, 0.00048828125
  %v468 = vmul.f32 %v327, 0.00048828125
  %v469 = vmul.f32 %v459, 0.00048828125
  %v470 = vmul.f32 %v466, 0.00048828125
  %v471 = vmul.f32 %v467, %v467
  %v472 = vmul.f32 %v468, %v468
  %v473 = vsub.f32 %v469, %v471
  %v474 = vsub.f32 %v470, %v472
  %v475 = vmax.f32 %v473, 0.0
  %v476 = vmax.f32 %v474, 0.0
  %v477 = vld [vmem:[%s4] sm:$0xff]
  %v478 = vld [vmem:[%s4 + $0x8] sm:$0xff]
  %v479 = vadd.f32 %v475, 1e-05
  %v480 = vadd.f32 %v476, 1e-05
  %v481 = vrsqrt.pop %v479
  %v482 = vmul.f32 %v481, %v479
  %v483 = vmul.f32 %v482, %v481
  %v484 = vmul.f32 0.5, %v483
  %v485 = vsub.f32 1.5, %v484
  %v486 = vmul.f32 %v481, %v485
  %vm487 = vweird.f32 %v479
  %vm488 = vweird.f32 %v481
  %vm489 = vmor %vm487, %vm488
  %v490 = vsel %vm489, %v481, %v486
  %v491 = vrsqrt.pop %v480
  %v492 = vmul.f32 %v491, %v480
  %v493 = vmul.f32 %v492, %v491
  %v494 = vmul.f32 0.5, %v493
  %v495 = vsub.f32 1.5, %v494
  %v496 = vmul.f32 %v491, %v495
  %vm497 = vweird.f32 %v480
  %vm498 = vweird.f32 %v491
  %vm499 = vmor %vm497, %vm498
  %v500 = vsel %vm499, %v491, %v496
  %v501 = vmul.f32 %v477, %v490
  %v502 = vmul.f32 %v478, %v500
  %v503 = vld [vmem:[%s5] sm:$0xff]
  %v504 = vld [vmem:[%s5 + $0x8] sm:$0xff]
  %v505 = vmul.f32 %v467, %v501
  %v506 = vmul.f32 %v468, %v502
  %v507 = vsub.f32 %v503, %v505
  %v508 = vsub.f32 %v504, %v506
  %510 = vset.pattern.permute.xlu0 0
  %511 = vperm.xlu0 %510, %v501
  %v512 = vpop.permute.xlu0 %511
  %515 = vset.pattern.permute.xlu0 0
  %516 = vperm.xlu0 %515, %v502
  %v517 = vpop.permute.xlu0 %516
  %v519 = vmul.f32 %v109, %v512
  %v520 = vmul.f32 %v123, %v512
  %v521 = vmul.f32 %v137, %v512
  %v522 = vmul.f32 %v151, %v512
  %v523 = vmul.f32 %v165, %v512
  %v524 = vmul.f32 %v111, %v517
  %v525 = vmul.f32 %v125, %v517
  %v526 = vmul.f32 %v139, %v517
  %v527 = vmul.f32 %v153, %v517
  %v528 = vmul.f32 %v167, %v517
  %530 = vset.pattern.permute.xlu0 0
  %531 = vperm.xlu0 %530, %v507
  %v532 = vpop.permute.xlu0 %531
  %535 = vset.pattern.permute.xlu0 0
  %536 = vperm.xlu0 %535, %v508
  %v537 = vpop.permute.xlu0 %536
  %v539 = vadd.f32 %v519, %v532
  %v540 = vadd.f32 %v520, %v532
  %v541 = vadd.f32 %v521, %v532
  %v542 = vadd.f32 %v522, %v532
  %v543 = vadd.f32 %v523, %v532
  %v544 = vadd.f32 %v524, %v537
  %v545 = vadd.f32 %v525, %v537
  %v546 = vadd.f32 %v526, %v537
  %v547 = vadd.f32 %v527, %v537
  %v548 = vadd.f32 %v528, %v537
  %v549 = vmax.f32 %v539, 0.0
  %v550 = vmax.f32 %v540, 0.0
  %v551 = vmax.f32 %v541, 0.0
  %v552 = vmax.f32 %v542, 0.0
  %v553 = vmax.f32 %v543, 0.0
  %v554 = vmax.f32 %v544, 0.0
  %v555 = vmax.f32 %v545, 0.0
  %v556 = vmax.f32 %v546, 0.0
  %v557 = vmax.f32 %v547, 0.0
  %v558 = vmax.f32 %v548, 0.0
  %v559 = vpack.c.bf16 %v550, %v549
  %v560 = vpack.c.bf16 %v552, %v551
  %v561 = vpack.c.bf16 %v553, %v553
  %v562 = vpack.c.bf16 %v555, %v554
  %v563 = vpack.c.bf16 %v557, %v556
  %v564 = vpack.c.bf16 %v558, %v558
  %565 = vst [vmem:[%s6] sm:$0xff] %v559
  %566 = vst [vmem:[%s6 + $0x8] sm:$0xff] %v560
  %vm567 = vcmask 535552
  %568 = vst.msk [vmem:[%s6 + $0x10] sm:$0xf] %vm567, %v561
  %569 = vst [vmem:[%s6 + $0x14] sm:$0xff] %v562
  %570 = vst [vmem:[%s6 + $0x1c] sm:$0xff] %v563
  %571 = vst.msk [vmem:[%s6 + $0x24] sm:$0xf] %vm567, %v564
  // Predicated region
  $region26: #{generator_forward.8} parent=0 // pred_check
    _
  $region27: #{generator_forward.8} parent=0 // pred_check_branch
    %573 = sbr.rel (0) target = $region29
  $region28: #{generator_forward.8} parent=0 // pred_region
    _
  $region29: #{generator_forward.8} parent=0 // pred_fallthru
    _
  // Predicated region
  $region30: #{generator_forward.8} parent=0 // pred_check
    _
  $region31: #{generator_forward.8} parent=0 // pred_check_branch
    %575 = sbr.rel (0) target = $region33
  $region32: #{generator_forward.8} parent=0 // pred_region
    _
  $region33: #{generator_forward.8} parent=0 // pred_fallthru
    _

// kernel: generator_forward.9
$region0: #{generator_forward.9}
  #allocation0 [shape = 'u32[]', space=smem, size = 0x4, offset = 0x4, fixed_abs, tag = 'smem constant byte address 0x4 - core index']
  #allocation1 [shape = 'u32[72,128]{1,0:T(1,128)}', space=vmem, size = 0x9000, scoped, tag = 'internal scratch']
  %s0 = inlined_call_operand.vmem [shape: bf16[16,2178], index: 0, kind: input, shape index: {}]
  %s1 = inlined_call_operand.vmem [shape: bf16[12,16], index: 1, kind: input, shape index: {}]
  %s2 = inlined_call_operand.vmem [shape: f32[12,2178], index: 2, kind: output, shape index: {}]
  %s3 = sld [smem:[#allocation0]]
  $region86: #{generator_forward.9} parent=0
    _
  %s5 = ssub.s32 1, %s3
  %s6 = scalar_select 0, %s5, %s3
  $region1: #{generator_forward.9} parent=0
    #allocation2 [shape = 'u8[73728]{0}', space=vmem, size = 0x12000, scoped, tag = 'input window, operand 0']
    #allocation3 [shape = 'u8[147456]{0}', space=vmem, size = 0x24000, scoped, tag = 'output window, operand 0']
    loop: start=0, step=1, limit=4
    $region2: #{generator_forward.9} parent=1 // loop_pre_header
      _
    $region3: #{generator_forward.9} parent=1 // loop_header
      %s8 = sphi 0, %s12
      %p9 = scmp.ge.s32.totalorder %s8, 4
      %s18 = sphi 0, %s20
      %s21 = sphi 0, %s18
      %s22 = sphi 0, %s21
      %s38 = sphi 0, %s22
      %s42 = sphi 0, %s42
      %s44 = sphi 0, %s42
      %s45 = sphi 0, %s44
      %s59 = sphi 0, %s45
      %s65 = sphi 0, %s67
      %s68 = sphi 0, %s65
      %s69 = sphi 0, %s68
      %s85 = sphi 0, %s69
    $region4: #{generator_forward.9} parent=1 // loop_header_branch
      %11 = sbr.rel (%p9) target = $region8
    $region5: #{generator_forward.9} parent=1 // loop_body
      %s13 = ssub.s32 %s8, 1
      %s14 = ssub.s32 %s8, 2
      %s15 = sadd.s32 %s8, 1
      %s16 = ssub.s32 %s8, %s15
      %p17 = scmp.eq.s32.totalorder %s16, 0
      %s19 = sadd.s32 %s18, 1
      %s20 = scalar_select %p17, %s18, %s19
      %p23 = pneg %p17
      %p24 = scmp.eq.s32.totalorder %s8, 1
      %p25 = por %p23, %p24
      %p26 = scmp.ne.s32.totalorder %s18, %s21
      %p27 = scmp.eq.s32.totalorder %s8, 0
      %p28 = por %p26, %p27
      %p29 = scmp.ne.s32.totalorder %s18, %s21
      %p30 = scmp.eq.s32.totalorder %s13, 1
      %p31 = por %p29, %p30
      %p32 = scmp.ne.s32.totalorder %s21, %s22
      %p33 = scmp.eq.s32.totalorder %s13, 0
      %p34 = por %p32, %p33
      %p35 = scmp.ne.s32.totalorder %s21, %s22
      %p36 = scmp.eq.s32.totalorder %s14, 1
      %p37 = por %p35, %p36
      %p39 = scmp.ne.s32.totalorder %s22, %s38
      %p40 = scmp.eq.s32.totalorder %s14, 0
      %p41 = por %p39, %p40
      %s43 = sadd.s32 %s42, 1
      %p46 = scmp.eq.s32.totalorder %s8, 1
      %p47 = scmp.ne.s32.totalorder %s42, %s44
      %p48 = scmp.eq.s32.totalorder %s8, 0
      %p49 = por %p47, %p48
      %p50 = scmp.ne.s32.totalorder %s42, %s44
      %p51 = scmp.eq.s32.totalorder %s13, 1
      %p52 = por %p50, %p51
      %p53 = scmp.ne.s32.totalorder %s44, %s45
      %p54 = scmp.eq.s32.totalorder %s13, 0
      %p55 = por %p53, %p54
      %p56 = scmp.ne.s32.totalorder %s44, %s45
      %p57 = scmp.eq.s32.totalorder %s14, 1
      %p58 = por %p56, %p57
      %p60 = scmp.ne.s32.totalorder %s45, %s59
      %p61 = scmp.eq.s32.totalorder %s14, 0
      %p62 = por %p60, %p61
      %s63 = ssub.s32 %s8, %s15
      %p64 = scmp.eq.s32.totalorder %s63, 0
      %s66 = sadd.s32 %s65, 1
      %s67 = scalar_select %p64, %s65, %s66
      %p70 = pneg %p64
      %p71 = scmp.eq.s32.totalorder %s8, 1
      %p72 = por %p70, %p71
      %p73 = scmp.ne.s32.totalorder %s65, %s68
      %p74 = scmp.eq.s32.totalorder %s8, 0
      %p75 = por %p73, %p74
      %p76 = scmp.ne.s32.totalorder %s65, %s68
      %p77 = scmp.eq.s32.totalorder %s13, 1
      %p78 = por %p76, %p77
      %p79 = scmp.ne.s32.totalorder %s68, %s69
      %p80 = scmp.eq.s32.totalorder %s13, 0
      %p81 = por %p79, %p80
      %p82 = scmp.ne.s32.totalorder %s68, %s69
      %p83 = scmp.eq.s32.totalorder %s14, 1
      %p84 = por %p82, %p83
      %p86 = scmp.ne.s32.totalorder %s69, %s85
      %p87 = scmp.eq.s32.totalorder %s14, 0
      %p88 = por %p86, %p87
      %p89 = scmp.le.s32.totalorder 1, %s8
      %p90 = scmp.lt.s32.totalorder %s8, 3
      %p91 = pnand %p89, %p90
      %p92 = pneg %p91
      // Predicated region
      $region9: #{generator_forward.9} parent=5 // pred_check
        _
      $region10: #{generator_forward.9} parent=5 // pred_check_branch
        %94 = sbr.rel (%p91) target = $region12
      $region11: #{generator_forward.9} parent=5 // pred_region
        %s95 = ssub.s32 %s8, 1
        // Predicated region
        $region13: #{generator_forward.9} parent=11 // pred_check
          %p96 = pneg %p55
        $region14: #{generator_forward.9} parent=11 // pred_check_branch
          %98 = sbr.rel (%p96) target = $region16
        $region15: #{generator_forward.9} parent=11 // pred_region
          _
        $region16: #{generator_forward.9} parent=11 // pred_fallthru
          _
      $region12: #{generator_forward.9} parent=5 // pred_fallthru
        _
      %p99 = scmp.lt.s32.totalorder %s8, 2
      // Predicated region
      $region17: #{generator_forward.9} parent=5 // pred_check
        %p100 = pneg %p99
      $region18: #{generator_forward.9} parent=5 // pred_check_branch
        %102 = sbr.rel (%p100) target = $region20
      $region19: #{generator_forward.9} parent=5 // pred_region
        // Predicated region
        $region21: #{generator_forward.9} parent=19 // pred_check
          %p103 = pneg %p28
        $region22: #{generator_forward.9} parent=19 // pred_check_branch
          %105 = sbr.rel (%p103) target = $region24
        $region23: #{generator_forward.9} parent=19 // pred_region
          %s106 = sand.u32 %s18, 1
          %s107 = sand.u32 %s18, 1
          %s108 = smul.addr %s107, 72
          %s109 = scalar_lea.vmem [#allocation2], %s108
          %s110 = smul.u32 9, %s8
          %s111 = smul.addr %s110, 4
          %s112 = scalar_lea.vmem %s0, %s111
          // Predicated region
          $region25: #{generator_forward.9} parent=23 // pred_check
            _
          $region26: #{generator_forward.9} parent=23 // pred_check_branch
            %114 = sbr.rel (0) target = $region28
          $region27: #{generator_forward.9} parent=23 // pred_region
            // Predicated region
            $region29: #{generator_forward.9} parent=27 // pred_check
              _
            $region30: #{generator_forward.9} parent=27 // pred_check_branch
              %116 = sbr.rel (0) target = $region32
            $region31: #{generator_forward.9} parent=27 // pred_region
              %s117 = scalar_lea.vmem %s112, 32
              %s118 = scalar_lea.vmem %s109, 32 [#allocation2]
              loop: start=0, step=1, limit=1
              $region33: #{generator_forward.9} parent=31 // loop_pre_header
                _
              $region34: #{generator_forward.9} parent=31 // loop_header
                %s120 = sphi 0, %s124
                %p121 = scmp.ge.s32.totalorder %s120, 1
                %s125 = sphi %s112, %s112
                %s126 = sphi %s109, %s109
              $region35: #{generator_forward.9} parent=31 // loop_header_branch
                %123 = sbr.rel (%p121) target = $region39
              $region36: #{generator_forward.9} parent=31 // loop_body
                %v127 = vld [vmem:[%s125] sm:$0xff]
                %128 = vst [vmem:[%s126] sm:$0xff] %v127
                %v129 = vld [vmem:[%s125 + $0x8] sm:$0xff]
                %130 = vst [vmem:[%s126 + $0x8] sm:$0xff] %v129
                %v131 = vld [vmem:[%s125 + $0x10] sm:$0xff]
                %132 = vst [vmem:[%s126 + $0x10] sm:$0xff] %v131
                %v133 = vld [vmem:[%s125 + $0x18] sm:$0xff]
                %134 = vst [vmem:[%s126 + $0x18] sm:$0xff] %v133
                %v135 = vld [vmem:[%s125 + $0x48] sm:$0xff]
                %136 = vst [vmem:[%s126 + $0x24] sm:$0xff] %v135
                %v137 = vld [vmem:[%s125 + $0x50] sm:$0xff]
                %138 = vst [vmem:[%s126 + $0x2c] sm:$0xff] %v137
                %v139 = vld [vmem:[%s125 + $0x58] sm:$0xff]
                %140 = vst [vmem:[%s126 + $0x34] sm:$0xff] %v139
                %v141 = vld [vmem:[%s125 + $0x60] sm:$0xff]
                %142 = vst [vmem:[%s126 + $0x3c] sm:$0xff] %v141
              $region37: #{generator_forward.9} parent=31 // loop_footer
                %s124 = sadd.s32 1, %s120
              $region38: #{generator_forward.9} parent=31 // loop_footer_branch
                %119 = sbr.rel target = $region34
              $region39: #{generator_forward.9} parent=31 // loop_exit
                _
              %s144 = ssub.s32 16, 1
              loop: start=0, step=1, limit=1
              $region40: #{generator_forward.9} parent=31 // loop_pre_header
                _
              $region41: #{generator_forward.9} parent=31 // loop_header
                %s146 = sphi 0, %s150
                %p147 = scmp.ge.s32.totalorder %s146, 1
                %s151 = sphi %s117, %s117
                %s152 = sphi %s118, %s118
              $region42: #{generator_forward.9} parent=31 // loop_header_branch
                %149 = sbr.rel (%p147) target = $region46
              $region43: #{generator_forward.9} parent=31 // loop_body
                %v153 = vld [vmem:[%s151] sm:%s144]
                %154 = vst [vmem:[%s152] sm:%s144] %v153
                %v155 = vld [vmem:[%s151 + $0x48] sm:%s144]
                %156 = vst [vmem:[%s152 + $0x24] sm:%s144] %v155
              $region44: #{generator_forward.9} parent=31 // loop_footer
                %s150 = sadd.s32 1, %s146
              $region45: #{generator_forward.9} parent=31 // loop_footer_branch
                %145 = sbr.rel target = $region41
              $region46: #{generator_forward.9} parent=31 // loop_exit
                _
            $region32: #{generator_forward.9} parent=27 // pred_fallthru
              _
          $region28: #{generator_forward.9} parent=23 // pred_fallthru
            _
          %157 = vnop
        $region24: #{generator_forward.9} parent=19 // pred_fallthru
          _
      $region20: #{generator_forward.9} parent=5 // pred_fallthru
        _
      %p158 = scmp.le.s32.totalorder 1, %s8
      %p159 = scmp.lt.s32.totalorder %s8, 3
      %p160 = pnand %p158, %p159
      %p161 = pneg %p160
      // Predicated region
      $region47: #{generator_forward.9} parent=5 // pred_check
        _
      $region48: #{generator_forward.9} parent=5 // pred_check_branch
        %163 = sbr.rel (%p160) target = $region50
      $region49: #{generator_forward.9} parent=5 // pred_region
        %s164 = ssub.s32 %s8, 1
        %s165 = sand.u32 %s21, 1
        %s166 = sand.u32 %s21, 1
        %s167 = smul.addr %s166, 72
        %s168 = scalar_lea.vmem [#allocation2], %s167
        // Predicated region
        $region51: #{generator_forward.9} parent=49 // pred_check
          %p169 = pneg %p34
        $region52: #{generator_forward.9} parent=49 // pred_check_branch
          %171 = sbr.rel (%p169) target = $region54
        $region53: #{generator_forward.9} parent=49 // pred_region
          _
        $region54: #{generator_forward.9} parent=49 // pred_fallthru
          _
        %s172 = sand.u32 %s21, 1
        %s173 = sand.u32 %s21, 1
        %s174 = smul.addr %s173, 72
        %s175 = scalar_lea.vmem [#allocation2], %s174
        %p176 = pneg %p34
        %p177 = pneg %p31
        %p178 = pneg %p55
        %p179 = pneg %p52
        %p180 = pneg %p81
        %p181 = pneg %p78
        %s182 = sand.u32 %s68, 1
        %s183 = sand.u32 %s68, 1
        %s184 = smul.addr %s183, 144
        %s185 = scalar_lea.vmem [#allocation3], %s184
        %s186 = smul.u32 9, %s13
        %s187 = smul.u32 9, %s13
        %v189 = vld [vmem:[%s1] sm:$0xf]
        %v190 = vld [vmem:[%s1 + $0x4] sm:$0x3]
        %v191 = vld [vmem:[%s168] sm:$0xff]
        %v192 = vld [vmem:[%s168 + $0x8] sm:$0xff]
        %v193 = vld [vmem:[%s168 + $0x10] sm:$0xff]
        %v194 = vld [vmem:[%s168 + $0x18] sm:$0xff]
        %v195 = vld [vmem:[%s168 + $0x20] sm:$0xf]
        %v196 = vld [vmem:[%s168 + $0x24] sm:$0xff]
        %v197 = vld [vmem:[%s168 + $0x2c] sm:$0xff]
        %v198 = vld [vmem:[%s168 + $0x34] sm:$0xff]
        %v199 = vld [vmem:[%s168 + $0x3c] sm:$0xff]
        %v200 = vld [vmem:[%s168 + $0x44] sm:$0xf]
        %v203 = vunpack.c.l.b16 %v189
        %v204 = vunpack.c.l.b16 %v190
        %v205 = vpack.c.b16 %v204, %v203
        %v216 = vunpack.c.l.b16 %v191
        %v217 = vunpack.c.h.b16 %v191
        %v218 = vunpack.c.l.b16 %v192
        %v219 = vunpack.c.h.b16 %v192
        %v220 = vunpack.c.l.b16 %v193
        %v221 = vunpack.c.h.b16 %v193
        %v222 = vunpack.c.l.b16 %v194
        %v223 = vunpack.c.h.b16 %v194
        %v224 = vunpack.c.l.b16 %v195
        %v225 = vunpack.c.l.b16 %v196
        %v226 = vunpack.c.h.b16 %v196
        %v227 = vunpack.c.l.b16 %v197
        %v228 = vunpack.c.h.b16 %v197
        %v229 = vunpack.c.l.b16 %v198
        %v230 = vunpack.c.h.b16 %v198
        %v231 = vunpack.c.l.b16 %v199
        %v232 = vunpack.c.h.b16 %v199
        %v233 = vunpack.c.l.b16 %v200
        %v234 = vpack.c.b16 %v225, %v216
        %v235 = vpack.c.b16 %v226, %v217
        %v236 = vpack.c.b16 %v227, %v218
        %v237 = vpack.c.b16 %v228, %v219
        %v238 = vpack.c.b16 %v229, %v220
        %v239 = vpack.c.b16 %v230, %v221
        %v240 = vpack.c.b16 %v231, %v222
        %v241 = vpack.c.b16 %v232, %v223
        %v242 = vpack.c.b16 %v233, %v224
        %vm252 = vcmask 130048
        %v254 = vsel %vm252, %v205, 0
        %256 = vmatpush.bf16.msra.mxu0 0
        %257 = vmatpush.bf16.msra.mxu0 0
        %258 = vmatpush.bf16.msra.mxu0 0
        %259 = vmatpush.bf16.msra.mxu0 0
        %260 = vmatpush.bf16.msra.mxu0 0
        %261 = vmatpush.bf16.msra.mxu0 0
        %262 = vmatpush.bf16.msra.mxu0 0
        %263 = vmatpush.bf16.msra.mxu0 %v234
        %264 = vmatmul.bf16.gmra.mxu0 %v254
        %v265 = vpop.f32.mrf.mxu0
        %v266 = vadd.f32 0.0, %v265
        %v267 = vpop.f32.mrf.mxu0
        %v268 = vadd.f32 0.0, %v267
        %269 = vdwg.mxu0
        %270 = vmatpush.bf16.msra.mxu0 0
        %271 = vmatpush.bf16.msra.mxu0 0
        %272 = vmatpush.bf16.msra.mxu0 0
        %273 = vmatpush.bf16.msra.mxu0 0
        %274 = vmatpush.bf16.msra.mxu0 0
        %275 = vmatpush.bf16.msra.mxu0 0
        %276 = vmatpush.bf16.msra.mxu0 0
        %277 = vmatpush.bf16.msra.mxu0 %v235
        %278 = vmatmul.bf16.gmra.mxu0 %v254
        %v279 = vpop.f32.mrf.mxu0
        %v280 = vadd.f32 0.0, %v279
        %v281 = vpop.f32.mrf.mxu0
        %v282 = vadd.f32 0.0, %v281
        %283 = vdwg.mxu0
        %284 = vmatpush.bf16.msra.mxu0 0
        %285 = vmatpush.bf16.msra.mxu0 0
        %286 = vmatpush.bf16.msra.mxu0 0
        %287 = vmatpush.bf16.msra.mxu0 0
        %288 = vmatpush.bf16.msra.mxu0 0
        %289 = vmatpush.bf16.msra.mxu0 0
        %290 = vmatpush.bf16.msra.mxu0 0
        %291 = vmatpush.bf16.msra.mxu0 %v236
        %292 = vmatmul.bf16.gmra.mxu0 %v254
        %v293 = vpop.f32.mrf.mxu0
        %v294 = vadd.f32 0.0, %v293
        %v295 = vpop.f32.mrf.mxu0
        %v296 = vadd.f32 0.0, %v295
        %297 = vdwg.mxu0
        %298 = vmatpush.bf16.msra.mxu0 0
        %299 = vmatpush.bf16.msra.mxu0 0
        %300 = vmatpush.bf16.msra.mxu0 0
        %301 = vmatpush.bf16.msra.mxu0 0
        %302 = vmatpush.bf16.msra.mxu0 0
        %303 = vmatpush.bf16.msra.mxu0 0
        %304 = vmatpush.bf16.msra.mxu0 0
        %305 = vmatpush.bf16.msra.mxu0 %v237
        %306 = vmatmul.bf16.gmra.mxu0 %v254
        %v307 = vpop.f32.mrf.mxu0
        %v308 = vadd.f32 0.0, %v307
        %v309 = vpop.f32.mrf.mxu0
        %v310 = vadd.f32 0.0, %v309
        %311 = vdwg.mxu0
        %312 = vmatpush.bf16.msra.mxu0 0
        %313 = vmatpush.bf16.msra.mxu0 0
        %314 = vmatpush.bf16.msra.mxu0 0
        %315 = vmatpush.bf16.msra.mxu0 0
        %316 = vmatpush.bf16.msra.mxu0 0
        %317 = vmatpush.bf16.msra.mxu0 0
        %318 = vmatpush.bf16.msra.mxu0 0
        %319 = vmatpush.bf16.msra.mxu0 %v238
        %320 = vmatmul.bf16.gmra.mxu0 %v254
        %v321 = vpop.f32.mrf.mxu0
        %v322 = vadd.f32 0.0, %v321
        %v323 = vpop.f32.mrf.mxu0
        %v324 = vadd.f32 0.0, %v323
        %325 = vdwg.mxu0
        %326 = vmatpush.bf16.msra.mxu0 0
        %327 = vmatpush.bf16.msra.mxu0 0
        %328 = vmatpush.bf16.msra.mxu0 0
        %329 = vmatpush.bf16.msra.mxu0 0
        %330 = vmatpush.bf16.msra.mxu0 0
        %331 = vmatpush.bf16.msra.mxu0 0
        %332 = vmatpush.bf16.msra.mxu0 0
        %333 = vmatpush.bf16.msra.mxu0 %v239
        %334 = vmatmul.bf16.gmra.mxu0 %v254
        %v335 = vpop.f32.mrf.mxu0
        %v336 = vadd.f32 0.0, %v335
        %v337 = vpop.f32.mrf.mxu0
        %v338 = vadd.f32 0.0, %v337
        %339 = vdwg.mxu0
        %340 = vmatpush.bf16.msra.mxu0 0
        %341 = vmatpush.bf16.msra.mxu0 0
        %342 = vmatpush.bf16.msra.mxu0 0
        %343 = vmatpush.bf16.msra.mxu0 0
        %344 = vmatpush.bf16.msra.mxu0 0
        %345 = vmatpush.bf16.msra.mxu0 0
        %346 = vmatpush.bf16.msra.mxu0 0
        %347 = vmatpush.bf16.msra.mxu0 %v240
        %348 = vmatmul.bf16.gmra.mxu0 %v254
        %v349 = vpop.f32.mrf.mxu0
        %v350 = vadd.f32 0.0, %v349
        %v351 = vpop.f32.mrf.mxu0
        %v352 = vadd.f32 0.0, %v351
        %353 = vdwg.mxu0
        %354 = vmatpush.bf16.msra.mxu0 0
        %355 = vmatpush.bf16.msra.mxu0 0
        %356 = vmatpush.bf16.msra.mxu0 0
        %357 = vmatpush.bf16.msra.mxu0 0
        %358 = vmatpush.bf16.msra.mxu0 0
        %359 = vmatpush.bf16.msra.mxu0 0
        %360 = vmatpush.bf16.msra.mxu0 0
        %361 = vmatpush.bf16.msra.mxu0 %v241
        %362 = vmatmul.bf16.gmra.mxu0 %v254
        %v363 = vpop.f32.mrf.mxu0
        %v364 = vadd.f32 0.0, %v363
        %v365 = vpop.f32.mrf.mxu0
        %v366 = vadd.f32 0.0, %v365
        %367 = vdwg.mxu0
        %368 = vmatpush.bf16.msra.mxu0 0
        %369 = vmatpush.bf16.msra.mxu0 0
        %370 = vmatpush.bf16.msra.mxu0 0
        %371 = vmatpush.bf16.msra.mxu0 0
        %372 = vmatpush.bf16.msra.mxu0 0
        %373 = vmatpush.bf16.msra.mxu0 0
        %374 = vmatpush.bf16.msra.mxu0 0
        %375 = vmatpush.bf16.msra.mxu0 %v242
        %376 = vmatmul.bf16.gmra.mxu0 %v254
        %v377 = vpop.f32.mrf.mxu0
        %v378 = vadd.f32 0.0, %v377
        %v379 = vpop.f32.mrf.mxu0
        %v380 = vadd.f32 0.0, %v379
        %381 = vdwg.mxu0
        %v382 = vtanh.pop %v266
        %v383 = vtanh.pop %v280
        %v384 = vtanh.pop %v294
        %v385 = vtanh.pop %v308
        %v386 = vtanh.pop %v322
        %v387 = vtanh.pop %v336
        %v388 = vtanh.pop %v350
        %v389 = vtanh.pop %v364
        %v390 = vtanh.pop %v378
        %v391 = vtanh.pop %v268
        %v392 = vtanh.pop %v282
        %v393 = vtanh.pop %v296
        %v394 = vtanh.pop %v310
        %v395 = vtanh.pop %v324
        %v396 = vtanh.pop %v338
        %v397 = vtanh.pop %v352
        %v398 = vtanh.pop %v366
        %v399 = vtanh.pop %v380
        %400 = vst [vmem:[%s185] sm:$0xff] %v382
        %401 = vst [vmem:[%s185 + $0x8] sm:$0xff] %v383
        %402 = vst [vmem:[%s185 + $0x10] sm:$0xff] %v384
        %403 = vst [vmem:[%s185 + $0x18] sm:$0xff] %v385
        %404 = vst [vmem:[%s185 + $0x20] sm:$0xff] %v386
        %405 = vst [vmem:[%s185 + $0x28] sm:$0xff] %v387
        %406 = vst [vmem:[%s185 + $0x30] sm:$0xff] %v388
        %407 = vst [vmem:[%s185 + $0x38] sm:$0xff] %v389
        %408 = vst [vmem:[%s185 + $0x40] sm:$0xff] %v390
        %409 = vst [vmem:[%s185 + $0x48] sm:$0xf] %v391
        %410 = vst [vmem:[%s185 + $0x50] sm:$0xf] %v392
        %411 = vst [vmem:[%s185 + $0x58] sm:$0xf] %v393
        %412 = vst [vmem:[%s185 + $0x60] sm:$0xf] %v394
        %413 = vst [vmem:[%s185 + $0x68] sm:$0xf] %v395
        %414 = vst [vmem:[%s185 + $0x70] sm:$0xf] %v396
        %415 = vst [vmem:[%s185 + $0x78] sm:$0xf] %v397
        %416 = vst [vmem:[%s185 + $0x80] sm:$0xf] %v398
        %417 = vst [vmem:[%s185 + $0x88] sm:$0xf] %v399
        %s418 = sand.u32 %s68, 1
        %s419 = sand.u32 %s68, 1
        %s420 = smul.addr %s419, 144
        %s421 = scalar_lea.vmem [#allocation3], %s420
        // Predicated region
        $region55: #{generator_forward.9} parent=49 // pred_check
          %p422 = pneg %p78
        $region56: #{generator_forward.9} parent=49 // pred_check_branch
          %424 = sbr.rel (%p422) target = $region58
        $region57: #{generator_forward.9} parent=49 // pred_region
          %s425 = smul.u32 9, %s13
          %s426 = smul.addr %s425, 8
          %s427 = scalar_lea.vmem %s2, %s426
          // Predicated region
          $region59: #{generator_forward.9} parent=57 // pred_check
            _
          $region60: #{generator_forward.9} parent=57 // pred_check_branch
            %429 = sbr.rel (0) target = $region62
          $region61: #{generator_forward.9} parent=57 // pred_region
            // Predicated region
            $region63: #{generator_forward.9} parent=61 // pred_check
              _
            $region64: #{generator_forward.9} parent=61 // pred_check_branch
              %431 = sbr.rel (0) target = $region66
            $region65: #{generator_forward.9} parent=61 // pred_region
              loop: start=0, step=1, limit=1
              $region67: #{generator_forward.9} parent=65 // loop_pre_header
                _
              $region68: #{generator_forward.9} parent=65 // loop_header
                %s433 = sphi 0, %s437
                %p434 = scmp.ge.s32.totalorder %s433, 1
                %s438 = sphi %s421, %s421
                %s439 = sphi %s427, %s427
              $region69: #{generator_forward.9} parent=65 // loop_header_branch
                %436 = sbr.rel (%p434) target = $region73
              $region70: #{generator_forward.9} parent=65 // loop_body
                %v440 = vld [vmem:[%s438] sm:$0xff]
                %441 = vst [vmem:[%s439] sm:$0xff] %v440
                %v442 = vld [vmem:[%s438 + $0x8] sm:$0xff]
                %443 = vst [vmem:[%s439 + $0x8] sm:$0xff] %v442
                %v444 = vld [vmem:[%s438 + $0x10] sm:$0xff]
                %445 = vst [vmem:[%s439 + $0x10] sm:$0xff] %v444
                %v446 = vld [vmem:[%s438 + $0x18] sm:$0xff]
                %447 = vst [vmem:[%s439 + $0x18] sm:$0xff] %v446
                %v448 = vld [vmem:[%s438 + $0x20] sm:$0xff]
                %449 = vst [vmem:[%s439 + $0x20] sm:$0xff] %v448
                %v450 = vld [vmem:[%s438 + $0x28] sm:$0xff]
                %451 = vst [vmem:[%s439 + $0x28] sm:$0xff] %v450
                %v452 = vld [vmem:[%s438 + $0x30] sm:$0xff]
                %453 = vst [vmem:[%s439 + $0x30] sm:$0xff] %v452
                %v454 = vld [vmem:[%s438 + $0x38] sm:$0xff]
                %455 = vst [vmem:[%s439 + $0x38] sm:$0xff] %v454
                %v456 = vld [vmem:[%s438 + $0x40] sm:$0xff]
                %457 = vst [vmem:[%s439 + $0x40] sm:$0xff] %v456
                %v458 = vld [vmem:[%s438 + $0x48] sm:$0xff]
                %459 = vst [vmem:[%s439 + $0x90] sm:$0xff] %v458
                %v460 = vld [vmem:[%s438 + $0x50] sm:$0xff]
                %461 = vst [vmem:[%s439 + $0x98] sm:$0xff] %v460
                %v462 = vld [vmem:[%s438 + $0x58] sm:$0xff]
                %463 = vst [vmem:[%s439 + $0xa0] sm:$0xff] %v462
                %v464 = vld [vmem:[%s438 + $0x60] sm:$0xff]
                %465 = vst [vmem:[%s439 + $0xa8] sm:$0xff] %v464
                %v466 = vld [vmem:[%s438 + $0x68] sm:$0xff]
                %467 = vst [vmem:[%s439 + $0xb0] sm:$0xff] %v466
                %v468 = vld [vmem:[%s438 + $0x70] sm:$0xff]
                %469 = vst [vmem:[%s439 + $0xb8] sm:$0xff] %v468
                %v470 = vld [vmem:[%s438 + $0x78] sm:$0xff]
                %471 = vst [vmem:[%s439 + $0xc0] sm:$0xff] %v470
                %v472 = vld [vmem:[%s438 + $0x80] sm:$0xff]
                %473 = vst [vmem:[%s439 + $0xc8] sm:$0xff] %v472
                %v474 = vld [vmem:[%s438 + $0x88] sm:$0xff]
                %475 = vst [vmem:[%s439 + $0xd0] sm:$0xff] %v474
              $region71: #{generator_forward.9} parent=65 // loop_footer
                %s437 = sadd.s32 1, %s433
              $region72: #{generator_forward.9} parent=65 // loop_footer_branch
                %432 = sbr.rel target = $region68
              $region73: #{generator_forward.9} parent=65 // loop_exit
                _
            $region66: #{generator_forward.9} parent=61 // pred_fallthru
              _
            // Predicated region
            $region74: #{generator_forward.9} parent=61 // pred_check
              _
            $region75: #{generator_forward.9} parent=61 // pred_check_branch
              %477 = sbr.rel target = $region77
            $region76: #{generator_forward.9} parent=61 // pred_region
              _
            $region77: #{generator_forward.9} parent=61 // pred_fallthru
              _
          $region62: #{generator_forward.9} parent=57 // pred_fallthru
            _
          %478 = vnop
        $region58: #{generator_forward.9} parent=49 // pred_fallthru
          _
      $region50: #{generator_forward.9} parent=5 // pred_fallthru
        _
      %p479 = scmp.le.s32.totalorder 2, %s8
      // Predicated region
      $region78: #{generator_forward.9} parent=5 // pred_check
        %p480 = pneg %p479
      $region79: #{generator_forward.9} parent=5 // pred_check_branch
        %482 = sbr.rel (%p480) target = $region81
      $region80: #{generator_forward.9} parent=5 // pred_region
        %s483 = ssub.s32 %s8, 2
        // Predicated region
        $region82: #{generator_forward.9} parent=80 // pred_check
          %p484 = pneg %p84
        $region83: #{generator_forward.9} parent=80 // pred_check_branch
          %486 = sbr.rel (%p484) target = $region85
        $region84: #{generator_forward.9} parent=80 // pred_region
          %s487 = sand.u32 %s69, 1
          %s488 = sand.u32 %s69, 1
          %s489 = smul.addr %s488, 144
          %s490 = scalar_lea.vmem [#allocation3], %s489
        $region85: #{generator_forward.9} parent=80 // pred_fallthru
          _
      $region81: #{generator_forward.9} parent=5 // pred_fallthru
        _
    $region6: #{generator_forward.9} parent=1 // loop_footer
      %s12 = sadd.s32 1, %s8
    $region7: #{generator_forward.9} parent=1 // loop_footer_branch
      %7 = sbr.rel target = $region3
    $region8: #{generator_forward.9} parent=1 // loop_exit
      _

</llo_original>
